<compile_context>
chip_gen: v5e
topology: v5e:2x2
jax: 0.10.0
libtpu: 0.0.40
codegen_flags: <defaults>
</compile_context>

<pallas_src>
import jax
import jax.numpy as jnp
from jax.experimental import pallas as pl
from jax.experimental.pallas import tpu as pltpu

NEG_SLOPE = 0.1
BN_EPS = 1e-5


def _leaky(y):
    return jnp.where(y > 0, y, NEG_SLOPE * y)


# ---------------------------------------------------------------------------
# Fused kernel: conv1x1+BN+LReLU -> (dx-stacked VMEM-resident h) ->
#               conv3x3+BN+LReLU + residual add.
# ---------------------------------------------------------------------------
def _fused_resblock_kernel(x_ref, halo_ref, w1_ref, b1_ref, w2_ref, b2_ref,
                           o_ref, hs_ref):
    # x_ref:    (1, TH, W, C)     center rows of this tile (also the residual)
    # halo_ref: (1, 2, W, C)      row above / row below (zeros at image edge)
    # w1_ref:   (C, Cm)           1x1 conv weight, BN scale folded in
    # b1_ref:   (1, 1, Cm)        folded BN shift
    # w2_ref:   (3, 3*Cm, C)      3x3 conv weight, dx taps stacked on K
    # b2_ref:   (1, 1, C)
    # o_ref:    (1, TH, W, C)
    # hs_ref:   (TH+2, W, 3*Cm)   VMEM scratch: dx-stacked padded intermediate
    i = pl.program_id(1)
    n_row_tiles = pl.num_programs(1)
    _, TH, W, C = x_ref.shape
    Cm = w1_ref.shape[1]
    hdt = hs_ref.dtype
    aligned = (Cm % 128 == 0)        # real Darknet deep stages: 128/256/512

    # ---- 1x1 conv + folded-BN shift + LeakyReLU ----------------------------
    xc = x_ref[0].reshape(TH * W, C)
    hc = jnp.dot(xc, w1_ref[...], preferred_element_type=jnp.float32)
    hc = _leaky(hc + b1_ref[0]).reshape(TH, W, Cm).astype(hdt)

    # Halo rows (row above / below this tile).  Outside the image the 3x3 conv
    # must see zeros (its own padding), so mask the h value by tile position.
    xh = halo_ref[0].reshape(2 * W, C)
    hh = jnp.dot(xh, w1_ref[...], preferred_element_type=jnp.float32)
    hh = _leaky(hh + b1_ref[0]).reshape(2, W, Cm)
    top_keep = jnp.where(i > 0, 1.0, 0.0)
    bot_keep = jnp.where(i < n_row_tiles - 1, 1.0, 0.0)
    hh0 = (hh[0:1] * top_keep).astype(hdt)
    hh1 = (hh[1:2] * bot_keep).astype(hdt)

    # ---- scatter h into the dx-stacked scratch (no concat temp, no zero
    #      full-scratch init; W shifts via cheap XLU rolls) -------------------
    col_first = col_last = None
    if not aligned:
        # tiny-channel path: keep every store full-lane-width; zero the two
        # boundary columns in-register before the single aligned store.
        wi = jax.lax.broadcasted_iota(jnp.int32, (1, W, 1), 1)
        col_first = (wi != 0).astype(hdt)
        col_last = (wi != W - 1).astype(hdt)

    def store_rows(val, r0, nrows):
        # val holds h rows; scratch lane blocks are [dx=0 | dx=1 | dx=2]:
        #   dx=0 plane: h[.., w-1, ..]   -> roll by +1 along W
        #   dx=1 plane: h[.., w  , ..]
        #   dx=2 plane: h[.., w+1, ..]   -> roll by W-1 (== -1) along W
        v_m1 = pltpu.roll(val, 1, axis=1)
        v_p1 = pltpu.roll(val, W - 1, axis=1)
        if aligned:
            hs_ref[r0:r0 + nrows, :, 0:Cm] = v_m1
            hs_ref[r0:r0 + nrows, :, Cm:2 * Cm] = val
            hs_ref[r0:r0 + nrows, :, 2 * Cm:3 * Cm] = v_p1
        else:
            hs_ref[r0:r0 + nrows, :, :] = jnp.concatenate(
                [v_m1 * col_first, val, v_p1 * col_last], axis=-1)

    store_rows(hc, 1, TH)          # interior rows
    store_rows(hh0, 0, 1)          # halo row above
    store_rows(hh1, TH + 1, 1)     # halo row below

    if aligned:
        # Only the wrapped boundary columns are ever invalid -> zero just them.
        zcol = jnp.zeros((TH + 2, 1, Cm), hdt)
        hs_ref[:, 0:1, 0:Cm] = zcol
        hs_ref[:, W - 1:W, 2 * Cm:3 * Cm] = zcol

    # ---- 3x3 conv: 3 fat-K (K = 3*Cm) MXU matmuls, loop-carried f32 acc ----
    acc = None
    for dy in range(3):
        patch = hs_ref[dy:dy + TH, :, :].reshape(TH * W, 3 * Cm)
        part = jnp.dot(patch, w2_ref[dy], preferred_element_type=jnp.float32)
        acc = part if acc is None else acc + part

    # fused epilogue: folded-BN shift + LeakyReLU + residual
    y = _leaky(acc.reshape(TH, W, C) + b2_ref[...]) + x_ref[0].astype(jnp.float32)
    o_ref[0] = y.astype(o_ref.dtype)


# ---------------------------------------------------------------------------
# Tile sizing / halo construction / wrapper
# ---------------------------------------------------------------------------
def _vmem_capacity_bytes():
    try:
        return int(pltpu.get_tpu_info().vmem_capacity_bytes)
    except Exception:
        return 64 * 1024 * 1024          # conservative default (v7x: 64 MiB)


def _tile_vmem_bytes(th, W, C, Cm, act_itemsize, weight_bufs):
    """Everything live per grid step (review fix: count scratch + temporaries)."""
    x_blk = th * W * C * act_itemsize
    out_blk = th * W * C * act_itemsize
    halo_blk = 2 * W * C * act_itemsize
    weights = (C * Cm + Cm + 3 * (3 * Cm) * C + C) * act_itemsize * weight_bufs
    hs_scratch = (th + 2) * W * (3 * Cm) * act_itemsize
    # f32 hc before cast, rolled copies in flight, loop-carried acc + epilogue y
    temps = (th * W * Cm * 4
             + 2 * th * W * Cm * act_itemsize
             + 2 * th * W * C * 4)
    # x/out/halo are double-buffered by the automatic pipeline
    return 2 * (x_blk + out_blk + halo_blk) + weights + hs_scratch + temps


def _pick_tile_rows(H, W, C, Cm, act_itemsize, weight_bufs, budget):
    """Largest divisor of H whose working set fits the VMEM budget."""
    divisors = sorted((d for d in range(1, H + 1) if H % d == 0), reverse=True)
    for th in divisors:
        if _tile_vmem_bytes(th, W, C, Cm, act_itemsize, weight_bufs) <= budget:
            return th
    # TODO(synk): support TH not dividing H via pl.cdiv grid + row masking.
    return divisors[-1]


def _build_row_halos(x, tile_rows):
    """Rows above/below each row tile: (N, 2*n_tiles, W, C); zeros at borders."""
    N, H, W, C = x.shape
    n_tiles = H // tile_rows
    zero = jnp.zeros((N, 1, W, C), x.dtype)
    above = jnp.concatenate(
        [zero, x[:, tile_rows - 1:H - 1:tile_rows, :, :]], axis=1)
    below = jnp.concatenate(
        [x[:, tile_rows:H:tile_rows, :, :], zero], axis=1)
    return jnp.stack([above, below], axis=2).reshape(N, 2 * n_tiles, W, C)


def fused_resblock_step(x, w1, b1, w2, b2, *, tile_rows=None):
    """One residual unit: LeakyReLU(BN(conv3x3(LeakyReLU(BN(conv1x1(x)))))) + x."""
    N, H, W, C = x.shape
    Cm = w1.shape[1]
    act_itemsize = jnp.dtype(x.dtype).itemsize
    if tile_rows is not None and H % tile_rows != 0:
        raise ValueError(f"tile_rows={tile_rows} must divide H={H}")

    vmem_limit = int(_vmem_capacity_bytes() * 0.75)

    def build(single_buffer_weights):
        weight_bufs = 1 if single_buffer_weights else 2
        th = tile_rows
        if th is None:
            th = _pick_tile_rows(H, W, C, Cm, act_itemsize, weight_bufs,
                                 int(vmem_limit * 0.8))
        n_tiles = H // th
        halos = _build_row_halos(x, th)

        # Weights have a constant index map -> single-buffer them (halves their
        # VMEM residency; important on v7x at real Darknet widths).
        wkw = dict(pipeline_mode=pl.Buffered(1)) if single_buffer_weights else {}

        return pl.pallas_call(
            _fused_resblock_kernel,
            out_shape=jax.ShapeDtypeStruct((N, H, W, C), x.dtype),
            grid=(N, n_tiles),
            in_specs=[
                pl.BlockSpec((1, th, W, C), lambda n, i: (n, i, 0, 0)),
                pl.BlockSpec((1, 2, W, C), lambda n, i: (n, i, 0, 0)),
                pl.BlockSpec((C, Cm), lambda n, i: (0, 0), **wkw),
                pl.BlockSpec((1, 1, Cm), lambda n, i: (0, 0, 0), **wkw),
                pl.BlockSpec((3, 3 * Cm, C), lambda n, i: (0, 0, 0), **wkw),
                pl.BlockSpec((1, 1, C), lambda n, i: (0, 0, 0), **wkw),
            ],
            out_specs=pl.BlockSpec((1, th, W, C), lambda n, i: (n, i, 0, 0)),
            scratch_shapes=[
                pltpu.VMEM((th + 2, W, 3 * Cm), x.dtype),   # dx-stacked h
            ],
            compiler_params=pltpu.CompilerParams(
                dimension_semantics=("parallel", "parallel"),
                vmem_limit_bytes=vmem_limit),
        )(x, halos, w1, b1, w2, b2)

    try:
        return build(True)
    except Exception:
        # pipeline_mode / Buffered(1) unsupported on this JAX -> default buffering.
        return build(False)


# ---------------------------------------------------------------------------
# Parameters (deterministic, synthetic), folding, module wrapper, reference
# ---------------------------------------------------------------------------
def _init_conv_bn(key, cin, cout, k):
    """Raw conv weight (HWIO for k=3), BN scale & shift (eval mode, conv bias folded)."""
    keys = jax.random.split(key, 6)
    fan_in = cin * k * k
    bound = 1.0 / float(fan_in) ** 0.5
    if k == 1:
        w = jax.random.uniform(keys[0], (cin, cout), jnp.float32, -bound, bound)
    else:
        w = jax.random.uniform(keys[0], (k, k, cin, cout), jnp.float32,
                               -bound, bound)
    b = jax.random.uniform(keys[1], (cout,), jnp.float32, -bound, bound)
    gamma = jax.random.uniform(keys[2], (cout,), jnp.float32, 0.5, 1.5)
    beta = 0.1 * jax.random.normal(keys[3], (cout,), jnp.float32)
    mean = 0.1 * jax.random.normal(keys[4], (cout,), jnp.float32)
    var = jax.random.uniform(keys[5], (cout,), jnp.float32, 0.5, 1.5)
    scale = gamma / jnp.sqrt(var + BN_EPS)
    shift = scale * (b - mean) + beta
    return w, scale, shift


def init_resblock_params(key, ch, nblocks=1):
    params = []
    for _ in range(nblocks):
        k1, k2, key = jax.random.split(key, 3)
        w1, s1, b1 = _init_conv_bn(k1, ch, ch // 2, k=1)
        w2, s2, b2 = _init_conv_bn(k2, ch // 2, ch, k=3)
        params.append((w1, s1, b1, w2, s2, b2))
    return params


def _fold_conv1(w1, scale, shift):
    return w1 * scale[None, :], shift.reshape(1, 1, -1)


def _fold_conv3(w2, scale, shift):
    kh, kw, cm, c = w2.shape
    w_eff = (w2 * scale[None, None, None, :]).reshape(kh, kw * cm, c)
    return w_eff, shift.reshape(1, 1, -1)


def res_block(x, params, *, tile_rows=None, compute_dtype=None):
    """x: NHWC. Applies each fused (conv1x1-BN-LReLU, conv3x3-BN-LReLU) + residual.

    compute_dtype=jnp.bfloat16 gives the fast production path (bf16 acts/weights,
    f32 MXU accumulation and epilogue, bf16 h scratch); biases stay f32.
    """
    if compute_dtype is not None:
        x = x.astype(compute_dtype)
    for (w1, s1, b1, w2, s2, b2) in params:
        w1e, b1e = _fold_conv1(w1, s1, b1)
        w2e, b2e = _fold_conv3(w2, s2, b2)
        if compute_dtype is not None:
            w1e = w1e.astype(compute_dtype)
            w2e = w2e.astype(compute_dtype)
        x = fused_resblock_step(x, w1e, b1e, w2e, b2e, tile_rows=tile_rows)
    return x


def res_block_ref(x, params):
    """Pure-JAX reference of the same math (eval-mode BN), from raw params."""
    for (w1, s1, b1, w2, s2, b2) in params:
        h = jnp.einsum("nhwc,cd->nhwd", x, w1) * s1 + b1
        h = jnp.where(h > 0, h, NEG_SLOPE * h)
        hp = jnp.pad(h, ((0, 0), (1, 1), (1, 1), (0, 0)))
        N, H, W, C = x.shape
        acc = jnp.zeros((N, H, W, C), jnp.float32)
        for dy in range(3):
            for dx in range(3):
                acc = acc + jnp.einsum("nhwc,cd->nhwd",
                                       hp[:, dy:dy + H, dx:dx + W, :],
                                       w2[dy, dx])
        y = acc * s2 + b2
        y = jnp.where(y > 0, y, NEG_SLOPE * y)
        x = y + x
    return x


if __name__ == "__main__":
    key = jax.random.PRNGKey(0)
    kx, kp, kx2, kp2 = jax.random.split(key, 4)

    # --- small-shape test (PyTorch-style NCHW input) -------------------------
    N, C, H, W = 2, 4, 16, 16
    x_nchw = jax.random.normal(kx, (N, C, H, W), jnp.float32)
    x_nhwc = jnp.transpose(x_nchw, (0, 2, 3, 1))  # NCHW -> NHWC

    params = init_resblock_params(kp, ch=C, nblocks=1)
    ref = res_block_ref(x_nhwc, params)

    # Auto-picked row tile (whole image at this toy size).
    out_auto = jax.block_until_ready(res_block(x_nhwc, params))
    # Forced 2 row tiles so the halo / tile-boundary path is also exercised.
    out_tiled = jax.block_until_ready(res_block(x_nhwc, params, tile_rows=8))

    for name, out in (("auto", out_auto), ("tiled", out_tiled)):
        if not jnp.allclose(out, ref, atol=1e-4, rtol=1e-4):
            raise AssertionError(f"Pallas ResBlock ({name}) does not match reference")

    # --- lane-aligned (production) path: Cm = 128, row-tiled with halos ------
    Na, Ca, Ha, Wa = 1, 256, 8, 8
    xa = jax.random.normal(kx2, (Na, Ha, Wa, Ca), jnp.float32)
    params_a = init_resblock_params(kp2, ch=Ca, nblocks=1)
    ref_a = res_block_ref(xa, params_a)
    out_a = jax.block_until_ready(res_block(xa, params_a, tile_rows=4))
    if not jnp.allclose(out_a, ref_a, atol=1e-4, rtol=1e-4):
        raise AssertionError("Pallas ResBlock (aligned) does not match reference")

    # --- bf16 production-dtype smoke test ------------------------------------
    out_bf16 = jax.block_until_ready(
        res_block(x_nhwc, params, compute_dtype=jnp.bfloat16))
    out_bf16_f32 = out_bf16.astype(jnp.float32)
    if not bool(jnp.all(jnp.isfinite(out_bf16_f32))):
        raise AssertionError("bf16 path produced non-finite values")
    if float(jnp.max(jnp.abs(out_bf16_f32 - ref))) > 0.35:
        raise AssertionError("bf16 path deviates too much from f32 reference")

    print("KERNEL_OK")
</pallas_src>

<mosaic_0001>
module attributes {stable_mosaic.version = 11 : i64} {
  func.func @_fused_resblock_kernel(%arg0: i32, %arg1: i32, %arg2: memref<1x16x16x4xf32, #tpu.memory_space<vmem>>, %arg3: memref<1x2x16x4xf32, #tpu.memory_space<vmem>>, %arg4: memref<4x2xf32, #tpu.memory_space<vmem>>, %arg5: memref<1x1x2xf32, #tpu.memory_space<vmem>>, %arg6: memref<3x6x4xf32, #tpu.memory_space<vmem>>, %arg7: memref<1x1x4xf32, #tpu.memory_space<vmem>>, %arg8: memref<1x16x16x4xf32, #tpu.memory_space<vmem>>, %arg9: memref<18x16x6xf32, #tpu.memory_space<vmem>>) attributes {dimension_semantics = [#tpu.dimension_semantics<parallel>, #tpu.dimension_semantics<parallel>], iteration_bounds = array<i64: 2, 1>, scalar_prefetch = 0 : i64, scratch_operands = 1 : i64, tpu.core_type = #tpu.core_type<tc>, window_params = [{transform_indices = @transform_0, window_bounds = array<i64: 1, 16, 16, 4>}, {transform_indices = @transform_1, window_bounds = array<i64: 1, 2, 16, 4>}, {pipeline_mode = #tpu.pipeline_mode<synchronous>, transform_indices = @transform_2, window_bounds = array<i64: 4, 2>}, {pipeline_mode = #tpu.pipeline_mode<synchronous>, transform_indices = @transform_3, window_bounds = array<i64: 1, 1, 2>}, {pipeline_mode = #tpu.pipeline_mode<synchronous>, transform_indices = @transform_4, window_bounds = array<i64: 3, 6, 4>}, {pipeline_mode = #tpu.pipeline_mode<synchronous>, transform_indices = @transform_5, window_bounds = array<i64: 1, 1, 4>}, {transform_indices = @transform_6, window_bounds = array<i64: 1, 16, 16, 4>}]} {
    %c0 = arith.constant 0 : index
    %c0_0 = arith.constant 0 : index
    %c0_1 = arith.constant 0 : index
    %c0_2 = arith.constant 0 : index
    %0 = vector.load %arg2[%c0, %c0_0, %c0_1, %c0_2] : memref<1x16x16x4xf32, #tpu.memory_space<vmem>>, vector<1x16x16x4xf32>
    %1 = vector.shape_cast %0 : vector<1x16x16x4xf32> to vector<16x16x4xf32>
    %2 = vector.shape_cast %1 : vector<16x16x4xf32> to vector<256x4xf32>
    %c0_3 = arith.constant 0 : index
    %c0_4 = arith.constant 0 : index
    %3 = vector.load %arg4[%c0_3, %c0_4] : memref<4x2xf32, #tpu.memory_space<vmem>>, vector<4x2xf32>
    %cst = arith.constant dense<0.000000e+00> : vector<256x2xf32>
    %4 = tpu.matmul %2, %3, %cst {dimension_numbers = #tpu.dot_dimension_numbers<[1], [0], [0], [1], [0, 0, 1, 1], [], []>} : vector<256x4xf32>, vector<4x2xf32>, vector<256x2xf32> -> vector<256x2xf32>
    %c0_5 = arith.constant 0 : index
    %c0_6 = arith.constant 0 : index
    %c0_7 = arith.constant 0 : index
    %5 = vector.load %arg5[%c0_5, %c0_6, %c0_7] : memref<1x1x2xf32, #tpu.memory_space<vmem>>, vector<1x1x2xf32>
    %6 = vector.shape_cast %5 : vector<1x1x2xf32> to vector<1x2xf32>
    %7 = vector.broadcast %6 : vector<1x2xf32> to vector<256x2xf32>
    %8 = arith.addf %4, %7 : vector<256x2xf32>
    %cst_8 = arith.constant 0.000000e+00 : f32
    %9 = vector.broadcast %cst_8 : f32 to vector<256x2xf32>
    %10 = arith.cmpf ogt, %8, %9 : vector<256x2xf32>
    %cst_9 = arith.constant 1.000000e-01 : f32
    %11 = vector.broadcast %cst_9 : f32 to vector<256x2xf32>
    %12 = arith.mulf %11, %8 : vector<256x2xf32>
    %13 = arith.select %10, %8, %12 : vector<256x2xi1>, vector<256x2xf32>
    %14 = vector.shape_cast %13 : vector<256x2xf32> to vector<16x16x2xf32>
    %c0_10 = arith.constant 0 : index
    %c0_11 = arith.constant 0 : index
    %c0_12 = arith.constant 0 : index
    %c0_13 = arith.constant 0 : index
    %15 = vector.load %arg3[%c0_10, %c0_11, %c0_12, %c0_13] : memref<1x2x16x4xf32, #tpu.memory_space<vmem>>, vector<1x2x16x4xf32>
    %16 = vector.shape_cast %15 : vector<1x2x16x4xf32> to vector<2x16x4xf32>
    %17 = vector.shape_cast %16 : vector<2x16x4xf32> to vector<32x4xf32>
    %c0_14 = arith.constant 0 : index
    %c0_15 = arith.constant 0 : index
    %18 = vector.load %arg4[%c0_14, %c0_15] : memref<4x2xf32, #tpu.memory_space<vmem>>, vector<4x2xf32>
    %cst_16 = arith.constant dense<0.000000e+00> : vector<32x2xf32>
    %19 = tpu.matmul %17, %18, %cst_16 {dimension_numbers = #tpu.dot_dimension_numbers<[1], [0], [0], [1], [0, 0, 1, 1], [], []>} : vector<32x4xf32>, vector<4x2xf32>, vector<32x2xf32> -> vector<32x2xf32>
    %c0_17 = arith.constant 0 : index
    %c0_18 = arith.constant 0 : index
    %c0_19 = arith.constant 0 : index
    %20 = vector.load %arg5[%c0_17, %c0_18, %c0_19] : memref<1x1x2xf32, #tpu.memory_space<vmem>>, vector<1x1x2xf32>
    %21 = vector.shape_cast %20 : vector<1x1x2xf32> to vector<1x2xf32>
    %22 = vector.broadcast %21 : vector<1x2xf32> to vector<32x2xf32>
    %23 = arith.addf %19, %22 : vector<32x2xf32>
    %cst_20 = arith.constant 0.000000e+00 : f32
    %24 = vector.broadcast %cst_20 : f32 to vector<32x2xf32>
    %25 = arith.cmpf ogt, %23, %24 : vector<32x2xf32>
    %cst_21 = arith.constant 1.000000e-01 : f32
    %26 = vector.broadcast %cst_21 : f32 to vector<32x2xf32>
    %27 = arith.mulf %26, %23 : vector<32x2xf32>
    %28 = arith.select %25, %23, %27 : vector<32x2xi1>, vector<32x2xf32>
    %29 = vector.shape_cast %28 : vector<32x2xf32> to vector<2x16x2xf32>
    %c0_i32 = arith.constant 0 : i32
    %30 = arith.cmpi sgt, %arg1, %c0_i32 : i32
    %cst_22 = arith.constant 1.000000e+00 : f32
    %cst_23 = arith.constant 0.000000e+00 : f32
    %31 = arith.select %30, %cst_22, %cst_23 : f32
    %c0_i32_24 = arith.constant 0 : i32
    %32 = arith.cmpi slt, %arg1, %c0_i32_24 : i32
    %cst_25 = arith.constant 1.000000e+00 : f32
    %cst_26 = arith.constant 0.000000e+00 : f32
    %33 = arith.select %32, %cst_25, %cst_26 : f32
    %34 = vector.extract_strided_slice %29 {offsets = [0, 0, 0], sizes = [1, 16, 2], strides = [1, 1, 1]} : vector<2x16x2xf32> to vector<1x16x2xf32>
    %35 = vector.broadcast %31 : f32 to vector<1x16x2xf32>
    %36 = arith.mulf %34, %35 : vector<1x16x2xf32>
    %37 = vector.extract_strided_slice %29 {offsets = [1, 0, 0], sizes = [1, 16, 2], strides = [1, 1, 1]} : vector<2x16x2xf32> to vector<1x16x2xf32>
    %38 = vector.broadcast %33 : f32 to vector<1x16x2xf32>
    %39 = arith.mulf %37, %38 : vector<1x16x2xf32>
    %40 = tpu.iota {dimensions = array<i32: 1>} : vector<1x16x1xi32>
    %c0_i32_27 = arith.constant 0 : i32
    %41 = vector.broadcast %c0_i32_27 : i32 to vector<1x16x1xi32>
    %42 = arith.cmpi ne, %40, %41 : vector<1x16x1xi32>
    %43 = arith.extui %42 : vector<1x16x1xi1> to vector<1x16x1xi32>
    %44 = arith.sitofp %43 : vector<1x16x1xi32> to vector<1x16x1xf32>
    %c15_i32 = arith.constant 15 : i32
    %45 = vector.broadcast %c15_i32 : i32 to vector<1x16x1xi32>
    %46 = arith.cmpi ne, %40, %45 : vector<1x16x1xi32>
    %47 = arith.extui %46 : vector<1x16x1xi1> to vector<1x16x1xi32>
    %48 = arith.sitofp %47 : vector<1x16x1xi32> to vector<1x16x1xf32>
    %c1_i32 = arith.constant 1 : i32
    %49 = tpu.dynamic_rotate %14 by %c1_i32 dim 1 : vector<16x16x2xf32>, i32 -> vector<16x16x2xf32>
    %c15_i32_28 = arith.constant 15 : i32
    %50 = tpu.dynamic_rotate %14 by %c15_i32_28 dim 1 : vector<16x16x2xf32>, i32 -> vector<16x16x2xf32>
    %51 = vector.broadcast %44 : vector<1x16x1xf32> to vector<16x16x2xf32>
    %52 = arith.mulf %49, %51 : vector<16x16x2xf32>
    %53 = vector.broadcast %48 : vector<1x16x1xf32> to vector<16x16x2xf32>
    %54 = arith.mulf %50, %53 : vector<16x16x2xf32>
    %55 = tpu.concatenate %52, %14, %54 in 2 : vector<16x16x2xf32>, vector<16x16x2xf32>, vector<16x16x2xf32> -> vector<16x16x6xf32>
    %c1 = arith.constant 1 : index
    %c0_29 = arith.constant 0 : index
    %c0_30 = arith.constant 0 : index
    %56 = vector.load %arg9[%c1, %c0_29, %c0_30] : memref<18x16x6xf32, #tpu.memory_space<vmem>>, vector<16x16x6xf32>
    tpu.vector_store %arg9[%c1, %c0_29, %c0_30], %55 {strides = array<i32>} : memref<18x16x6xf32, #tpu.memory_space<vmem>>, vector<16x16x6xf32>,
    %c1_i32_31 = arith.constant 1 : i32
    %57 = tpu.dynamic_rotate %36 by %c1_i32_31 dim 1 : vector<1x16x2xf32>, i32 -> vector<1x16x2xf32>
    %c15_i32_32 = arith.constant 15 : i32
    %58 = tpu.dynamic_rotate %36 by %c15_i32_32 dim 1 : vector<1x16x2xf32>, i32 -> vector<1x16x2xf32>
    %59 = vector.broadcast %44 : vector<1x16x1xf32> to vector<1x16x2xf32>
    %60 = arith.mulf %57, %59 : vector<1x16x2xf32>
    %61 = vector.broadcast %48 : vector<1x16x1xf32> to vector<1x16x2xf32>
    %62 = arith.mulf %58, %61 : vector<1x16x2xf32>
    %63 = tpu.concatenate %60, %36, %62 in 2 : vector<1x16x2xf32>, vector<1x16x2xf32>, vector<1x16x2xf32> -> vector<1x16x6xf32>
    %c0_33 = arith.constant 0 : index
    %c0_34 = arith.constant 0 : index
    %c0_35 = arith.constant 0 : index
    %64 = vector.load %arg9[%c0_33, %c0_34, %c0_35] : memref<18x16x6xf32, #tpu.memory_space<vmem>>, vector<1x16x6xf32>
    tpu.vector_store %arg9[%c0_33, %c0_34, %c0_35], %63 {strides = array<i32>} : memref<18x16x6xf32, #tpu.memory_space<vmem>>, vector<1x16x6xf32>,
    %c1_i32_36 = arith.constant 1 : i32
    %65 = tpu.dynamic_rotate %39 by %c1_i32_36 dim 1 : vector<1x16x2xf32>, i32 -> vector<1x16x2xf32>
    %c15_i32_37 = arith.constant 15 : i32
    %66 = tpu.dynamic_rotate %39 by %c15_i32_37 dim 1 : vector<1x16x2xf32>, i32 -> vector<1x16x2xf32>
    %67 = vector.broadcast %44 : vector<1x16x1xf32> to vector<1x16x2xf32>
    %68 = arith.mulf %65, %67 : vector<1x16x2xf32>
    %69 = vector.broadcast %48 : vector<1x16x1xf32> to vector<1x16x2xf32>
    %70 = arith.mulf %66, %69 : vector<1x16x2xf32>
    %71 = tpu.concatenate %68, %39, %70 in 2 : vector<1x16x2xf32>, vector<1x16x2xf32>, vector<1x16x2xf32> -> vector<1x16x6xf32>
    %c17 = arith.constant 17 : index
    %c0_38 = arith.constant 0 : index
    %c0_39 = arith.constant 0 : index
    %72 = vector.load %arg9[%c17, %c0_38, %c0_39] : memref<18x16x6xf32, #tpu.memory_space<vmem>>, vector<1x16x6xf32>
    tpu.vector_store %arg9[%c17, %c0_38, %c0_39], %71 {strides = array<i32>} : memref<18x16x6xf32, #tpu.memory_space<vmem>>, vector<1x16x6xf32>,
    %c0_40 = arith.constant 0 : index
    %c0_41 = arith.constant 0 : index
    %c0_42 = arith.constant 0 : index
    %73 = vector.load %arg9[%c0_40, %c0_41, %c0_42] : memref<18x16x6xf32, #tpu.memory_space<vmem>>, vector<16x16x6xf32>
    %74 = vector.shape_cast %73 : vector<16x16x6xf32> to vector<256x6xf32>
    %c0_43 = arith.constant 0 : index
    %c0_44 = arith.constant 0 : index
    %c0_45 = arith.constant 0 : index
    %75 = vector.load %arg6[%c0_43, %c0_44, %c0_45] : memref<3x6x4xf32, #tpu.memory_space<vmem>>, vector<1x6x4xf32>
    %76 = vector.shape_cast %75 : vector<1x6x4xf32> to vector<6x4xf32>
    %cst_46 = arith.constant dense<0.000000e+00> : vector<256x4xf32>
    %77 = tpu.matmul %74, %76, %cst_46 {dimension_numbers = #tpu.dot_dimension_numbers<[1], [0], [0], [1], [0, 0, 1, 1], [], []>} : vector<256x6xf32>, vector<6x4xf32>, vector<256x4xf32> -> vector<256x4xf32>
    %c1_47 = arith.constant 1 : index
    %c0_48 = arith.constant 0 : index
    %c0_49 = arith.constant 0 : index
    %78 = vector.load %arg9[%c1_47, %c0_48, %c0_49] : memref<18x16x6xf32, #tpu.memory_space<vmem>>, vector<16x16x6xf32>
    %79 = vector.shape_cast %78 : vector<16x16x6xf32> to vector<256x6xf32>
    %c1_50 = arith.constant 1 : index
    %c0_51 = arith.constant 0 : index
    %c0_52 = arith.constant 0 : index
    %80 = vector.load %arg6[%c1_50, %c0_51, %c0_52] : memref<3x6x4xf32, #tpu.memory_space<vmem>>, vector<1x6x4xf32>
    %81 = vector.shape_cast %80 : vector<1x6x4xf32> to vector<6x4xf32>
    %cst_53 = arith.constant dense<0.000000e+00> : vector<256x4xf32>
    %82 = tpu.matmul %79, %81, %cst_53 {dimension_numbers = #tpu.dot_dimension_numbers<[1], [0], [0], [1], [0, 0, 1, 1], [], []>} : vector<256x6xf32>, vector<6x4xf32>, vector<256x4xf32> -> vector<256x4xf32>
    %83 = arith.addf %77, %82 : vector<256x4xf32>
    %c2 = arith.constant 2 : index
    %c0_54 = arith.constant 0 : index
    %c0_55 = arith.constant 0 : index
    %84 = vector.load %arg9[%c2, %c0_54, %c0_55] : memref<18x16x6xf32, #tpu.memory_space<vmem>>, vector<16x16x6xf32>
    %85 = vector.shape_cast %84 : vector<16x16x6xf32> to vector<256x6xf32>
    %c2_56 = arith.constant 2 : index
    %c0_57 = arith.constant 0 : index
    %c0_58 = arith.constant 0 : index
    %86 = vector.load %arg6[%c2_56, %c0_57, %c0_58] : memref<3x6x4xf32, #tpu.memory_space<vmem>>, vector<1x6x4xf32>
    %87 = vector.shape_cast %86 : vector<1x6x4xf32> to vector<6x4xf32>
    %cst_59 = arith.constant dense<0.000000e+00> : vector<256x4xf32>
    %88 = tpu.matmul %85, %87, %cst_59 {dimension_numbers = #tpu.dot_dimension_numbers<[1], [0], [0], [1], [0, 0, 1, 1], [], []>} : vector<256x6xf32>, vector<6x4xf32>, vector<256x4xf32> -> vector<256x4xf32>
    %89 = arith.addf %83, %88 : vector<256x4xf32>
    %90 = vector.shape_cast %89 : vector<256x4xf32> to vector<16x16x4xf32>
    %c0_60 = arith.constant 0 : index
    %c0_61 = arith.constant 0 : index
    %c0_62 = arith.constant 0 : index
    %91 = vector.load %arg7[%c0_60, %c0_61, %c0_62] : memref<1x1x4xf32, #tpu.memory_space<vmem>>, vector<1x1x4xf32>
    %92 = vector.broadcast %91 : vector<1x1x4xf32> to vector<16x16x4xf32>
    %93 = arith.addf %90, %92 : vector<16x16x4xf32>
    %cst_63 = arith.constant 0.000000e+00 : f32
    %94 = vector.broadcast %cst_63 : f32 to vector<16x16x4xf32>
    %95 = arith.cmpf ogt, %93, %94 : vector<16x16x4xf32>
    %cst_64 = arith.constant 1.000000e-01 : f32
    %96 = vector.broadcast %cst_64 : f32 to vector<16x16x4xf32>
    %97 = arith.mulf %96, %93 : vector<16x16x4xf32>
    %98 = arith.select %95, %93, %97 : vector<16x16x4xi1>, vector<16x16x4xf32>
    %c0_65 = arith.constant 0 : index
    %c0_66 = arith.constant 0 : index
    %c0_67 = arith.constant 0 : index
    %c0_68 = arith.constant 0 : index
    %99 = vector.load %arg2[%c0_65, %c0_66, %c0_67, %c0_68] : memref<1x16x16x4xf32, #tpu.memory_space<vmem>>, vector<1x16x16x4xf32>
    %100 = vector.shape_cast %99 : vector<1x16x16x4xf32> to vector<16x16x4xf32>
    %101 = arith.addf %98, %100 : vector<16x16x4xf32>
    %c0_69 = arith.constant 0 : index
    %c0_70 = arith.constant 0 : index
    %c0_71 = arith.constant 0 : index
    %c0_72 = arith.constant 0 : index
    %102 = vector.load %arg8[%c0_69, %c0_70, %c0_71, %c0_72] : memref<1x16x16x4xf32, #tpu.memory_space<vmem>>, vector<1x16x16x4xf32>
    %103 = vector.shape_cast %102 : vector<1x16x16x4xf32> to vector<16x16x4xf32>
    %104 = vector.shape_cast %101 : vector<16x16x4xf32> to vector<1x16x16x4xf32>
    tpu.vector_store %arg8[%c0_69, %c0_70, %c0_71, %c0_72], %104 {strides = array<i32>} : memref<1x16x16x4xf32, #tpu.memory_space<vmem>>, vector<1x16x16x4xf32>,
    return
  }
  func.func @transform_0(%arg0: i32, %arg1: i32) -> (i32, i32, i32, i32) {
    %c0_i32 = arith.constant 0 : i32
    %c0_i32_0 = arith.constant 0 : i32
    %c0_i32_1 = arith.constant 0 : i32
    return %arg0, %arg1, %c0_i32, %c0_i32_0 : i32, i32, i32, i32
  }
  func.func @transform_1(%arg0: i32, %arg1: i32) -> (i32, i32, i32, i32) {
    %c0_i32 = arith.constant 0 : i32
    %c0_i32_0 = arith.constant 0 : i32
    %c0_i32_1 = arith.constant 0 : i32
    return %arg0, %arg1, %c0_i32, %c0_i32_0 : i32, i32, i32, i32
  }
  func.func @transform_2(%arg0: i32, %arg1: i32) -> (i32, i32) {
    %c0_i32 = arith.constant 0 : i32
    %c0_i32_0 = arith.constant 0 : i32
    %c0_i32_1 = arith.constant 0 : i32
    return %c0_i32, %c0_i32_0 : i32, i32
  }
  func.func @transform_3(%arg0: i32, %arg1: i32) -> (i32, i32, i32) {
    %c0_i32 = arith.constant 0 : i32
    %c0_i32_0 = arith.constant 0 : i32
    %c0_i32_1 = arith.constant 0 : i32
    %c0_i32_2 = arith.constant 0 : i32
    return %c0_i32, %c0_i32_0, %c0_i32_1 : i32, i32, i32
  }
  func.func @transform_4(%arg0: i32, %arg1: i32) -> (i32, i32, i32) {
    %c0_i32 = arith.constant 0 : i32
    %c0_i32_0 = arith.constant 0 : i32
    %c0_i32_1 = arith.constant 0 : i32
    %c0_i32_2 = arith.constant 0 : i32
    return %c0_i32, %c0_i32_0, %c0_i32_1 : i32, i32, i32
  }
  func.func @transform_5(%arg0: i32, %arg1: i32) -> (i32, i32, i32) {
    %c0_i32 = arith.constant 0 : i32
    %c0_i32_0 = arith.constant 0 : i32
    %c0_i32_1 = arith.constant 0 : i32
    %c0_i32_2 = arith.constant 0 : i32
    return %c0_i32, %c0_i32_0, %c0_i32_1 : i32, i32, i32
  }
  func.func @transform_6(%arg0: i32, %arg1: i32) -> (i32, i32, i32, i32) {
    %c0_i32 = arith.constant 0 : i32
    %c0_i32_0 = arith.constant 0 : i32
    %c0_i32_1 = arith.constant 0 : i32
    return %arg0, %arg1, %c0_i32, %c0_i32_0 : i32, i32, i32, i32
  }
}

module attributes {stable_mosaic.version = 11 : i64} {
  func.func @_fused_resblock_kernel(%arg0: i32, %arg1: i32, %arg2: memref<1x16x16x4xf32, #tpu.memory_space<vmem>>, %arg3: memref<1x2x16x4xf32, #tpu.memory_space<vmem>>, %arg4: memref<4x2xf32, #tpu.memory_space<vmem>>, %arg5: memref<1x1x2xf32, #tpu.memory_space<vmem>>, %arg6: memref<3x6x4xf32, #tpu.memory_space<vmem>>, %arg7: memref<1x1x4xf32, #tpu.memory_space<vmem>>, %arg8: memref<1x16x16x4xf32, #tpu.memory_space<vmem>>, %arg9: memref<18x16x6xf32, #tpu.memory_space<vmem>>) attributes {dimension_semantics = [#tpu.dimension_semantics<parallel>, #tpu.dimension_semantics<parallel>], iteration_bounds = array<i64: 2, 1>, scalar_prefetch = 0 : i64, scratch_operands = 1 : i64, tpu.core_type = #tpu.core_type<tc>, window_params = [{transform_indices = @transform_0, window_bounds = array<i64: 1, 16, 16, 4>}, {transform_indices = @transform_1, window_bounds = array<i64: 1, 2, 16, 4>}, {pipeline_mode = #tpu.pipeline_mode<synchronous>, transform_indices = @transform_2, window_bounds = array<i64: 4, 2>}, {pipeline_mode = #tpu.pipeline_mode<synchronous>, transform_indices = @transform_3, window_bounds = array<i64: 1, 1, 2>}, {pipeline_mode = #tpu.pipeline_mode<synchronous>, transform_indices = @transform_4, window_bounds = array<i64: 3, 6, 4>}, {pipeline_mode = #tpu.pipeline_mode<synchronous>, transform_indices = @transform_5, window_bounds = array<i64: 1, 1, 4>}, {transform_indices = @transform_6, window_bounds = array<i64: 1, 16, 16, 4>}]} {
    %c0 = arith.constant 0 : index
    %c0_0 = arith.constant 0 : index
    %c0_1 = arith.constant 0 : index
    %c0_2 = arith.constant 0 : index
    %0 = vector.load %arg2[%c0, %c0_0, %c0_1, %c0_2] : memref<1x16x16x4xf32, #tpu.memory_space<vmem>>, vector<1x16x16x4xf32>
    %1 = vector.shape_cast %0 : vector<1x16x16x4xf32> to vector<16x16x4xf32>
    %2 = vector.shape_cast %1 : vector<16x16x4xf32> to vector<256x4xf32>
    %c0_3 = arith.constant 0 : index
    %c0_4 = arith.constant 0 : index
    %3 = vector.load %arg4[%c0_3, %c0_4] : memref<4x2xf32, #tpu.memory_space<vmem>>, vector<4x2xf32>
    %cst = arith.constant dense<0.000000e+00> : vector<256x2xf32>
    %4 = tpu.matmul %2, %3, %cst {dimension_numbers = #tpu.dot_dimension_numbers<[1], [0], [0], [1], [0, 0, 1, 1], [], []>} : vector<256x4xf32>, vector<4x2xf32>, vector<256x2xf32> -> vector<256x2xf32>
    %c0_5 = arith.constant 0 : index
    %c0_6 = arith.constant 0 : index
    %c0_7 = arith.constant 0 : index
    %5 = vector.load %arg5[%c0_5, %c0_6, %c0_7] : memref<1x1x2xf32, #tpu.memory_space<vmem>>, vector<1x1x2xf32>
    %6 = vector.shape_cast %5 : vector<1x1x2xf32> to vector<1x2xf32>
    %7 = vector.broadcast %6 : vector<1x2xf32> to vector<256x2xf32>
    %8 = arith.addf %4, %7 : vector<256x2xf32>
    %cst_8 = arith.constant 0.000000e+00 : f32
    %9 = vector.broadcast %cst_8 : f32 to vector<256x2xf32>
    %10 = arith.cmpf ogt, %8, %9 : vector<256x2xf32>
    %cst_9 = arith.constant 1.000000e-01 : f32
    %11 = vector.broadcast %cst_9 : f32 to vector<256x2xf32>
    %12 = arith.mulf %11, %8 : vector<256x2xf32>
    %13 = arith.select %10, %8, %12 : vector<256x2xi1>, vector<256x2xf32>
    %14 = vector.shape_cast %13 : vector<256x2xf32> to vector<16x16x2xf32>
    %c0_10 = arith.constant 0 : index
    %c0_11 = arith.constant 0 : index
    %c0_12 = arith.constant 0 : index
    %c0_13 = arith.constant 0 : index
    %15 = vector.load %arg3[%c0_10, %c0_11, %c0_12, %c0_13] : memref<1x2x16x4xf32, #tpu.memory_space<vmem>>, vector<1x2x16x4xf32>
    %16 = vector.shape_cast %15 : vector<1x2x16x4xf32> to vector<2x16x4xf32>
    %17 = vector.shape_cast %16 : vector<2x16x4xf32> to vector<32x4xf32>
    %c0_14 = arith.constant 0 : index
    %c0_15 = arith.constant 0 : index
    %18 = vector.load %arg4[%c0_14, %c0_15] : memref<4x2xf32, #tpu.memory_space<vmem>>, vector<4x2xf32>
    %cst_16 = arith.constant dense<0.000000e+00> : vector<32x2xf32>
    %19 = tpu.matmul %17, %18, %cst_16 {dimension_numbers = #tpu.dot_dimension_numbers<[1], [0], [0], [1], [0, 0, 1, 1], [], []>} : vector<32x4xf32>, vector<4x2xf32>, vector<32x2xf32> -> vector<32x2xf32>
    %c0_17 = arith.constant 0 : index
    %c0_18 = arith.constant 0 : index
    %c0_19 = arith.constant 0 : index
    %20 = vector.load %arg5[%c0_17, %c0_18, %c0_19] : memref<1x1x2xf32, #tpu.memory_space<vmem>>, vector<1x1x2xf32>
    %21 = vector.shape_cast %20 : vector<1x1x2xf32> to vector<1x2xf32>
    %22 = vector.broadcast %21 : vector<1x2xf32> to vector<32x2xf32>
    %23 = arith.addf %19, %22 : vector<32x2xf32>
    %cst_20 = arith.constant 0.000000e+00 : f32
    %24 = vector.broadcast %cst_20 : f32 to vector<32x2xf32>
    %25 = arith.cmpf ogt, %23, %24 : vector<32x2xf32>
    %cst_21 = arith.constant 1.000000e-01 : f32
    %26 = vector.broadcast %cst_21 : f32 to vector<32x2xf32>
    %27 = arith.mulf %26, %23 : vector<32x2xf32>
    %28 = arith.select %25, %23, %27 : vector<32x2xi1>, vector<32x2xf32>
    %29 = vector.shape_cast %28 : vector<32x2xf32> to vector<2x16x2xf32>
    %c0_i32 = arith.constant 0 : i32
    %30 = arith.cmpi sgt, %arg1, %c0_i32 : i32
    %cst_22 = arith.constant 1.000000e+00 : f32
    %cst_23 = arith.constant 0.000000e+00 : f32
    %31 = arith.select %30, %cst_22, %cst_23 : f32
    %c0_i32_24 = arith.constant 0 : i32
    %32 = arith.cmpi slt, %arg1, %c0_i32_24 : i32
    %cst_25 = arith.constant 1.000000e+00 : f32
    %cst_26 = arith.constant 0.000000e+00 : f32
    %33 = arith.select %32, %cst_25, %cst_26 : f32
    %34 = vector.extract_strided_slice %29 {offsets = [0, 0, 0], sizes = [1, 16, 2], strides = [1, 1, 1]} : vector<2x16x2xf32> to vector<1x16x2xf32>
    %35 = vector.broadcast %31 : f32 to vector<1x16x2xf32>
    %36 = arith.mulf %34, %35 : vector<1x16x2xf32>
    %37 = vector.extract_strided_slice %29 {offsets = [1, 0, 0], sizes = [1, 16, 2], strides = [1, 1, 1]} : vector<2x16x2xf32> to vector<1x16x2xf32>
    %38 = vector.broadcast %33 : f32 to vector<1x16x2xf32>
    %39 = arith.mulf %37, %38 : vector<1x16x2xf32>
    %40 = tpu.iota {dimensions = array<i32: 1>} : vector<1x16x1xi32>
    %c0_i32_27 = arith.constant 0 : i32
    %41 = vector.broadcast %c0_i32_27 : i32 to vector<1x16x1xi32>
    %42 = arith.cmpi ne, %40, %41 : vector<1x16x1xi32>
    %43 = arith.extui %42 : vector<1x16x1xi1> to vector<1x16x1xi32>
    %44 = arith.sitofp %43 : vector<1x16x1xi32> to vector<1x16x1xf32>
    %c15_i32 = arith.constant 15 : i32
    %45 = vector.broadcast %c15_i32 : i32 to vector<1x16x1xi32>
    %46 = arith.cmpi ne, %40, %45 : vector<1x16x1xi32>
    %47 = arith.extui %46 : vector<1x16x1xi1> to vector<1x16x1xi32>
    %48 = arith.sitofp %47 : vector<1x16x1xi32> to vector<1x16x1xf32>
    %c1_i32 = arith.constant 1 : i32
    %49 = tpu.dynamic_rotate %14 by %c1_i32 dim 1 : vector<16x16x2xf32>, i32 -> vector<16x16x2xf32>
    %c15_i32_28 = arith.constant 15 : i32
    %50 = tpu.dynamic_rotate %14 by %c15_i32_28 dim 1 : vector<16x16x2xf32>, i32 -> vector<16x16x2xf32>
    %51 = vector.broadcast %44 : vector<1x16x1xf32> to vector<16x16x2xf32>
    %52 = arith.mulf %49, %51 : vector<16x16x2xf32>
    %53 = vector.broadcast %48 : vector<1x16x1xf32> to vector<16x16x2xf32>
    %54 = arith.mulf %50, %53 : vector<16x16x2xf32>
    %55 = tpu.concatenate %52, %14, %54 in 2 : vector<16x16x2xf32>, vector<16x16x2xf32>, vector<16x16x2xf32> -> vector<16x16x6xf32>
    %c1 = arith.constant 1 : index
    %c0_29 = arith.constant 0 : index
    %c0_30 = arith.constant 0 : index
    %56 = vector.load %arg9[%c1, %c0_29, %c0_30] : memref<18x16x6xf32, #tpu.memory_space<vmem>>, vector<16x16x6xf32>
    tpu.vector_store %arg9[%c1, %c0_29, %c0_30], %55 {strides = array<i32>} : memref<18x16x6xf32, #tpu.memory_space<vmem>>, vector<16x16x6xf32>,
    %c1_i32_31 = arith.constant 1 : i32
    %57 = tpu.dynamic_rotate %36 by %c1_i32_31 dim 1 : vector<1x16x2xf32>, i32 -> vector<1x16x2xf32>
    %c15_i32_32 = arith.constant 15 : i32
    %58 = tpu.dynamic_rotate %36 by %c15_i32_32 dim 1 : vector<1x16x2xf32>, i32 -> vector<1x16x2xf32>
    %59 = vector.broadcast %44 : vector<1x16x1xf32> to vector<1x16x2xf32>
    %60 = arith.mulf %57, %59 : vector<1x16x2xf32>
    %61 = vector.broadcast %48 : vector<1x16x1xf32> to vector<1x16x2xf32>
    %62 = arith.mulf %58, %61 : vector<1x16x2xf32>
    %63 = tpu.concatenate %60, %36, %62 in 2 : vector<1x16x2xf32>, vector<1x16x2xf32>, vector<1x16x2xf32> -> vector<1x16x6xf32>
    %c0_33 = arith.constant 0 : index
    %c0_34 = arith.constant 0 : index
    %c0_35 = arith.constant 0 : index
    %64 = vector.load %arg9[%c0_33, %c0_34, %c0_35] : memref<18x16x6xf32, #tpu.memory_space<vmem>>, vector<1x16x6xf32>
    tpu.vector_store %arg9[%c0_33, %c0_34, %c0_35], %63 {strides = array<i32>} : memref<18x16x6xf32, #tpu.memory_space<vmem>>, vector<1x16x6xf32>,
    %c1_i32_36 = arith.constant 1 : i32
    %65 = tpu.dynamic_rotate %39 by %c1_i32_36 dim 1 : vector<1x16x2xf32>, i32 -> vector<1x16x2xf32>
    %c15_i32_37 = arith.constant 15 : i32
    %66 = tpu.dynamic_rotate %39 by %c15_i32_37 dim 1 : vector<1x16x2xf32>, i32 -> vector<1x16x2xf32>
    %67 = vector.broadcast %44 : vector<1x16x1xf32> to vector<1x16x2xf32>
    %68 = arith.mulf %65, %67 : vector<1x16x2xf32>
    %69 = vector.broadcast %48 : vector<1x16x1xf32> to vector<1x16x2xf32>
    %70 = arith.mulf %66, %69 : vector<1x16x2xf32>
    %71 = tpu.concatenate %68, %39, %70 in 2 : vector<1x16x2xf32>, vector<1x16x2xf32>, vector<1x16x2xf32> -> vector<1x16x6xf32>
    %c17 = arith.constant 17 : index
    %c0_38 = arith.constant 0 : index
    %c0_39 = arith.constant 0 : index
    %72 = vector.load %arg9[%c17, %c0_38, %c0_39] : memref<18x16x6xf32, #tpu.memory_space<vmem>>, vector<1x16x6xf32>
    tpu.vector_store %arg9[%c17, %c0_38, %c0_39], %71 {strides = array<i32>} : memref<18x16x6xf32, #tpu.memory_space<vmem>>, vector<1x16x6xf32>,
    %c0_40 = arith.constant 0 : index
    %c0_41 = arith.constant 0 : index
    %c0_42 = arith.constant 0 : index
    %73 = vector.load %arg9[%c0_40, %c0_41, %c0_42] : memref<18x16x6xf32, #tpu.memory_space<vmem>>, vector<16x16x6xf32>
    %74 = vector.shape_cast %73 : vector<16x16x6xf32> to vector<256x6xf32>
    %c0_43 = arith.constant 0 : index
    %c0_44 = arith.constant 0 : index
    %c0_45 = arith.constant 0 : index
    %75 = vector.load %arg6[%c0_43, %c0_44, %c0_45] : memref<3x6x4xf32, #tpu.memory_space<vmem>>, vector<1x6x4xf32>
    %76 = vector.shape_cast %75 : vector<1x6x4xf32> to vector<6x4xf32>
    %cst_46 = arith.constant dense<0.000000e+00> : vector<256x4xf32>
    %77 = tpu.matmul %74, %76, %cst_46 {dimension_numbers = #tpu.dot_dimension_numbers<[1], [0], [0], [1], [0, 0, 1, 1], [], []>} : vector<256x6xf32>, vector<6x4xf32>, vector<256x4xf32> -> vector<256x4xf32>
    %c1_47 = arith.constant 1 : index
    %c0_48 = arith.constant 0 : index
    %c0_49 = arith.constant 0 : index
    %78 = vector.load %arg9[%c1_47, %c0_48, %c0_49] : memref<18x16x6xf32, #tpu.memory_space<vmem>>, vector<16x16x6xf32>
    %79 = vector.shape_cast %78 : vector<16x16x6xf32> to vector<256x6xf32>
    %c1_50 = arith.constant 1 : index
    %c0_51 = arith.constant 0 : index
    %c0_52 = arith.constant 0 : index
    %80 = vector.load %arg6[%c1_50, %c0_51, %c0_52] : memref<3x6x4xf32, #tpu.memory_space<vmem>>, vector<1x6x4xf32>
    %81 = vector.shape_cast %80 : vector<1x6x4xf32> to vector<6x4xf32>
    %cst_53 = arith.constant dense<0.000000e+00> : vector<256x4xf32>
    %82 = tpu.matmul %79, %81, %cst_53 {dimension_numbers = #tpu.dot_dimension_numbers<[1], [0], [0], [1], [0, 0, 1, 1], [], []>} : vector<256x6xf32>, vector<6x4xf32>, vector<256x4xf32> -> vector<256x4xf32>
    %83 = arith.addf %77, %82 : vector<256x4xf32>
    %c2 = arith.constant 2 : index
    %c0_54 = arith.constant 0 : index
    %c0_55 = arith.constant 0 : index
    %84 = vector.load %arg9[%c2, %c0_54, %c0_55] : memref<18x16x6xf32, #tpu.memory_space<vmem>>, vector<16x16x6xf32>
    %85 = vector.shape_cast %84 : vector<16x16x6xf32> to vector<256x6xf32>
    %c2_56 = arith.constant 2 : index
    %c0_57 = arith.constant 0 : index
    %c0_58 = arith.constant 0 : index
    %86 = vector.load %arg6[%c2_56, %c0_57, %c0_58] : memref<3x6x4xf32, #tpu.memory_space<vmem>>, vector<1x6x4xf32>
    %87 = vector.shape_cast %86 : vector<1x6x4xf32> to vector<6x4xf32>
    %cst_59 = arith.constant dense<0.000000e+00> : vector<256x4xf32>
    %88 = tpu.matmul %85, %87, %cst_59 {dimension_numbers = #tpu.dot_dimension_numbers<[1], [0], [0], [1], [0, 0, 1, 1], [], []>} : vector<256x6xf32>, vector<6x4xf32>, vector<256x4xf32> -> vector<256x4xf32>
    %89 = arith.addf %83, %88 : vector<256x4xf32>
    %90 = vector.shape_cast %89 : vector<256x4xf32> to vector<16x16x4xf32>
    %c0_60 = arith.constant 0 : index
    %c0_61 = arith.constant 0 : index
    %c0_62 = arith.constant 0 : index
    %91 = vector.load %arg7[%c0_60, %c0_61, %c0_62] : memref<1x1x4xf32, #tpu.memory_space<vmem>>, vector<1x1x4xf32>
    %92 = vector.broadcast %91 : vector<1x1x4xf32> to vector<16x16x4xf32>
    %93 = arith.addf %90, %92 : vector<16x16x4xf32>
    %cst_63 = arith.constant 0.000000e+00 : f32
    %94 = vector.broadcast %cst_63 : f32 to vector<16x16x4xf32>
    %95 = arith.cmpf ogt, %93, %94 : vector<16x16x4xf32>
    %cst_64 = arith.constant 1.000000e-01 : f32
    %96 = vector.broadcast %cst_64 : f32 to vector<16x16x4xf32>
    %97 = arith.mulf %96, %93 : vector<16x16x4xf32>
    %98 = arith.select %95, %93, %97 : vector<16x16x4xi1>, vector<16x16x4xf32>
    %c0_65 = arith.constant 0 : index
    %c0_66 = arith.constant 0 : index
    %c0_67 = arith.constant 0 : index
    %c0_68 = arith.constant 0 : index
    %99 = vector.load %arg2[%c0_65, %c0_66, %c0_67, %c0_68] : memref<1x16x16x4xf32, #tpu.memory_space<vmem>>, vector<1x16x16x4xf32>
    %100 = vector.shape_cast %99 : vector<1x16x16x4xf32> to vector<16x16x4xf32>
    %101 = arith.addf %98, %100 : vector<16x16x4xf32>
    %c0_69 = arith.constant 0 : index
    %c0_70 = arith.constant 0 : index
    %c0_71 = arith.constant 0 : index
    %c0_72 = arith.constant 0 : index
    %102 = vector.load %arg8[%c0_69, %c0_70, %c0_71, %c0_72] : memref<1x16x16x4xf32, #tpu.memory_space<vmem>>, vector<1x16x16x4xf32>
    %103 = vector.shape_cast %102 : vector<1x16x16x4xf32> to vector<16x16x4xf32>
    %104 = vector.shape_cast %101 : vector<16x16x4xf32> to vector<1x16x16x4xf32>
    tpu.vector_store %arg8[%c0_69, %c0_70, %c0_71, %c0_72], %104 {strides = array<i32>} : memref<1x16x16x4xf32, #tpu.memory_space<vmem>>, vector<1x16x16x4xf32>,
    return
  }
  func.func @transform_0(%arg0: i32, %arg1: i32) -> (i32, i32, i32, i32) {
    %c0_i32 = arith.constant 0 : i32
    %c0_i32_0 = arith.constant 0 : i32
    %c0_i32_1 = arith.constant 0 : i32
    return %arg0, %arg1, %c0_i32, %c0_i32_0 : i32, i32, i32, i32
  }
  func.func @transform_1(%arg0: i32, %arg1: i32) -> (i32, i32, i32, i32) {
    %c0_i32 = arith.constant 0 : i32
    %c0_i32_0 = arith.constant 0 : i32
    %c0_i32_1 = arith.constant 0 : i32
    return %arg0, %arg1, %c0_i32, %c0_i32_0 : i32, i32, i32, i32
  }
  func.func @transform_2(%arg0: i32, %arg1: i32) -> (i32, i32) {
    %c0_i32 = arith.constant 0 : i32
    %c0_i32_0 = arith.constant 0 : i32
    %c0_i32_1 = arith.constant 0 : i32
    return %c0_i32, %c0_i32_0 : i32, i32
  }
  func.func @transform_3(%arg0: i32, %arg1: i32) -> (i32, i32, i32) {
    %c0_i32 = arith.constant 0 : i32
    %c0_i32_0 = arith.constant 0 : i32
    %c0_i32_1 = arith.constant 0 : i32
    %c0_i32_2 = arith.constant 0 : i32
    return %c0_i32, %c0_i32_0, %c0_i32_1 : i32, i32, i32
  }
  func.func @transform_4(%arg0: i32, %arg1: i32) -> (i32, i32, i32) {
    %c0_i32 = arith.constant 0 : i32
    %c0_i32_0 = arith.constant 0 : i32
    %c0_i32_1 = arith.constant 0 : i32
    %c0_i32_2 = arith.constant 0 : i32
    return %c0_i32, %c0_i32_0, %c0_i32_1 : i32, i32, i32
  }
  func.func @transform_5(%arg0: i32, %arg1: i32) -> (i32, i32, i32) {
    %c0_i32 = arith.constant 0 : i32
    %c0_i32_0 = arith.constant 0 : i32
    %c0_i32_1 = arith.constant 0 : i32
    %c0_i32_2 = arith.constant 0 : i32
    return %c0_i32, %c0_i32_0, %c0_i32_1 : i32, i32, i32
  }
  func.func @transform_6(%arg0: i32, %arg1: i32) -> (i32, i32, i32, i32) {
    %c0_i32 = arith.constant 0 : i32
    %c0_i32_0 = arith.constant 0 : i32
    %c0_i32_1 = arith.constant 0 : i32
    return %arg0, %arg1, %c0_i32, %c0_i32_0 : i32, i32, i32, i32
  }
}

</mosaic_0001>

<llo_original>
// kernel: tpu_custom_call.1
$region0: #{tpu_custom_call.1}
  #allocation0 [shape = 'u32[]', space=smem, size = 0x4, offset = 0x4, fixed_abs, tag = 'smem constant byte address 0x4 - core index']
  #allocation1 [shape = 'u32[72,128]{1,0:T(1,128)}', space=vmem, size = 0x9000, scoped, tag = 'internal scratch']
  #allocation2 [shape = 'f32[18,16,6]{2,1,0:T(8,128)}', space=vmem, size = 0x24000, scoped, tag = 'scratch operand']
  %s0 = inlined_call_operand.vmem [shape: f32[2,16,16,4], index: 0, kind: input, shape index: {}]
  %s1 = inlined_call_operand.vmem [shape: f32[2,2,16,4], index: 1, kind: input, shape index: {}]
  %s2 = inlined_call_operand.vmem [shape: f32[4,2], index: 2, kind: input, shape index: {}]
  %s3 = inlined_call_operand.vmem [shape: f32[1,1,2], index: 3, kind: input, shape index: {}]
  %s4 = inlined_call_operand.vmem [shape: f32[3,6,4], index: 4, kind: input, shape index: {}]
  %s5 = inlined_call_operand.vmem [shape: f32[1,1,4], index: 5, kind: input, shape index: {}]
  %s6 = inlined_call_operand.vmem [shape: f32[2,16,16,4], index: 6, kind: output, shape index: {}]
  %s7 = sld [smem:[#allocation0]]
  $region57: #{tpu_custom_call.1} parent=0
    _
  %s9 = ssub.s32 1, %s7
  %s10 = scalar_select 0, %s9, %s7
  loop: start=0, step=1, limit=4
  $region2: #{tpu_custom_call.1} parent=0 // loop_pre_header
    _
  $region3: #{tpu_custom_call.1} parent=0 // loop_header
    %s12 = sphi 0, %s16
    %p13 = scmp.ge.s32.totalorder %s12, 4
    %s19 = sphi 0, %s31
    %s20 = sphi 0, %s27
    %s21 = sphi 0, %s19
    %s22 = sphi 0, %s20
    %s23 = sphi 0, %s21
    %s24 = sphi 0, %s22
    %s36 = sphi 0, %s38
    %s39 = sphi 0, %s36
    %s40 = sphi 0, %s39
    %s56 = sphi 0, %s40
    %s64 = sphi 0, %s66
    %s67 = sphi 0, %s64
    %s68 = sphi 0, %s67
    %s84 = sphi 0, %s68
    %s88 = sphi 0, %s88
    %s90 = sphi 0, %s88
    %s91 = sphi 0, %s90
    %s105 = sphi 0, %s91
    %s109 = sphi 0, %s109
    %s111 = sphi 0, %s109
    %s112 = sphi 0, %s111
    %s126 = sphi 0, %s112
    %s130 = sphi 0, %s130
    %s132 = sphi 0, %s130
    %s133 = sphi 0, %s132
    %s147 = sphi 0, %s133
    %s151 = sphi 0, %s151
    %s153 = sphi 0, %s151
    %s154 = sphi 0, %s153
    %s168 = sphi 0, %s154
    %s176 = sphi 0, %s178
    %s179 = sphi 0, %s176
    %s180 = sphi 0, %s179
    %s196 = sphi 0, %s180
  $region4: #{tpu_custom_call.1} parent=0 // loop_header_branch
    %15 = sbr.rel (%p13) target = $region8
  $region5: #{tpu_custom_call.1} parent=0 // loop_body
    %s17 = ssub.s32 %s12, 1
    %s18 = ssub.s32 %s12, 2
    %s25 = sadd.s32 1, %s20
    %p26 = scmp.ge.s32.totalorder %s25, 1
    %s27 = scalar_select %p26, 0, %s25
    %s28 = sadd.s32 1, %s19
    %s29 = scalar_select %p26, %s28, %s19
    %p30 = scmp.ge.s32.totalorder %s29, 2
    %s31 = scalar_select %p30, 0, %s29
    %s32 = ssub.s32 %s19, %s31
    %s33 = ssub.s32 %s20, %s27
    %s34 = sor.u32 %s32, %s33
    %p35 = scmp.eq.s32.totalorder %s34, 0
    %s37 = sadd.s32 %s36, 1
    %s38 = scalar_select %p35, %s36, %s37
    %p41 = pneg %p35
    %p42 = scmp.eq.s32.totalorder %s12, 1
    %p43 = por %p41, %p42
    %p44 = scmp.ne.s32.totalorder %s36, %s39
    %p45 = scmp.eq.s32.totalorder %s12, 0
    %p46 = por %p44, %p45
    %p47 = scmp.ne.s32.totalorder %s36, %s39
    %p48 = scmp.eq.s32.totalorder %s17, 1
    %p49 = por %p47, %p48
    %p50 = scmp.ne.s32.totalorder %s39, %s40
    %p51 = scmp.eq.s32.totalorder %s17, 0
    %p52 = por %p50, %p51
    %p53 = scmp.ne.s32.totalorder %s39, %s40
    %p54 = scmp.eq.s32.totalorder %s18, 1
    %p55 = por %p53, %p54
    %p57 = scmp.ne.s32.totalorder %s40, %s56
    %p58 = scmp.eq.s32.totalorder %s18, 0
    %p59 = por %p57, %p58
    %s60 = ssub.s32 %s19, %s31
    %s61 = ssub.s32 %s20, %s27
    %s62 = sor.u32 %s60, %s61
    %p63 = scmp.eq.s32.totalorder %s62, 0
    %s65 = sadd.s32 %s64, 1
    %s66 = scalar_select %p63, %s64, %s65
    %p69 = pneg %p63
    %p70 = scmp.eq.s32.totalorder %s12, 1
    %p71 = por %p69, %p70
    %p72 = scmp.ne.s32.totalorder %s64, %s67
    %p73 = scmp.eq.s32.totalorder %s12, 0
    %p74 = por %p72, %p73
    %p75 = scmp.ne.s32.totalorder %s64, %s67
    %p76 = scmp.eq.s32.totalorder %s17, 1
    %p77 = por %p75, %p76
    %p78 = scmp.ne.s32.totalorder %s67, %s68
    %p79 = scmp.eq.s32.totalorder %s17, 0
    %p80 = por %p78, %p79
    %p81 = scmp.ne.s32.totalorder %s67, %s68
    %p82 = scmp.eq.s32.totalorder %s18, 1
    %p83 = por %p81, %p82
    %p85 = scmp.ne.s32.totalorder %s68, %s84
    %p86 = scmp.eq.s32.totalorder %s18, 0
    %p87 = por %p85, %p86
    %s89 = sadd.s32 %s88, 1
    %p92 = scmp.eq.s32.totalorder %s12, 1
    %p93 = scmp.ne.s32.totalorder %s88, %s90
    %p94 = scmp.eq.s32.totalorder %s12, 0
    %p95 = por %p93, %p94
    %p96 = scmp.ne.s32.totalorder %s88, %s90
    %p97 = scmp.eq.s32.totalorder %s17, 1
    %p98 = por %p96, %p97
    %p99 = scmp.ne.s32.totalorder %s90, %s91
    %p100 = scmp.eq.s32.totalorder %s17, 0
    %p101 = por %p99, %p100
    %p102 = scmp.ne.s32.totalorder %s90, %s91
    %p103 = scmp.eq.s32.totalorder %s18, 1
    %p104 = por %p102, %p103
    %p106 = scmp.ne.s32.totalorder %s91, %s105
    %p107 = scmp.eq.s32.totalorder %s18, 0
    %p108 = por %p106, %p107
    %s110 = sadd.s32 %s109, 1
    %p113 = scmp.eq.s32.totalorder %s12, 1
    %p114 = scmp.ne.s32.totalorder %s109, %s111
    %p115 = scmp.eq.s32.totalorder %s12, 0
    %p116 = por %p114, %p115
    %p117 = scmp.ne.s32.totalorder %s109, %s111
    %p118 = scmp.eq.s32.totalorder %s17, 1
    %p119 = por %p117, %p118
    %p120 = scmp.ne.s32.totalorder %s111, %s112
    %p121 = scmp.eq.s32.totalorder %s17, 0
    %p122 = por %p120, %p121
    %p123 = scmp.ne.s32.totalorder %s111, %s112
    %p124 = scmp.eq.s32.totalorder %s18, 1
    %p125 = por %p123, %p124
    %p127 = scmp.ne.s32.totalorder %s112, %s126
    %p128 = scmp.eq.s32.totalorder %s18, 0
    %p129 = por %p127, %p128
    %s131 = sadd.s32 %s130, 1
    %p134 = scmp.eq.s32.totalorder %s12, 1
    %p135 = scmp.ne.s32.totalorder %s130, %s132
    %p136 = scmp.eq.s32.totalorder %s12, 0
    %p137 = por %p135, %p136
    %p138 = scmp.ne.s32.totalorder %s130, %s132
    %p139 = scmp.eq.s32.totalorder %s17, 1
    %p140 = por %p138, %p139
    %p141 = scmp.ne.s32.totalorder %s132, %s133
    %p142 = scmp.eq.s32.totalorder %s17, 0
    %p143 = por %p141, %p142
    %p144 = scmp.ne.s32.totalorder %s132, %s133
    %p145 = scmp.eq.s32.totalorder %s18, 1
    %p146 = por %p144, %p145
    %p148 = scmp.ne.s32.totalorder %s133, %s147
    %p149 = scmp.eq.s32.totalorder %s18, 0
    %p150 = por %p148, %p149
    %s152 = sadd.s32 %s151, 1
    %p155 = scmp.eq.s32.totalorder %s12, 1
    %p156 = scmp.ne.s32.totalorder %s151, %s153
    %p157 = scmp.eq.s32.totalorder %s12, 0
    %p158 = por %p156, %p157
    %p159 = scmp.ne.s32.totalorder %s151, %s153
    %p160 = scmp.eq.s32.totalorder %s17, 1
    %p161 = por %p159, %p160
    %p162 = scmp.ne.s32.totalorder %s153, %s154
    %p163 = scmp.eq.s32.totalorder %s17, 0
    %p164 = por %p162, %p163
    %p165 = scmp.ne.s32.totalorder %s153, %s154
    %p166 = scmp.eq.s32.totalorder %s18, 1
    %p167 = por %p165, %p166
    %p169 = scmp.ne.s32.totalorder %s154, %s168
    %p170 = scmp.eq.s32.totalorder %s18, 0
    %p171 = por %p169, %p170
    %s172 = ssub.s32 %s19, %s31
    %s173 = ssub.s32 %s20, %s27
    %s174 = sor.u32 %s172, %s173
    %p175 = scmp.eq.s32.totalorder %s174, 0
    %s177 = sadd.s32 %s176, 1
    %s178 = scalar_select %p175, %s176, %s177
    %p181 = pneg %p175
    %p182 = scmp.eq.s32.totalorder %s12, 1
    %p183 = por %p181, %p182
    %p184 = scmp.ne.s32.totalorder %s176, %s179
    %p185 = scmp.eq.s32.totalorder %s12, 0
    %p186 = por %p184, %p185
    %p187 = scmp.ne.s32.totalorder %s176, %s179
    %p188 = scmp.eq.s32.totalorder %s17, 1
    %p189 = por %p187, %p188
    %p190 = scmp.ne.s32.totalorder %s179, %s180
    %p191 = scmp.eq.s32.totalorder %s17, 0
    %p192 = por %p190, %p191
    %p193 = scmp.ne.s32.totalorder %s179, %s180
    %p194 = scmp.eq.s32.totalorder %s18, 1
    %p195 = por %p193, %p194
    %p197 = scmp.ne.s32.totalorder %s180, %s196
    %p198 = scmp.eq.s32.totalorder %s18, 0
    %p199 = por %p197, %p198
    %p200 = scmp.le.s32.totalorder 1, %s12
    %p201 = scmp.lt.s32.totalorder %s12, 3
    %p202 = pnand %p200, %p201
    %p203 = pneg %p202
    // Predicated region
    $region9: #{tpu_custom_call.1} parent=5 // pred_check
      _
    $region10: #{tpu_custom_call.1} parent=5 // pred_check_branch
      %205 = sbr.rel (%p202) target = $region12
    $region11: #{tpu_custom_call.1} parent=5 // pred_region
      %s206 = ssub.s32 %s12, 1
      // Predicated region
      $region13: #{tpu_custom_call.1} parent=11 // pred_check
        %p207 = pneg %p101
      $region14: #{tpu_custom_call.1} parent=11 // pred_check_branch
        %209 = sbr.rel (%p207) target = $region16
      $region15: #{tpu_custom_call.1} parent=11 // pred_region
        _
      $region16: #{tpu_custom_call.1} parent=11 // pred_fallthru
        _
      // Predicated region
      $region17: #{tpu_custom_call.1} parent=11 // pred_check
        %p210 = pneg %p122
      $region18: #{tpu_custom_call.1} parent=11 // pred_check_branch
        %212 = sbr.rel (%p210) target = $region20
      $region19: #{tpu_custom_call.1} parent=11 // pred_region
        _
      $region20: #{tpu_custom_call.1} parent=11 // pred_fallthru
        _
      // Predicated region
      $region21: #{tpu_custom_call.1} parent=11 // pred_check
        %p213 = pneg %p143
      $region22: #{tpu_custom_call.1} parent=11 // pred_check_branch
        %215 = sbr.rel (%p213) target = $region24
      $region23: #{tpu_custom_call.1} parent=11 // pred_region
        _
      $region24: #{tpu_custom_call.1} parent=11 // pred_fallthru
        _
      // Predicated region
      $region25: #{tpu_custom_call.1} parent=11 // pred_check
        %p216 = pneg %p164
      $region26: #{tpu_custom_call.1} parent=11 // pred_check_branch
        %218 = sbr.rel (%p216) target = $region28
      $region27: #{tpu_custom_call.1} parent=11 // pred_region
        _
      $region28: #{tpu_custom_call.1} parent=11 // pred_fallthru
        _
    $region12: #{tpu_custom_call.1} parent=5 // pred_fallthru
      _
    %p219 = scmp.lt.s32.totalorder %s12, 2
    // Predicated region
    $region29: #{tpu_custom_call.1} parent=5 // pred_check
      %p220 = pneg %p219
    $region30: #{tpu_custom_call.1} parent=5 // pred_check_branch
      %222 = sbr.rel (%p220) target = $region32
    $region31: #{tpu_custom_call.1} parent=5 // pred_region
      // Predicated region
      $region33: #{tpu_custom_call.1} parent=31 // pred_check
        %p223 = pneg %p46
      $region34: #{tpu_custom_call.1} parent=31 // pred_check_branch
        %225 = sbr.rel (%p223) target = $region36
      $region35: #{tpu_custom_call.1} parent=31 // pred_region
        %s226 = smul.u32 16, %s20
        %p227 = scmp.lt.s32.totalorder %s19, 1
        %s228 = scalar_select %p227, %s19, 1
        %p229 = scmp.lt.s32.totalorder %s226, 15
        %s230 = scalar_select %p229, %s226, 15
        %s231 = smul.addr %s230, 2
        %s232 = smul.addr %s228, 32
        %s233 = sadd.s32 %s231, %s232
        %s234 = smul.addr %s233, 8
        %s235 = scalar_lea.vmem %s0, %s234
        %s236 = smul.u32 16, %s20
      $region36: #{tpu_custom_call.1} parent=31 // pred_fallthru
        _
      // Predicated region
      $region37: #{tpu_custom_call.1} parent=31 // pred_check
        %p237 = pneg %p74
      $region38: #{tpu_custom_call.1} parent=31 // pred_check_branch
        %239 = sbr.rel (%p237) target = $region40
      $region39: #{tpu_custom_call.1} parent=31 // pred_region
        %s240 = smul.u32 2, %s20
        %p241 = scmp.lt.s32.totalorder %s19, 1
        %s242 = scalar_select %p241, %s19, 1
        %p243 = scmp.lt.s32.totalorder %s240, 1
        %s244 = scalar_select %p243, %s240, 1
        %s245 = smul.addr %s244, 2
        %s246 = smul.addr %s242, 4
        %s247 = sadd.s32 %s245, %s246
        %s248 = smul.addr %s247, 8
        %s249 = scalar_lea.vmem %s1, %s248
        %s250 = smul.u32 2, %s20
      $region40: #{tpu_custom_call.1} parent=31 // pred_fallthru
        _
    $region32: #{tpu_custom_call.1} parent=5 // pred_fallthru
      _
    %p251 = scmp.le.s32.totalorder 1, %s12
    %p252 = scmp.lt.s32.totalorder %s12, 3
    %p253 = pnand %p251, %p252
    %p254 = pneg %p253
    // Predicated region
    $region41: #{tpu_custom_call.1} parent=5 // pred_check
      _
    $region42: #{tpu_custom_call.1} parent=5 // pred_check_branch
      %256 = sbr.rel (%p253) target = $region44
    $region43: #{tpu_custom_call.1} parent=5 // pred_region
      %s257 = ssub.s32 %s12, 1
      %s258 = smul.u32 16, %s22
      %p259 = scmp.lt.s32.totalorder %s21, 1
      %s260 = scalar_select %p259, %s21, 1
      %p261 = scmp.lt.s32.totalorder %s258, 15
      %s262 = scalar_select %p261, %s258, 15
      %s263 = smul.addr %s262, 2
      %s264 = smul.addr %s260, 32
      %s265 = sadd.s32 %s263, %s264
      %s266 = smul.addr %s265, 8
      %s267 = scalar_lea.vmem %s0, %s266
      %p268 = pneg %p52
      %p269 = pneg %p49
      %s270 = smul.u32 2, %s22
      %p271 = scmp.lt.s32.totalorder %s21, 1
      %s272 = scalar_select %p271, %s21, 1
      %p273 = scmp.lt.s32.totalorder %s270, 1
      %s274 = scalar_select %p273, %s270, 1
      %s275 = smul.addr %s274, 2
      %s276 = smul.addr %s272, 4
      %s277 = sadd.s32 %s275, %s276
      %s278 = smul.addr %s277, 8
      %s279 = scalar_lea.vmem %s1, %s278
      %p280 = pneg %p80
      %p281 = pneg %p77
      %p282 = pneg %p101
      %p283 = pneg %p98
      %p284 = pneg %p122
      %p285 = pneg %p119
      %p286 = pneg %p143
      %p287 = pneg %p140
      %p288 = pneg %p164
      %p289 = pneg %p161
      %p290 = pneg %p192
      %p291 = pneg %p189
      %s292 = smul.u32 16, %s22
      %p293 = scmp.lt.s32.totalorder %s21, 1
      %s294 = scalar_select %p293, %s21, 1
      %p295 = scmp.lt.s32.totalorder %s292, 15
      %s296 = scalar_select %p295, %s292, 15
      %s297 = smul.addr %s296, 2
      %s298 = smul.addr %s294, 32
      %s299 = sadd.s32 %s297, %s298
      %s300 = smul.addr %s299, 8
      %s301 = scalar_lea.vmem %s6, %s300
      %s302 = smul.u32 16, %s22
      %p303 = scmp.lt.s32.totalorder %s21, 1
      %s304 = scalar_select %p303, %s21, 1
      %p305 = scmp.lt.s32.totalorder %s302, 15
      %s306 = scalar_select %p305, %s302, 15
      %s307 = smul.addr %s306, 2
      %s308 = smul.addr %s304, 32
      %s309 = sadd.s32 %s307, %s308
      %s310 = smul.addr %s309, 8
      %s311 = scalar_lea.vmem %s0, %s310
      %s312 = smul.u32 16, %s22
      %s313 = smul.u32 2, %s22
      %p314 = scmp.lt.s32.totalorder %s21, 1
      %s315 = scalar_select %p314, %s21, 1
      %p316 = scmp.lt.s32.totalorder %s313, 1
      %s317 = scalar_select %p316, %s313, 1
      %s318 = smul.addr %s317, 2
      %s319 = smul.addr %s315, 4
      %s320 = sadd.s32 %s318, %s319
      %s321 = smul.addr %s320, 8
      %s322 = scalar_lea.vmem %s1, %s321
      %s323 = smul.u32 2, %s22
      %s324 = smul.u32 16, %s22
      %p325 = scmp.lt.s32.totalorder %s21, 1
      %s326 = scalar_select %p325, %s21, 1
      %p327 = scmp.lt.s32.totalorder %s324, 15
      %s328 = scalar_select %p327, %s324, 15
      %s329 = smul.addr %s328, 2
      %s330 = smul.addr %s326, 32
      %s331 = sadd.s32 %s329, %s330
      %s332 = smul.addr %s331, 8
      %s333 = scalar_lea.vmem %s6, %s332
      %s334 = smul.u32 16, %s22
      %v335 = vld [vmem:[%s311] sm:$0xff]
      %v336 = vld [vmem:[%s311 + $0x8] sm:$0xff]
      %v337 = vld [vmem:[%s311 + $0x10] sm:$0xff]
      %v338 = vld [vmem:[%s311 + $0x18] sm:$0xff]
      %v339 = vld [vmem:[%s311 + $0x20] sm:$0xff]
      %v340 = vld [vmem:[%s311 + $0x28] sm:$0xff]
      %v341 = vld [vmem:[%s311 + $0x30] sm:$0xff]
      %v342 = vld [vmem:[%s311 + $0x38] sm:$0xff]
      %v343 = vld [vmem:[%s311 + $0x40] sm:$0xff]
      %v344 = vld [vmem:[%s311 + $0x48] sm:$0xff]
      %v345 = vld [vmem:[%s311 + $0x50] sm:$0xff]
      %v346 = vld [vmem:[%s311 + $0x58] sm:$0xff]
      %v347 = vld [vmem:[%s311 + $0x60] sm:$0xff]
      %v348 = vld [vmem:[%s311 + $0x68] sm:$0xff]
      %v349 = vld [vmem:[%s311 + $0x70] sm:$0xff]
      %v350 = vld [vmem:[%s311 + $0x78] sm:$0xff]
      %v351 = vld [vmem:[%s311 + $0x80] sm:$0xff]
      %v352 = vld [vmem:[%s311 + $0x88] sm:$0xff]
      %v353 = vld [vmem:[%s311 + $0x90] sm:$0xff]
      %v354 = vld [vmem:[%s311 + $0x98] sm:$0xff]
      %v355 = vld [vmem:[%s311 + $0xa0] sm:$0xff]
      %v356 = vld [vmem:[%s311 + $0xa8] sm:$0xff]
      %v357 = vld [vmem:[%s311 + $0xb0] sm:$0xff]
      %v358 = vld [vmem:[%s311 + $0xb8] sm:$0xff]
      %v359 = vld [vmem:[%s311 + $0xc0] sm:$0xff]
      %v360 = vld [vmem:[%s311 + $0xc8] sm:$0xff]
      %v361 = vld [vmem:[%s311 + $0xd0] sm:$0xff]
      %v362 = vld [vmem:[%s311 + $0xd8] sm:$0xff]
      %v363 = vld [vmem:[%s311 + $0xe0] sm:$0xff]
      %v364 = vld [vmem:[%s311 + $0xe8] sm:$0xff]
      %v365 = vld [vmem:[%s311 + $0xf0] sm:$0xff]
      %v366 = vld [vmem:[%s311 + $0xf8] sm:$0xff]
      %v367 = vld [vmem:[%s2] sm:$0xf]
      %v368 = vld [vmem:[%s3] sm:$0x1]
      %v370 = vperm.slane %v368, 0
      %vm372 = vcmask 31744
      %v374 = vsel %vm372, %v335, 0
      %v377 = vsel %vm372, %v336, 0
      %v380 = vsel %vm372, %v337, 0
      %v383 = vsel %vm372, %v338, 0
      %v386 = vsel %vm372, %v339, 0
      %v389 = vsel %vm372, %v340, 0
      %v392 = vsel %vm372, %v341, 0
      %v395 = vsel %vm372, %v342, 0
      %v398 = vsel %vm372, %v343, 0
      %v401 = vsel %vm372, %v344, 0
      %v404 = vsel %vm372, %v345, 0
      %v407 = vsel %vm372, %v346, 0
      %v410 = vsel %vm372, %v347, 0
      %v413 = vsel %vm372, %v348, 0
      %v416 = vsel %vm372, %v349, 0
      %v419 = vsel %vm372, %v350, 0
      %v422 = vsel %vm372, %v351, 0
      %v425 = vsel %vm372, %v352, 0
      %v428 = vsel %vm372, %v353, 0
      %v431 = vsel %vm372, %v354, 0
      %v434 = vsel %vm372, %v355, 0
      %v437 = vsel %vm372, %v356, 0
      %v440 = vsel %vm372, %v357, 0
      %v443 = vsel %vm372, %v358, 0
      %v446 = vsel %vm372, %v359, 0
      %v449 = vsel %vm372, %v360, 0
      %v452 = vsel %vm372, %v361, 0
      %v455 = vsel %vm372, %v362, 0
      %v458 = vsel %vm372, %v363, 0
      %v461 = vsel %vm372, %v364, 0
      %v464 = vsel %vm372, %v365, 0
      %v467 = vsel %vm372, %v366, 0
      %vm469 = vcmask 1043456
      %v471 = vsel %vm469, %v367, 0
      %473 = vmatpush.msra.mxu0 0.0
      %474 = vmatpush.msra.mxu0 0.0
      %475 = vmatpush.msra.mxu0 0.0
      %476 = vmatpush.msra.mxu0 0.0
      %477 = vmatpush.msra.mxu0 0.0
      %478 = vmatpush.msra.mxu0 0.0
      %479 = vmatpush.msra.mxu0 0.0
      %480 = vmatpush.msra.mxu0 0.0
      %481 = vmatpush.msra.mxu0 0.0
      %482 = vmatpush.msra.mxu0 0.0
      %483 = vmatpush.msra.mxu0 0.0
      %484 = vmatpush.msra.mxu0 0.0
      %485 = vmatpush.msra.mxu0 0.0
      %486 = vmatpush.msra.mxu0 0.0
      %487 = vmatpush.msra.mxu0 0.0
      %488 = vmatpush.msra.mxu0 %v471
      %489 = vmatmul.f32.gmra.mxu0 %v374
      %v490 = vpop.f32.mrf.mxu0
      %v491 = vadd.f32 %v370, %v490
      %492 = vmatmul.f32.gmra.mxu0 %v377
      %v493 = vpop.f32.mrf.mxu0
      %v494 = vadd.f32 %v370, %v493
      %495 = vmatmul.f32.gmra.mxu0 %v380
      %v496 = vpop.f32.mrf.mxu0
      %v497 = vadd.f32 %v370, %v496
      %498 = vmatmul.f32.gmra.mxu0 %v383
      %v499 = vpop.f32.mrf.mxu0
      %v500 = vadd.f32 %v370, %v499
      %501 = vmatmul.f32.gmra.mxu0 %v386
      %v502 = vpop.f32.mrf.mxu0
      %v503 = vadd.f32 %v370, %v502
      %504 = vmatmul.f32.gmra.mxu0 %v389
      %v505 = vpop.f32.mrf.mxu0
      %v506 = vadd.f32 %v370, %v505
      %507 = vmatmul.f32.gmra.mxu0 %v392
      %v508 = vpop.f32.mrf.mxu0
      %v509 = vadd.f32 %v370, %v508
      %510 = vmatmul.f32.gmra.mxu0 %v395
      %v511 = vpop.f32.mrf.mxu0
      %v512 = vadd.f32 %v370, %v511
      %513 = vmatmul.f32.gmra.mxu0 %v398
      %v514 = vpop.f32.mrf.mxu0
      %v515 = vadd.f32 %v370, %v514
      %516 = vmatmul.f32.gmra.mxu0 %v401
      %v517 = vpop.f32.mrf.mxu0
      %v518 = vadd.f32 %v370, %v517
      %519 = vmatmul.f32.gmra.mxu0 %v404
      %v520 = vpop.f32.mrf.mxu0
      %v521 = vadd.f32 %v370, %v520
      %522 = vmatmul.f32.gmra.mxu0 %v407
      %v523 = vpop.f32.mrf.mxu0
      %v524 = vadd.f32 %v370, %v523
      %525 = vmatmul.f32.gmra.mxu0 %v410
      %v526 = vpop.f32.mrf.mxu0
      %v527 = vadd.f32 %v370, %v526
      %528 = vmatmul.f32.gmra.mxu0 %v413
      %v529 = vpop.f32.mrf.mxu0
      %v530 = vadd.f32 %v370, %v529
      %531 = vmatmul.f32.gmra.mxu0 %v416
      %v532 = vpop.f32.mrf.mxu0
      %v533 = vadd.f32 %v370, %v532
      %534 = vmatmul.f32.gmra.mxu0 %v419
      %v535 = vpop.f32.mrf.mxu0
      %v536 = vadd.f32 %v370, %v535
      %537 = vmatmul.f32.gmra.mxu0 %v422
      %v538 = vpop.f32.mrf.mxu0
      %v539 = vadd.f32 %v370, %v538
      %540 = vmatmul.f32.gmra.mxu0 %v425
      %v541 = vpop.f32.mrf.mxu0
      %v542 = vadd.f32 %v370, %v541
      %543 = vmatmul.f32.gmra.mxu0 %v428
      %v544 = vpop.f32.mrf.mxu0
      %v545 = vadd.f32 %v370, %v544
      %546 = vmatmul.f32.gmra.mxu0 %v431
      %v547 = vpop.f32.mrf.mxu0
      %v548 = vadd.f32 %v370, %v547
      %549 = vmatmul.f32.gmra.mxu0 %v434
      %v550 = vpop.f32.mrf.mxu0
      %v551 = vadd.f32 %v370, %v550
      %552 = vmatmul.f32.gmra.mxu0 %v437
      %v553 = vpop.f32.mrf.mxu0
      %v554 = vadd.f32 %v370, %v553
      %555 = vmatmul.f32.gmra.mxu0 %v440
      %v556 = vpop.f32.mrf.mxu0
      %v557 = vadd.f32 %v370, %v556
      %558 = vmatmul.f32.gmra.mxu0 %v443
      %v559 = vpop.f32.mrf.mxu0
      %v560 = vadd.f32 %v370, %v559
      %561 = vmatmul.f32.gmra.mxu0 %v446
      %v562 = vpop.f32.mrf.mxu0
      %v563 = vadd.f32 %v370, %v562
      %564 = vmatmul.f32.gmra.mxu0 %v449
      %v565 = vpop.f32.mrf.mxu0
      %v566 = vadd.f32 %v370, %v565
      %567 = vmatmul.f32.gmra.mxu0 %v452
      %v568 = vpop.f32.mrf.mxu0
      %v569 = vadd.f32 %v370, %v568
      %570 = vmatmul.f32.gmra.mxu0 %v455
      %v571 = vpop.f32.mrf.mxu0
      %v572 = vadd.f32 %v370, %v571
      %573 = vmatmul.f32.gmra.mxu0 %v458
      %v574 = vpop.f32.mrf.mxu0
      %v575 = vadd.f32 %v370, %v574
      %576 = vmatmul.f32.gmra.mxu0 %v461
      %v577 = vpop.f32.mrf.mxu0
      %v578 = vadd.f32 %v370, %v577
      %579 = vmatmul.f32.gmra.mxu0 %v464
      %v580 = vpop.f32.mrf.mxu0
      %v581 = vadd.f32 %v370, %v580
      %582 = vmatmul.f32.gmra.mxu0 %v467
      %v583 = vpop.f32.mrf.mxu0
      %v584 = vadd.f32 %v370, %v583
      %585 = vdwg.mxu0
      %vm586 = vcmp.gt.f32.partialorder %v491, 0.0
      %vm587 = vcmp.gt.f32.partialorder %v494, 0.0
      %vm588 = vcmp.gt.f32.partialorder %v497, 0.0
      %vm589 = vcmp.gt.f32.partialorder %v500, 0.0
      %vm590 = vcmp.gt.f32.partialorder %v503, 0.0
      %vm591 = vcmp.gt.f32.partialorder %v506, 0.0
      %vm592 = vcmp.gt.f32.partialorder %v509, 0.0
      %vm593 = vcmp.gt.f32.partialorder %v512, 0.0
      %vm594 = vcmp.gt.f32.partialorder %v515, 0.0
      %vm595 = vcmp.gt.f32.partialorder %v518, 0.0
      %vm596 = vcmp.gt.f32.partialorder %v521, 0.0
      %vm597 = vcmp.gt.f32.partialorder %v524, 0.0
      %vm598 = vcmp.gt.f32.partialorder %v527, 0.0
      %vm599 = vcmp.gt.f32.partialorder %v530, 0.0
      %vm600 = vcmp.gt.f32.partialorder %v533, 0.0
      %vm601 = vcmp.gt.f32.partialorder %v536, 0.0
      %vm602 = vcmp.gt.f32.partialorder %v539, 0.0
      %vm603 = vcmp.gt.f32.partialorder %v542, 0.0
      %vm604 = vcmp.gt.f32.partialorder %v545, 0.0
      %vm605 = vcmp.gt.f32.partialorder %v548, 0.0
      %vm606 = vcmp.gt.f32.partialorder %v551, 0.0
      %vm607 = vcmp.gt.f32.partialorder %v554, 0.0
      %vm608 = vcmp.gt.f32.partialorder %v557, 0.0
      %vm609 = vcmp.gt.f32.partialorder %v560, 0.0
      %vm610 = vcmp.gt.f32.partialorder %v563, 0.0
      %vm611 = vcmp.gt.f32.partialorder %v566, 0.0
      %vm612 = vcmp.gt.f32.partialorder %v569, 0.0
      %vm613 = vcmp.gt.f32.partialorder %v572, 0.0
      %vm614 = vcmp.gt.f32.partialorder %v575, 0.0
      %vm615 = vcmp.gt.f32.partialorder %v578, 0.0
      %vm616 = vcmp.gt.f32.partialorder %v581, 0.0
      %vm617 = vcmp.gt.f32.partialorder %v584, 0.0
      %v618 = vmul.f32 %v491, 0.1
      %v619 = vmul.f32 %v494, 0.1
      %v620 = vmul.f32 %v497, 0.1
      %v621 = vmul.f32 %v500, 0.1
      %v622 = vmul.f32 %v503, 0.1
      %v623 = vmul.f32 %v506, 0.1
      %v624 = vmul.f32 %v509, 0.1
      %v625 = vmul.f32 %v512, 0.1
      %v626 = vmul.f32 %v515, 0.1
      %v627 = vmul.f32 %v518, 0.1
      %v628 = vmul.f32 %v521, 0.1
      %v629 = vmul.f32 %v524, 0.1
      %v630 = vmul.f32 %v527, 0.1
      %v631 = vmul.f32 %v530, 0.1
      %v632 = vmul.f32 %v533, 0.1
      %v633 = vmul.f32 %v536, 0.1
      %v634 = vmul.f32 %v539, 0.1
      %v635 = vmul.f32 %v542, 0.1
      %v636 = vmul.f32 %v545, 0.1
      %v637 = vmul.f32 %v548, 0.1
      %v638 = vmul.f32 %v551, 0.1
      %v639 = vmul.f32 %v554, 0.1
      %v640 = vmul.f32 %v557, 0.1
      %v641 = vmul.f32 %v560, 0.1
      %v642 = vmul.f32 %v563, 0.1
      %v643 = vmul.f32 %v566, 0.1
      %v644 = vmul.f32 %v569, 0.1
      %v645 = vmul.f32 %v572, 0.1
      %v646 = vmul.f32 %v575, 0.1
      %v647 = vmul.f32 %v578, 0.1
      %v648 = vmul.f32 %v581, 0.1
      %v649 = vmul.f32 %v584, 0.1
      %v650 = vsel %vm586, %v491, %v618
      %v651 = vsel %vm587, %v494, %v619
      %v652 = vsel %vm588, %v497, %v620
      %v653 = vsel %vm589, %v500, %v621
      %v654 = vsel %vm590, %v503, %v622
      %v655 = vsel %vm591, %v506, %v623
      %v656 = vsel %vm592, %v509, %v624
      %v657 = vsel %vm593, %v512, %v625
      %v658 = vsel %vm594, %v515, %v626
      %v659 = vsel %vm595, %v518, %v627
      %v660 = vsel %vm596, %v521, %v628
      %v661 = vsel %vm597, %v524, %v629
      %v662 = vsel %vm598, %v527, %v630
      %v663 = vsel %vm599, %v530, %v631
      %v664 = vsel %vm600, %v533, %v632
      %v665 = vsel %vm601, %v536, %v633
      %v666 = vsel %vm602, %v539, %v634
      %v667 = vsel %vm603, %v542, %v635
      %v668 = vsel %vm604, %v545, %v636
      %v669 = vsel %vm605, %v548, %v637
      %v670 = vsel %vm606, %v551, %v638
      %v671 = vsel %vm607, %v554, %v639
      %v672 = vsel %vm608, %v557, %v640
      %v673 = vsel %vm609, %v560, %v641
      %v674 = vsel %vm610, %v563, %v642
      %v675 = vsel %vm611, %v566, %v643
      %v676 = vsel %vm612, %v569, %v644
      %v677 = vsel %vm613, %v572, %v645
      %v678 = vsel %vm614, %v575, %v646
      %v679 = vsel %vm615, %v578, %v647
      %v680 = vsel %vm616, %v581, %v648
      %v681 = vsel %vm617, %v584, %v649
      %v682 = vld [vmem:[%s322] sm:$0xff]
      %v683 = vld [vmem:[%s322 + $0x8] sm:$0xff]
      %v684 = vld [vmem:[%s322 + $0x10] sm:$0xff]
      %v685 = vld [vmem:[%s322 + $0x18] sm:$0xff]
      %v687 = vsel %vm372, %v682, 0
      %v690 = vsel %vm372, %v683, 0
      %v693 = vsel %vm372, %v684, 0
      %v696 = vsel %vm372, %v685, 0
      %698 = vmatpush.msra.mxu0 0.0
      %699 = vmatpush.msra.mxu0 0.0
      %700 = vmatpush.msra.mxu0 0.0
      %701 = vmatpush.msra.mxu0 0.0
      %702 = vmatpush.msra.mxu0 0.0
      %703 = vmatpush.msra.mxu0 0.0
      %704 = vmatpush.msra.mxu0 0.0
      %705 = vmatpush.msra.mxu0 0.0
      %706 = vmatpush.msra.mxu0 0.0
      %707 = vmatpush.msra.mxu0 0.0
      %708 = vmatpush.msra.mxu0 0.0
      %709 = vmatpush.msra.mxu0 0.0
      %710 = vmatpush.msra.mxu0 0.0
      %711 = vmatpush.msra.mxu0 0.0
      %712 = vmatpush.msra.mxu0 0.0
      %713 = vmatpush.msra.mxu0 %v471
      %714 = vmatmul.f32.gmra.mxu0 %v687
      %v715 = vpop.f32.mrf.mxu0
      %v716 = vadd.f32 %v370, %v715
      %717 = vmatmul.f32.gmra.mxu0 %v690
      %v718 = vpop.f32.mrf.mxu0
      %v719 = vadd.f32 %v370, %v718
      %720 = vmatmul.f32.gmra.mxu0 %v693
      %v721 = vpop.f32.mrf.mxu0
      %v722 = vadd.f32 %v370, %v721
      %723 = vmatmul.f32.gmra.mxu0 %v696
      %v724 = vpop.f32.mrf.mxu0
      %v725 = vadd.f32 %v370, %v724
      %726 = vdwg.mxu0
      %vm727 = vcmp.gt.f32.partialorder %v716, 0.0
      %vm728 = vcmp.gt.f32.partialorder %v719, 0.0
      %vm729 = vcmp.gt.f32.partialorder %v722, 0.0
      %vm730 = vcmp.gt.f32.partialorder %v725, 0.0
      %v731 = vmul.f32 %v716, 0.1
      %v732 = vmul.f32 %v719, 0.1
      %v733 = vmul.f32 %v722, 0.1
      %v734 = vmul.f32 %v725, 0.1
      %v735 = vsel %vm727, %v716, %v731
      %v736 = vsel %vm728, %v719, %v732
      %v737 = vsel %vm729, %v722, %v733
      %v738 = vsel %vm730, %v725, %v734
      %p739 = scmp.gt.s32.totalorder %s22, 0
      %s740 = scalar_select %p739, 1.0, 0.0
      %p741 = scmp.lt.s32.totalorder %s22, 0
      %s742 = scalar_select %p741, 1.0, 0.0
      %v743 = vstv %s740
      %v744 = vmul.f32 %v735, %v743
      %v745 = vmul.f32 %v736, %v743
      %v746 = vstv %s742
      %v747 = vmul.f32 %v737, %v746
      %v748 = vmul.f32 %v738, %v746
      %v749 = vlaneseq
      %v750 = vshrl.u32 %v749, 7
      %v751 = vadd.s32 %v750, 8
      %vm752 = vcmp.ne.s32.totalorder %v750, 0
      %vm753 = vcmp.ne.s32.totalorder %v751, 0
      %v754 = vsel %vm752, 1, 0
      %v755 = vsel %vm753, 1, 0
      %v756 = vcvt.s32.f32 %v754
      %v757 = vcvt.s32.f32 %v755
      %vm758 = vcmp.ne.s32.totalorder %v750, 15
      %vm759 = vcmp.ne.s32.totalorder %v751, 15
      %v760 = vsel %vm758, 1, 0
      %v761 = vsel %vm759, 1, 0
      %v762 = vcvt.s32.f32 %v760
      %v763 = vcvt.s32.f32 %v761
      %v764 = vrot.slane %v650, 7
      %v765 = vrot.slane %v652, 7
      %v766 = vrot.slane %v654, 7
      %v767 = vrot.slane %v656, 7
      %v768 = vrot.slane %v658, 7
      %v769 = vrot.slane %v660, 7
      %v770 = vrot.slane %v662, 7
      %v771 = vrot.slane %v664, 7
      %v772 = vrot.slane %v666, 7
      %v773 = vrot.slane %v668, 7
      %v774 = vrot.slane %v670, 7
      %v775 = vrot.slane %v672, 7
      %v776 = vrot.slane %v674, 7
      %v777 = vrot.slane %v676, 7
      %v778 = vrot.slane %v678, 7
      %v779 = vrot.slane %v680, 7
      %v780 = vrot.slane %v651, 7
      %v781 = vrot.slane %v653, 7
      %v782 = vrot.slane %v655, 7
      %v783 = vrot.slane %v657, 7
      %v784 = vrot.slane %v659, 7
      %v785 = vrot.slane %v661, 7
      %v786 = vrot.slane %v663, 7
      %v787 = vrot.slane %v665, 7
      %v788 = vrot.slane %v667, 7
      %v789 = vrot.slane %v669, 7
      %v790 = vrot.slane %v671, 7
      %v791 = vrot.slane %v673, 7
      %v792 = vrot.slane %v675, 7
      %v793 = vrot.slane %v677, 7
      %v794 = vrot.slane %v679, 7
      %v795 = vrot.slane %v681, 7
      %vm796 = vcmp.lt.s32.totalorder %v750, 1
      %v797 = vsel %vm796, %v764, %v780
      %v798 = vsel %vm796, %v765, %v781
      %v799 = vsel %vm796, %v766, %v782
      %v800 = vsel %vm796, %v767, %v783
      %v801 = vsel %vm796, %v768, %v784
      %v802 = vsel %vm796, %v769, %v785
      %v803 = vsel %vm796, %v770, %v786
      %v804 = vsel %vm796, %v771, %v787
      %v805 = vsel %vm796, %v772, %v788
      %v806 = vsel %vm796, %v773, %v789
      %v807 = vsel %vm796, %v774, %v790
      %v808 = vsel %vm796, %v775, %v791
      %v809 = vsel %vm796, %v776, %v792
      %v810 = vsel %vm796, %v777, %v793
      %v811 = vsel %vm796, %v778, %v794
      %v812 = vsel %vm796, %v779, %v795
      %v813 = vsel %vm796, %v780, %v764
      %v814 = vsel %vm796, %v781, %v765
      %v815 = vsel %vm796, %v782, %v766
      %v816 = vsel %vm796, %v783, %v767
      %v817 = vsel %vm796, %v784, %v768
      %v818 = vsel %vm796, %v785, %v769
      %v819 = vsel %vm796, %v786, %v770
      %v820 = vsel %vm796, %v787, %v771
      %v821 = vsel %vm796, %v788, %v772
      %v822 = vsel %vm796, %v789, %v773
      %v823 = vsel %vm796, %v790, %v774
      %v824 = vsel %vm796, %v791, %v775
      %v825 = vsel %vm796, %v792, %v776
      %v826 = vsel %vm796, %v793, %v777
      %v827 = vsel %vm796, %v794, %v778
      %v828 = vsel %vm796, %v795, %v779
      %v829 = vrot.slane %v650, 1
      %v830 = vrot.slane %v652, 1
      %v831 = vrot.slane %v654, 1
      %v832 = vrot.slane %v656, 1
      %v833 = vrot.slane %v658, 1
      %v834 = vrot.slane %v660, 1
      %v835 = vrot.slane %v662, 1
      %v836 = vrot.slane %v664, 1
      %v837 = vrot.slane %v666, 1
      %v838 = vrot.slane %v668, 1
      %v839 = vrot.slane %v670, 1
      %v840 = vrot.slane %v672, 1
      %v841 = vrot.slane %v674, 1
      %v842 = vrot.slane %v676, 1
      %v843 = vrot.slane %v678, 1
      %v844 = vrot.slane %v680, 1
      %v845 = vrot.slane %v651, 1
      %v846 = vrot.slane %v653, 1
      %v847 = vrot.slane %v655, 1
      %v848 = vrot.slane %v657, 1
      %v849 = vrot.slane %v659, 1
      %v850 = vrot.slane %v661, 1
      %v851 = vrot.slane %v663, 1
      %v852 = vrot.slane %v665, 1
      %v853 = vrot.slane %v667, 1
      %v854 = vrot.slane %v669, 1
      %v855 = vrot.slane %v671, 1
      %v856 = vrot.slane %v673, 1
      %v857 = vrot.slane %v675, 1
      %v858 = vrot.slane %v677, 1
      %v859 = vrot.slane %v679, 1
      %v860 = vrot.slane %v681, 1
      %vm861 = vcmp.lt.s32.totalorder %v750, 7
      %v862 = vsel %vm861, %v829, %v845
      %v863 = vsel %vm861, %v830, %v846
      %v864 = vsel %vm861, %v831, %v847
      %v865 = vsel %vm861, %v832, %v848
      %v866 = vsel %vm861, %v833, %v849
      %v867 = vsel %vm861, %v834, %v850
      %v868 = vsel %vm861, %v835, %v851
      %v869 = vsel %vm861, %v836, %v852
      %v870 = vsel %vm861, %v837, %v853
      %v871 = vsel %vm861, %v838, %v854
      %v872 = vsel %vm861, %v839, %v855
      %v873 = vsel %vm861, %v840, %v856
      %v874 = vsel %vm861, %v841, %v857
      %v875 = vsel %vm861, %v842, %v858
      %v876 = vsel %vm861, %v843, %v859
      %v877 = vsel %vm861, %v844, %v860
      %v878 = vsel %vm861, %v845, %v829
      %v879 = vsel %vm861, %v846, %v830
      %v880 = vsel %vm861, %v847, %v831
      %v881 = vsel %vm861, %v848, %v832
      %v882 = vsel %vm861, %v849, %v833
      %v883 = vsel %vm861, %v850, %v834
      %v884 = vsel %vm861, %v851, %v835
      %v885 = vsel %vm861, %v852, %v836
      %v886 = vsel %vm861, %v853, %v837
      %v887 = vsel %vm861, %v854, %v838
      %v888 = vsel %vm861, %v855, %v839
      %v889 = vsel %vm861, %v856, %v840
      %v890 = vsel %vm861, %v857, %v841
      %v891 = vsel %vm861, %v858, %v842
      %v892 = vsel %vm861, %v859, %v843
      %v893 = vsel %vm861, %v860, %v844
      %v894 = vmul.f32 %v813, %v756
      %v895 = vmul.f32 %v797, %v757
      %v896 = vmul.f32 %v814, %v756
      %v897 = vmul.f32 %v798, %v757
      %v898 = vmul.f32 %v815, %v756
      %v899 = vmul.f32 %v799, %v757
      %v900 = vmul.f32 %v816, %v756
      %v901 = vmul.f32 %v800, %v757
      %v902 = vmul.f32 %v817, %v756
      %v903 = vmul.f32 %v801, %v757
      %v904 = vmul.f32 %v818, %v756
      %v905 = vmul.f32 %v802, %v757
      %v906 = vmul.f32 %v819, %v756
      %v907 = vmul.f32 %v803, %v757
      %v908 = vmul.f32 %v820, %v756
      %v909 = vmul.f32 %v804, %v757
      %v910 = vmul.f32 %v821, %v756
      %v911 = vmul.f32 %v805, %v757
      %v912 = vmul.f32 %v822, %v756
      %v913 = vmul.f32 %v806, %v757
      %v914 = vmul.f32 %v823, %v756
      %v915 = vmul.f32 %v807, %v757
      %v916 = vmul.f32 %v824, %v756
      %v917 = vmul.f32 %v808, %v757
      %v918 = vmul.f32 %v825, %v756
      %v919 = vmul.f32 %v809, %v757
      %v920 = vmul.f32 %v826, %v756
      %v921 = vmul.f32 %v810, %v757
      %v922 = vmul.f32 %v827, %v756
      %v923 = vmul.f32 %v811, %v757
      %v924 = vmul.f32 %v828, %v756
      %v925 = vmul.f32 %v812, %v757
      %v926 = vmul.f32 %v862, %v762
      %v927 = vmul.f32 %v878, %v763
      %v928 = vmul.f32 %v863, %v762
      %v929 = vmul.f32 %v879, %v763
      %v930 = vmul.f32 %v864, %v762
      %v931 = vmul.f32 %v880, %v763
      %v932 = vmul.f32 %v865, %v762
      %v933 = vmul.f32 %v881, %v763
      %v934 = vmul.f32 %v866, %v762
      %v935 = vmul.f32 %v882, %v763
      %v936 = vmul.f32 %v867, %v762
      %v937 = vmul.f32 %v883, %v763
      %v938 = vmul.f32 %v868, %v762
      %v939 = vmul.f32 %v884, %v763
      %v940 = vmul.f32 %v869, %v762
      %v941 = vmul.f32 %v885, %v763
      %v942 = vmul.f32 %v870, %v762
      %v943 = vmul.f32 %v886, %v763
      %v944 = vmul.f32 %v871, %v762
      %v945 = vmul.f32 %v887, %v763
      %v946 = vmul.f32 %v872, %v762
      %v947 = vmul.f32 %v888, %v763
      %v948 = vmul.f32 %v873, %v762
      %v949 = vmul.f32 %v889, %v763
      %v950 = vmul.f32 %v874, %v762
      %v951 = vmul.f32 %v890, %v763
      %v952 = vmul.f32 %v875, %v762
      %v953 = vmul.f32 %v891, %v763
      %v954 = vmul.f32 %v876, %v762
      %v955 = vmul.f32 %v892, %v763
      %v956 = vmul.f32 %v877, %v762
      %v957 = vmul.f32 %v893, %v763
      %990 = vrot.lane.b32.xlu0 %v650, 2
      %v991 = vpop.permute.xlu0 %990
      %992 = vrot.lane.b32.xlu0 %v651, 2
      %v993 = vpop.permute.xlu0 %992
      %994 = vrot.lane.b32.xlu0 %v652, 2
      %v995 = vpop.permute.xlu0 %994
      %996 = vrot.lane.b32.xlu0 %v653, 2
      %v997 = vpop.permute.xlu0 %996
      %998 = vrot.lane.b32.xlu0 %v654, 2
      %v999 = vpop.permute.xlu0 %998
      %1000 = vrot.lane.b32.xlu0 %v655, 2
      %v1001 = vpop.permute.xlu0 %1000
      %1002 = vrot.lane.b32.xlu0 %v656, 2
      %v1003 = vpop.permute.xlu0 %1002
      %1004 = vrot.lane.b32.xlu0 %v657, 2
      %v1005 = vpop.permute.xlu0 %1004
      %1006 = vrot.lane.b32.xlu0 %v658, 2
      %v1007 = vpop.permute.xlu0 %1006
      %1008 = vrot.lane.b32.xlu0 %v659, 2
      %v1009 = vpop.permute.xlu0 %1008
      %1010 = vrot.lane.b32.xlu0 %v660, 2
      %v1011 = vpop.permute.xlu0 %1010
      %1012 = vrot.lane.b32.xlu0 %v661, 2
      %v1013 = vpop.permute.xlu0 %1012
      %1014 = vrot.lane.b32.xlu0 %v662, 2
      %v1015 = vpop.permute.xlu0 %1014
      %1016 = vrot.lane.b32.xlu0 %v663, 2
      %v1017 = vpop.permute.xlu0 %1016
      %1018 = vrot.lane.b32.xlu0 %v664, 2
      %v1019 = vpop.permute.xlu0 %1018
      %1020 = vrot.lane.b32.xlu0 %v665, 2
      %v1021 = vpop.permute.xlu0 %1020
      %1022 = vrot.lane.b32.xlu0 %v666, 2
      %v1023 = vpop.permute.xlu0 %1022
      %1024 = vrot.lane.b32.xlu0 %v667, 2
      %v1025 = vpop.permute.xlu0 %1024
      %1026 = vrot.lane.b32.xlu0 %v668, 2
      %v1027 = vpop.permute.xlu0 %1026
      %1028 = vrot.lane.b32.xlu0 %v669, 2
      %v1029 = vpop.permute.xlu0 %1028
      %1030 = vrot.lane.b32.xlu0 %v670, 2
      %v1031 = vpop.permute.xlu0 %1030
      %1032 = vrot.lane.b32.xlu0 %v671, 2
      %v1033 = vpop.permute.xlu0 %1032
      %1034 = vrot.lane.b32.xlu0 %v672, 2
      %v1035 = vpop.permute.xlu0 %1034
      %1036 = vrot.lane.b32.xlu0 %v673, 2
      %v1037 = vpop.permute.xlu0 %1036
      %1038 = vrot.lane.b32.xlu0 %v674, 2
      %v1039 = vpop.permute.xlu0 %1038
      %1040 = vrot.lane.b32.xlu0 %v675, 2
      %v1041 = vpop.permute.xlu0 %1040
      %1042 = vrot.lane.b32.xlu0 %v676, 2
      %v1043 = vpop.permute.xlu0 %1042
      %1044 = vrot.lane.b32.xlu0 %v677, 2
      %v1045 = vpop.permute.xlu0 %1044
      %1046 = vrot.lane.b32.xlu0 %v678, 2
      %v1047 = vpop.permute.xlu0 %1046
      %1048 = vrot.lane.b32.xlu0 %v679, 2
      %v1049 = vpop.permute.xlu0 %1048
      %1050 = vrot.lane.b32.xlu0 %v680, 2
      %v1051 = vpop.permute.xlu0 %1050
      %1052 = vrot.lane.b32.xlu0 %v681, 2
      %v1053 = vpop.permute.xlu0 %1052
      %1118 = vrot.lane.b32.xlu0 %v926, 4
      %v1119 = vpop.permute.xlu0 %1118
      %1120 = vrot.lane.b32.xlu0 %v927, 4
      %v1121 = vpop.permute.xlu0 %1120
      %1122 = vrot.lane.b32.xlu0 %v928, 4
      %v1123 = vpop.permute.xlu0 %1122
      %1124 = vrot.lane.b32.xlu0 %v929, 4
      %v1125 = vpop.permute.xlu0 %1124
      %1126 = vrot.lane.b32.xlu0 %v930, 4
      %v1127 = vpop.permute.xlu0 %1126
      %1128 = vrot.lane.b32.xlu0 %v931, 4
      %v1129 = vpop.permute.xlu0 %1128
      %1130 = vrot.lane.b32.xlu0 %v932, 4
      %v1131 = vpop.permute.xlu0 %1130
      %1132 = vrot.lane.b32.xlu0 %v933, 4
      %v1133 = vpop.permute.xlu0 %1132
      %1134 = vrot.lane.b32.xlu0 %v934, 4
      %v1135 = vpop.permute.xlu0 %1134
      %1136 = vrot.lane.b32.xlu0 %v935, 4
      %v1137 = vpop.permute.xlu0 %1136
      %1138 = vrot.lane.b32.xlu0 %v936, 4
      %v1139 = vpop.permute.xlu0 %1138
      %1140 = vrot.lane.b32.xlu0 %v937, 4
      %v1141 = vpop.permute.xlu0 %1140
      %1142 = vrot.lane.b32.xlu0 %v938, 4
      %v1143 = vpop.permute.xlu0 %1142
      %1144 = vrot.lane.b32.xlu0 %v939, 4
      %v1145 = vpop.permute.xlu0 %1144
      %1146 = vrot.lane.b32.xlu0 %v940, 4
      %v1147 = vpop.permute.xlu0 %1146
      %1148 = vrot.lane.b32.xlu0 %v941, 4
      %v1149 = vpop.permute.xlu0 %1148
      %1150 = vrot.lane.b32.xlu0 %v942, 4
      %v1151 = vpop.permute.xlu0 %1150
      %1152 = vrot.lane.b32.xlu0 %v943, 4
      %v1153 = vpop.permute.xlu0 %1152
      %1154 = vrot.lane.b32.xlu0 %v944, 4
      %v1155 = vpop.permute.xlu0 %1154
      %1156 = vrot.lane.b32.xlu0 %v945, 4
      %v1157 = vpop.permute.xlu0 %1156
      %1158 = vrot.lane.b32.xlu0 %v946, 4
      %v1159 = vpop.permute.xlu0 %1158
      %1160 = vrot.lane.b32.xlu0 %v947, 4
      %v1161 = vpop.permute.xlu0 %1160
      %1162 = vrot.lane.b32.xlu0 %v948, 4
      %v1163 = vpop.permute.xlu0 %1162
      %1164 = vrot.lane.b32.xlu0 %v949, 4
      %v1165 = vpop.permute.xlu0 %1164
      %1166 = vrot.lane.b32.xlu0 %v950, 4
      %v1167 = vpop.permute.xlu0 %1166
      %1168 = vrot.lane.b32.xlu0 %v951, 4
      %v1169 = vpop.permute.xlu0 %1168
      %1170 = vrot.lane.b32.xlu0 %v952, 4
      %v1171 = vpop.permute.xlu0 %1170
      %1172 = vrot.lane.b32.xlu0 %v953, 4
      %v1173 = vpop.permute.xlu0 %1172
      %1174 = vrot.lane.b32.xlu0 %v954, 4
      %v1175 = vpop.permute.xlu0 %1174
      %1176 = vrot.lane.b32.xlu0 %v955, 4
      %v1177 = vpop.permute.xlu0 %1176
      %1178 = vrot.lane.b32.xlu0 %v956, 4
      %v1179 = vpop.permute.xlu0 %1178
      %1180 = vrot.lane.b32.xlu0 %v957, 4
      %v1181 = vpop.permute.xlu0 %1180
      %vm1214 = vcmask 15360
      %v1215 = vsel %vm1214, %v894, %v991
      %v1216 = vsel %vm1214, %v895, %v993
      %v1217 = vsel %vm1214, %v896, %v995
      %v1218 = vsel %vm1214, %v897, %v997
      %v1219 = vsel %vm1214, %v898, %v999
      %v1220 = vsel %vm1214, %v899, %v1001
      %v1221 = vsel %vm1214, %v900, %v1003
      %v1222 = vsel %vm1214, %v901, %v1005
      %v1223 = vsel %vm1214, %v902, %v1007
      %v1224 = vsel %vm1214, %v903, %v1009
      %v1225 = vsel %vm1214, %v904, %v1011
      %v1226 = vsel %vm1214, %v905, %v1013
      %v1227 = vsel %vm1214, %v906, %v1015
      %v1228 = vsel %vm1214, %v907, %v1017
      %v1229 = vsel %vm1214, %v908, %v1019
      %v1230 = vsel %vm1214, %v909, %v1021
      %v1231 = vsel %vm1214, %v910, %v1023
      %v1232 = vsel %vm1214, %v911, %v1025
      %v1233 = vsel %vm1214, %v912, %v1027
      %v1234 = vsel %vm1214, %v913, %v1029
      %v1235 = vsel %vm1214, %v914, %v1031
      %v1236 = vsel %vm1214, %v915, %v1033
      %v1237 = vsel %vm1214, %v916, %v1035
      %v1238 = vsel %vm1214, %v917, %v1037
      %v1239 = vsel %vm1214, %v918, %v1039
      %v1240 = vsel %vm1214, %v919, %v1041
      %v1241 = vsel %vm1214, %v920, %v1043
      %v1242 = vsel %vm1214, %v921, %v1045
      %v1243 = vsel %vm1214, %v922, %v1047
      %v1244 = vsel %vm1214, %v923, %v1049
      %v1245 = vsel %vm1214, %v924, %v1051
      %v1246 = vsel %vm1214, %v925, %v1053
      %v1247 = vsel %vm372, %v1215, %v1119
      %v1248 = vsel %vm372, %v1216, %v1121
      %v1249 = vsel %vm372, %v1217, %v1123
      %v1250 = vsel %vm372, %v1218, %v1125
      %v1251 = vsel %vm372, %v1219, %v1127
      %v1252 = vsel %vm372, %v1220, %v1129
      %v1253 = vsel %vm372, %v1221, %v1131
      %v1254 = vsel %vm372, %v1222, %v1133
      %v1255 = vsel %vm372, %v1223, %v1135
      %v1256 = vsel %vm372, %v1224, %v1137
      %v1257 = vsel %vm372, %v1225, %v1139
      %v1258 = vsel %vm372, %v1226, %v1141
      %v1259 = vsel %vm372, %v1227, %v1143
      %v1260 = vsel %vm372, %v1228, %v1145
      %v1261 = vsel %vm372, %v1229, %v1147
      %v1262 = vsel %vm372, %v1230, %v1149
      %v1263 = vsel %vm372, %v1231, %v1151
      %v1264 = vsel %vm372, %v1232, %v1153
      %v1265 = vsel %vm372, %v1233, %v1155
      %v1266 = vsel %vm372, %v1234, %v1157
      %v1267 = vsel %vm372, %v1235, %v1159
      %v1268 = vsel %vm372, %v1236, %v1161
      %v1269 = vsel %vm372, %v1237, %v1163
      %v1270 = vsel %vm372, %v1238, %v1165
      %v1271 = vsel %vm372, %v1239, %v1167
      %v1272 = vsel %vm372, %v1240, %v1169
      %v1273 = vsel %vm372, %v1241, %v1171
      %v1274 = vsel %vm372, %v1242, %v1173
      %v1275 = vsel %vm372, %v1243, %v1175
      %v1276 = vsel %vm372, %v1244, %v1177
      %v1277 = vsel %vm372, %v1245, %v1179
      %v1278 = vsel %vm372, %v1246, %v1181
      %s1279 = scalar_lea.vmem [#allocation2], 16
      %vm1280 = vcmask 48128
      %1281 = vst.msk [vmem:[%s1279] sm:$0xff] %vm1280, %v1247
      %1282 = vst.msk [vmem:[%s1279 + $0x8] sm:$0xff] %vm1280, %v1248
      %1283 = vst.msk [vmem:[%s1279 + $0x10] sm:$0xff] %vm1280, %v1249
      %1284 = vst.msk [vmem:[%s1279 + $0x18] sm:$0xff] %vm1280, %v1250
      %1285 = vst.msk [vmem:[%s1279 + $0x20] sm:$0xff] %vm1280, %v1251
      %1286 = vst.msk [vmem:[%s1279 + $0x28] sm:$0xff] %vm1280, %v1252
      %1287 = vst.msk [vmem:[%s1279 + $0x30] sm:$0xff] %vm1280, %v1253
      %1288 = vst.msk [vmem:[%s1279 + $0x38] sm:$0xff] %vm1280, %v1254
      %1289 = vst.msk [vmem:[%s1279 + $0x40] sm:$0xff] %vm1280, %v1255
      %1290 = vst.msk [vmem:[%s1279 + $0x48] sm:$0xff] %vm1280, %v1256
      %1291 = vst.msk [vmem:[%s1279 + $0x50] sm:$0xff] %vm1280, %v1257
      %1292 = vst.msk [vmem:[%s1279 + $0x58] sm:$0xff] %vm1280, %v1258
      %1293 = vst.msk [vmem:[%s1279 + $0x60] sm:$0xff] %vm1280, %v1259
      %1294 = vst.msk [vmem:[%s1279 + $0x68] sm:$0xff] %vm1280, %v1260
      %1295 = vst.msk [vmem:[%s1279 + $0x70] sm:$0xff] %vm1280, %v1261
      %1296 = vst.msk [vmem:[%s1279 + $0x78] sm:$0xff] %vm1280, %v1262
      %1297 = vst.msk [vmem:[%s1279 + $0x80] sm:$0xff] %vm1280, %v1263
      %1298 = vst.msk [vmem:[%s1279 + $0x88] sm:$0xff] %vm1280, %v1264
      %1299 = vst.msk [vmem:[%s1279 + $0x90] sm:$0xff] %vm1280, %v1265
      %1300 = vst.msk [vmem:[%s1279 + $0x98] sm:$0xff] %vm1280, %v1266
      %1301 = vst.msk [vmem:[%s1279 + $0xa0] sm:$0xff] %vm1280, %v1267
      %1302 = vst.msk [vmem:[%s1279 + $0xa8] sm:$0xff] %vm1280, %v1268
      %1303 = vst.msk [vmem:[%s1279 + $0xb0] sm:$0xff] %vm1280, %v1269
      %1304 = vst.msk [vmem:[%s1279 + $0xb8] sm:$0xff] %vm1280, %v1270
      %1305 = vst.msk [vmem:[%s1279 + $0xc0] sm:$0xff] %vm1280, %v1271
      %1306 = vst.msk [vmem:[%s1279 + $0xc8] sm:$0xff] %vm1280, %v1272
      %1307 = vst.msk [vmem:[%s1279 + $0xd0] sm:$0xff] %vm1280, %v1273
      %1308 = vst.msk [vmem:[%s1279 + $0xd8] sm:$0xff] %vm1280, %v1274
      %1309 = vst.msk [vmem:[%s1279 + $0xe0] sm:$0xff] %vm1280, %v1275
      %1310 = vst.msk [vmem:[%s1279 + $0xe8] sm:$0xff] %vm1280, %v1276
      %1311 = vst.msk [vmem:[%s1279 + $0xf0] sm:$0xff] %vm1280, %v1277
      %1312 = vst.msk [vmem:[%s1279 + $0xf8] sm:$0xff] %vm1280, %v1278
      %v1313 = vrot.slane %v744, 7
      %v1314 = vrot.slane %v745, 7
      %v1315 = vsel %vm796, %v1313, %v1314
      %v1316 = vsel %vm796, %v1314, %v1313
      %v1317 = vrot.slane %v744, 1
      %v1318 = vrot.slane %v745, 1
      %v1319 = vsel %vm861, %v1317, %v1318
      %v1320 = vsel %vm861, %v1318, %v1317
      %v1321 = vmul.f32 %v1316, %v756
      %v1322 = vmul.f32 %v1315, %v757
      %v1323 = vmul.f32 %v1319, %v762
      %v1324 = vmul.f32 %v1320, %v763
      %1327 = vrot.lane.b32.xlu0 %v744, 2
      %v1328 = vpop.permute.xlu0 %1327
      %1329 = vrot.lane.b32.xlu0 %v745, 2
      %v1330 = vpop.permute.xlu0 %1329
      %1335 = vrot.lane.b32.xlu0 %v1323, 4
      %v1336 = vpop.permute.xlu0 %1335
      %1337 = vrot.lane.b32.xlu0 %v1324, 4
      %v1338 = vpop.permute.xlu0 %1337
      %v1341 = vsel %vm1214, %v1321, %v1328
      %v1342 = vsel %vm1214, %v1322, %v1330
      %v1343 = vsel %vm372, %v1341, %v1336
      %v1344 = vsel %vm372, %v1342, %v1338
      %1345 = vst.msk [vmem:[#allocation2] sm:$0xff] %vm1280, %v1343
      %1346 = vst.msk [vmem:[#allocation2 + $0x8] sm:$0xff] %vm1280, %v1344
      %v1347 = vrot.slane %v747, 7
      %v1348 = vrot.slane %v748, 7
      %v1349 = vsel %vm796, %v1347, %v1348
      %v1350 = vsel %vm796, %v1348, %v1347
      %v1351 = vrot.slane %v747, 1
      %v1352 = vrot.slane %v748, 1
      %v1353 = vsel %vm861, %v1351, %v1352
      %v1354 = vsel %vm861, %v1352, %v1351
      %v1355 = vmul.f32 %v1350, %v756
      %v1356 = vmul.f32 %v1349, %v757
      %v1357 = vmul.f32 %v1353, %v762
      %v1358 = vmul.f32 %v1354, %v763
      %1361 = vrot.lane.b32.xlu0 %v747, 2
      %v1362 = vpop.permute.xlu0 %1361
      %1363 = vrot.lane.b32.xlu0 %v748, 2
      %v1364 = vpop.permute.xlu0 %1363
      %1369 = vrot.lane.b32.xlu0 %v1357, 4
      %v1370 = vpop.permute.xlu0 %1369
      %1371 = vrot.lane.b32.xlu0 %v1358, 4
      %v1372 = vpop.permute.xlu0 %1371
      %v1375 = vsel %vm1214, %v1355, %v1362
      %v1376 = vsel %vm1214, %v1356, %v1364
      %v1377 = vsel %vm372, %v1375, %v1370
      %v1378 = vsel %vm372, %v1376, %v1372
      %s1379 = scalar_lea.vmem [#allocation2], 272
      %1380 = vst.msk [vmem:[%s1379] sm:$0xff] %vm1280, %v1377
      %1381 = vst.msk [vmem:[%s1379 + $0x8] sm:$0xff] %vm1280, %v1378
      %v1382 = vld [vmem:[#allocation2] sm:$0xff]
      %v1383 = vld [vmem:[#allocation2 + $0x8] sm:$0xff]
      %v1384 = vld [vmem:[#allocation2 + $0x10] sm:$0xff]
      %v1385 = vld [vmem:[#allocation2 + $0x18] sm:$0xff]
      %v1386 = vld [vmem:[#allocation2 + $0x20] sm:$0xff]
      %v1387 = vld [vmem:[#allocation2 + $0x28] sm:$0xff]
      %v1388 = vld [vmem:[#allocation2 + $0x30] sm:$0xff]
      %v1389 = vld [vmem:[#allocation2 + $0x38] sm:$0xff]
      %v1390 = vld [vmem:[#allocation2 + $0x40] sm:$0xff]
      %v1391 = vld [vmem:[#allocation2 + $0x48] sm:$0xff]
      %v1392 = vld [vmem:[#allocation2 + $0x50] sm:$0xff]
      %v1393 = vld [vmem:[#allocation2 + $0x58] sm:$0xff]
      %v1394 = vld [vmem:[#allocation2 + $0x60] sm:$0xff]
      %v1395 = vld [vmem:[#allocation2 + $0x68] sm:$0xff]
      %v1396 = vld [vmem:[#allocation2 + $0x70] sm:$0xff]
      %v1397 = vld [vmem:[#allocation2 + $0x78] sm:$0xff]
      %v1398 = vld [vmem:[#allocation2 + $0x80] sm:$0xff]
      %v1399 = vld [vmem:[#allocation2 + $0x88] sm:$0xff]
      %v1400 = vld [vmem:[#allocation2 + $0x90] sm:$0xff]
      %v1401 = vld [vmem:[#allocation2 + $0x98] sm:$0xff]
      %v1402 = vld [vmem:[#allocation2 + $0xa0] sm:$0xff]
      %v1403 = vld [vmem:[#allocation2 + $0xa8] sm:$0xff]
      %v1404 = vld [vmem:[#allocation2 + $0xb0] sm:$0xff]
      %v1405 = vld [vmem:[#allocation2 + $0xb8] sm:$0xff]
      %v1406 = vld [vmem:[#allocation2 + $0xc0] sm:$0xff]
      %v1407 = vld [vmem:[#allocation2 + $0xc8] sm:$0xff]
      %v1408 = vld [vmem:[#allocation2 + $0xd0] sm:$0xff]
      %v1409 = vld [vmem:[#allocation2 + $0xd8] sm:$0xff]
      %v1410 = vld [vmem:[#allocation2 + $0xe0] sm:$0xff]
      %v1411 = vld [vmem:[#allocation2 + $0xe8] sm:$0xff]
      %v1412 = vld [vmem:[#allocation2 + $0xf0] sm:$0xff]
      %v1413 = vld [vmem:[#allocation2 + $0xf8] sm:$0xff]
      %v1414 = vld [vmem:[%s4] sm:$0x3f]
      %v1415 = vld [vmem:[%s1279] sm:$0xff]
      %v1416 = vld [vmem:[%s1279 + $0x8] sm:$0xff]
      %v1417 = vld [vmem:[%s1279 + $0x10] sm:$0xff]
      %v1418 = vld [vmem:[%s1279 + $0x18] sm:$0xff]
      %v1419 = vld [vmem:[%s1279 + $0x20] sm:$0xff]
      %v1420 = vld [vmem:[%s1279 + $0x28] sm:$0xff]
      %v1421 = vld [vmem:[%s1279 + $0x30] sm:$0xff]
      %v1422 = vld [vmem:[%s1279 + $0x38] sm:$0xff]
      %v1423 = vld [vmem:[%s1279 + $0x40] sm:$0xff]
      %v1424 = vld [vmem:[%s1279 + $0x48] sm:$0xff]
      %v1425 = vld [vmem:[%s1279 + $0x50] sm:$0xff]
      %v1426 = vld [vmem:[%s1279 + $0x58] sm:$0xff]
      %v1427 = vld [vmem:[%s1279 + $0x60] sm:$0xff]
      %v1428 = vld [vmem:[%s1279 + $0x68] sm:$0xff]
      %v1429 = vld [vmem:[%s1279 + $0x70] sm:$0xff]
      %v1430 = vld [vmem:[%s1279 + $0x78] sm:$0xff]
      %v1431 = vld [vmem:[%s1279 + $0x80] sm:$0xff]
      %v1432 = vld [vmem:[%s1279 + $0x88] sm:$0xff]
      %v1433 = vld [vmem:[%s1279 + $0x90] sm:$0xff]
      %v1434 = vld [vmem:[%s1279 + $0x98] sm:$0xff]
      %v1435 = vld [vmem:[%s1279 + $0xa0] sm:$0xff]
      %v1436 = vld [vmem:[%s1279 + $0xa8] sm:$0xff]
      %v1437 = vld [vmem:[%s1279 + $0xb0] sm:$0xff]
      %v1438 = vld [vmem:[%s1279 + $0xb8] sm:$0xff]
      %v1439 = vld [vmem:[%s1279 + $0xc0] sm:$0xff]
      %v1440 = vld [vmem:[%s1279 + $0xc8] sm:$0xff]
      %v1441 = vld [vmem:[%s1279 + $0xd0] sm:$0xff]
      %v1442 = vld [vmem:[%s1279 + $0xd8] sm:$0xff]
      %v1443 = vld [vmem:[%s1279 + $0xe0] sm:$0xff]
      %v1444 = vld [vmem:[%s1279 + $0xe8] sm:$0xff]
      %v1445 = vld [vmem:[%s1279 + $0xf0] sm:$0xff]
      %v1446 = vld [vmem:[%s1279 + $0xf8] sm:$0xff]
      %s1447 = scalar_lea.vmem %s4, 8
      %v1448 = vld [vmem:[%s1447] sm:$0x3f]
      %v1450 = vsel %vm1280, %v1415, 0
      %v1453 = vsel %vm1280, %v1416, 0
      %v1456 = vsel %vm1280, %v1417, 0
      %v1459 = vsel %vm1280, %v1418, 0
      %v1462 = vsel %vm1280, %v1419, 0
      %v1465 = vsel %vm1280, %v1420, 0
      %v1468 = vsel %vm1280, %v1421, 0
      %v1471 = vsel %vm1280, %v1422, 0
      %v1474 = vsel %vm1280, %v1423, 0
      %v1477 = vsel %vm1280, %v1424, 0
      %v1480 = vsel %vm1280, %v1425, 0
      %v1483 = vsel %vm1280, %v1426, 0
      %v1486 = vsel %vm1280, %v1427, 0
      %v1489 = vsel %vm1280, %v1428, 0
      %v1492 = vsel %vm1280, %v1429, 0
      %v1495 = vsel %vm1280, %v1430, 0
      %v1498 = vsel %vm1280, %v1431, 0
      %v1501 = vsel %vm1280, %v1432, 0
      %v1504 = vsel %vm1280, %v1433, 0
      %v1507 = vsel %vm1280, %v1434, 0
      %v1510 = vsel %vm1280, %v1435, 0
      %v1513 = vsel %vm1280, %v1436, 0
      %v1516 = vsel %vm1280, %v1437, 0
      %v1519 = vsel %vm1280, %v1438, 0
      %v1522 = vsel %vm1280, %v1439, 0
      %v1525 = vsel %vm1280, %v1440, 0
      %v1528 = vsel %vm1280, %v1441, 0
      %v1531 = vsel %vm1280, %v1442, 0
      %v1534 = vsel %vm1280, %v1443, 0
      %v1537 = vsel %vm1280, %v1444, 0
      %v1540 = vsel %vm1280, %v1445, 0
      %v1543 = vsel %vm1280, %v1446, 0
      %vm1545 = vcmask 1045504
      %v1547 = vsel %vm1545, %v1448, 0
      %1549 = vmatpush.msra.mxu0 0.0
      %1550 = vmatpush.msra.mxu0 0.0
      %1551 = vmatpush.msra.mxu0 0.0
      %1552 = vmatpush.msra.mxu0 0.0
      %1553 = vmatpush.msra.mxu0 0.0
      %1554 = vmatpush.msra.mxu0 0.0
      %1555 = vmatpush.msra.mxu0 0.0
      %1556 = vmatpush.msra.mxu0 0.0
      %1557 = vmatpush.msra.mxu0 0.0
      %1558 = vmatpush.msra.mxu0 0.0
      %1559 = vmatpush.msra.mxu0 0.0
      %1560 = vmatpush.msra.mxu0 0.0
      %1561 = vmatpush.msra.mxu0 0.0
      %1562 = vmatpush.msra.mxu0 0.0
      %1563 = vmatpush.msra.mxu0 0.0
      %1564 = vmatpush.msra.mxu0 %v1547
      %1565 = vmatmul.f32.gmra.mxu0 %v1450
      %v1566 = vpop.f32.mrf.mxu0
      %v1567 = vadd.f32 0.0, %v1566
      %1568 = vmatmul.f32.gmra.mxu0 %v1453
      %v1569 = vpop.f32.mrf.mxu0
      %v1570 = vadd.f32 0.0, %v1569
      %1571 = vmatmul.f32.gmra.mxu0 %v1456
      %v1572 = vpop.f32.mrf.mxu0
      %v1573 = vadd.f32 0.0, %v1572
      %1574 = vmatmul.f32.gmra.mxu0 %v1459
      %v1575 = vpop.f32.mrf.mxu0
      %v1576 = vadd.f32 0.0, %v1575
      %1577 = vmatmul.f32.gmra.mxu0 %v1462
      %v1578 = vpop.f32.mrf.mxu0
      %v1579 = vadd.f32 0.0, %v1578
      %1580 = vmatmul.f32.gmra.mxu0 %v1465
      %v1581 = vpop.f32.mrf.mxu0
      %v1582 = vadd.f32 0.0, %v1581
      %1583 = vmatmul.f32.gmra.mxu0 %v1468
      %v1584 = vpop.f32.mrf.mxu0
      %v1585 = vadd.f32 0.0, %v1584
      %1586 = vmatmul.f32.gmra.mxu0 %v1471
      %v1587 = vpop.f32.mrf.mxu0
      %v1588 = vadd.f32 0.0, %v1587
      %1589 = vmatmul.f32.gmra.mxu0 %v1474
      %v1590 = vpop.f32.mrf.mxu0
      %v1591 = vadd.f32 0.0, %v1590
      %1592 = vmatmul.f32.gmra.mxu0 %v1477
      %v1593 = vpop.f32.mrf.mxu0
      %v1594 = vadd.f32 0.0, %v1593
      %1595 = vmatmul.f32.gmra.mxu0 %v1480
      %v1596 = vpop.f32.mrf.mxu0
      %v1597 = vadd.f32 0.0, %v1596
      %1598 = vmatmul.f32.gmra.mxu0 %v1483
      %v1599 = vpop.f32.mrf.mxu0
      %v1600 = vadd.f32 0.0, %v1599
      %1601 = vmatmul.f32.gmra.mxu0 %v1486
      %v1602 = vpop.f32.mrf.mxu0
      %v1603 = vadd.f32 0.0, %v1602
      %1604 = vmatmul.f32.gmra.mxu0 %v1489
      %v1605 = vpop.f32.mrf.mxu0
      %v1606 = vadd.f32 0.0, %v1605
      %1607 = vmatmul.f32.gmra.mxu0 %v1492
      %v1608 = vpop.f32.mrf.mxu0
      %v1609 = vadd.f32 0.0, %v1608
      %1610 = vmatmul.f32.gmra.mxu0 %v1495
      %v1611 = vpop.f32.mrf.mxu0
      %v1612 = vadd.f32 0.0, %v1611
      %1613 = vmatmul.f32.gmra.mxu0 %v1498
      %v1614 = vpop.f32.mrf.mxu0
      %v1615 = vadd.f32 0.0, %v1614
      %1616 = vmatmul.f32.gmra.mxu0 %v1501
      %v1617 = vpop.f32.mrf.mxu0
      %v1618 = vadd.f32 0.0, %v1617
      %1619 = vmatmul.f32.gmra.mxu0 %v1504
      %v1620 = vpop.f32.mrf.mxu0
      %v1621 = vadd.f32 0.0, %v1620
      %1622 = vmatmul.f32.gmra.mxu0 %v1507
      %v1623 = vpop.f32.mrf.mxu0
      %v1624 = vadd.f32 0.0, %v1623
      %1625 = vmatmul.f32.gmra.mxu0 %v1510
      %v1626 = vpop.f32.mrf.mxu0
      %v1627 = vadd.f32 0.0, %v1626
      %1628 = vmatmul.f32.gmra.mxu0 %v1513
      %v1629 = vpop.f32.mrf.mxu0
      %v1630 = vadd.f32 0.0, %v1629
      %1631 = vmatmul.f32.gmra.mxu0 %v1516
      %v1632 = vpop.f32.mrf.mxu0
      %v1633 = vadd.f32 0.0, %v1632
      %1634 = vmatmul.f32.gmra.mxu0 %v1519
      %v1635 = vpop.f32.mrf.mxu0
      %v1636 = vadd.f32 0.0, %v1635
      %1637 = vmatmul.f32.gmra.mxu0 %v1522
      %v1638 = vpop.f32.mrf.mxu0
      %v1639 = vadd.f32 0.0, %v1638
      %1640 = vmatmul.f32.gmra.mxu0 %v1525
      %v1641 = vpop.f32.mrf.mxu0
      %v1642 = vadd.f32 0.0, %v1641
      %1643 = vmatmul.f32.gmra.mxu0 %v1528
      %v1644 = vpop.f32.mrf.mxu0
      %v1645 = vadd.f32 0.0, %v1644
      %1646 = vmatmul.f32.gmra.mxu0 %v1531
      %v1647 = vpop.f32.mrf.mxu0
      %v1648 = vadd.f32 0.0, %v1647
      %1649 = vmatmul.f32.gmra.mxu0 %v1534
      %v1650 = vpop.f32.mrf.mxu0
      %v1651 = vadd.f32 0.0, %v1650
      %1652 = vmatmul.f32.gmra.mxu0 %v1537
      %v1653 = vpop.f32.mrf.mxu0
      %v1654 = vadd.f32 0.0, %v1653
      %1655 = vmatmul.f32.gmra.mxu0 %v1540
      %v1656 = vpop.f32.mrf.mxu0
      %v1657 = vadd.f32 0.0, %v1656
      %1658 = vmatmul.f32.gmra.mxu0 %v1543
      %v1659 = vpop.f32.mrf.mxu0
      %v1660 = vadd.f32 0.0, %v1659
      %1661 = vdwg.mxu0
      %v1663 = vsel %vm1280, %v1382, 0
      %v1666 = vsel %vm1280, %v1383, 0
      %v1669 = vsel %vm1280, %v1384, 0
      %v1672 = vsel %vm1280, %v1385, 0
      %v1675 = vsel %vm1280, %v1386, 0
      %v1678 = vsel %vm1280, %v1387, 0
      %v1681 = vsel %vm1280, %v1388, 0
      %v1684 = vsel %vm1280, %v1389, 0
      %v1687 = vsel %vm1280, %v1390, 0
      %v1690 = vsel %vm1280, %v1391, 0
      %v1693 = vsel %vm1280, %v1392, 0
      %v1696 = vsel %vm1280, %v1393, 0
      %v1699 = vsel %vm1280, %v1394, 0
      %v1702 = vsel %vm1280, %v1395, 0
      %v1705 = vsel %vm1280, %v1396, 0
      %v1708 = vsel %vm1280, %v1397, 0
      %v1711 = vsel %vm1280, %v1398, 0
      %v1714 = vsel %vm1280, %v1399, 0
      %v1717 = vsel %vm1280, %v1400, 0
      %v1720 = vsel %vm1280, %v1401, 0
      %v1723 = vsel %vm1280, %v1402, 0
      %v1726 = vsel %vm1280, %v1403, 0
      %v1729 = vsel %vm1280, %v1404, 0
      %v1732 = vsel %vm1280, %v1405, 0
      %v1735 = vsel %vm1280, %v1406, 0
      %v1738 = vsel %vm1280, %v1407, 0
      %v1741 = vsel %vm1280, %v1408, 0
      %v1744 = vsel %vm1280, %v1409, 0
      %v1747 = vsel %vm1280, %v1410, 0
      %v1750 = vsel %vm1280, %v1411, 0
      %v1753 = vsel %vm1280, %v1412, 0
      %v1756 = vsel %vm1280, %v1413, 0
      %v1759 = vsel %vm1545, %v1414, 0
      %1761 = vmatpush.msra.mxu0 0.0
      %1762 = vmatpush.msra.mxu0 0.0
      %1763 = vmatpush.msra.mxu0 0.0
      %1764 = vmatpush.msra.mxu0 0.0
      %1765 = vmatpush.msra.mxu0 0.0
      %1766 = vmatpush.msra.mxu0 0.0
      %1767 = vmatpush.msra.mxu0 0.0
      %1768 = vmatpush.msra.mxu0 0.0
      %1769 = vmatpush.msra.mxu0 0.0
      %1770 = vmatpush.msra.mxu0 0.0
      %1771 = vmatpush.msra.mxu0 0.0
      %1772 = vmatpush.msra.mxu0 0.0
      %1773 = vmatpush.msra.mxu0 0.0
      %1774 = vmatpush.msra.mxu0 0.0
      %1775 = vmatpush.msra.mxu0 0.0
      %1776 = vmatpush.msra.mxu0 %v1759
      %1777 = vmatmul.f32.gmra.mxu0 %v1663
      %v1778 = vpop.f32.mrf.mxu0
      %v1779 = vadd.f32 %v1567, %v1778
      %1780 = vmatmul.f32.gmra.mxu0 %v1666
      %v1781 = vpop.f32.mrf.mxu0
      %v1782 = vadd.f32 %v1570, %v1781
      %1783 = vmatmul.f32.gmra.mxu0 %v1669
      %v1784 = vpop.f32.mrf.mxu0
      %v1785 = vadd.f32 %v1573, %v1784
      %1786 = vmatmul.f32.gmra.mxu0 %v1672
      %v1787 = vpop.f32.mrf.mxu0
      %v1788 = vadd.f32 %v1576, %v1787
      %1789 = vmatmul.f32.gmra.mxu0 %v1675
      %v1790 = vpop.f32.mrf.mxu0
      %v1791 = vadd.f32 %v1579, %v1790
      %1792 = vmatmul.f32.gmra.mxu0 %v1678
      %v1793 = vpop.f32.mrf.mxu0
      %v1794 = vadd.f32 %v1582, %v1793
      %1795 = vmatmul.f32.gmra.mxu0 %v1681
      %v1796 = vpop.f32.mrf.mxu0
      %v1797 = vadd.f32 %v1585, %v1796
      %1798 = vmatmul.f32.gmra.mxu0 %v1684
      %v1799 = vpop.f32.mrf.mxu0
      %v1800 = vadd.f32 %v1588, %v1799
      %1801 = vmatmul.f32.gmra.mxu0 %v1687
      %v1802 = vpop.f32.mrf.mxu0
      %v1803 = vadd.f32 %v1591, %v1802
      %1804 = vmatmul.f32.gmra.mxu0 %v1690
      %v1805 = vpop.f32.mrf.mxu0
      %v1806 = vadd.f32 %v1594, %v1805
      %1807 = vmatmul.f32.gmra.mxu0 %v1693
      %v1808 = vpop.f32.mrf.mxu0
      %v1809 = vadd.f32 %v1597, %v1808
      %1810 = vmatmul.f32.gmra.mxu0 %v1696
      %v1811 = vpop.f32.mrf.mxu0
      %v1812 = vadd.f32 %v1600, %v1811
      %1813 = vmatmul.f32.gmra.mxu0 %v1699
      %v1814 = vpop.f32.mrf.mxu0
      %v1815 = vadd.f32 %v1603, %v1814
      %1816 = vmatmul.f32.gmra.mxu0 %v1702
      %v1817 = vpop.f32.mrf.mxu0
      %v1818 = vadd.f32 %v1606, %v1817
      %1819 = vmatmul.f32.gmra.mxu0 %v1705
      %v1820 = vpop.f32.mrf.mxu0
      %v1821 = vadd.f32 %v1609, %v1820
      %1822 = vmatmul.f32.gmra.mxu0 %v1708
      %v1823 = vpop.f32.mrf.mxu0
      %v1824 = vadd.f32 %v1612, %v1823
      %1825 = vmatmul.f32.gmra.mxu0 %v1711
      %v1826 = vpop.f32.mrf.mxu0
      %v1827 = vadd.f32 %v1615, %v1826
      %1828 = vmatmul.f32.gmra.mxu0 %v1714
      %v1829 = vpop.f32.mrf.mxu0
      %v1830 = vadd.f32 %v1618, %v1829
      %1831 = vmatmul.f32.gmra.mxu0 %v1717
      %v1832 = vpop.f32.mrf.mxu0
      %v1833 = vadd.f32 %v1621, %v1832
      %1834 = vmatmul.f32.gmra.mxu0 %v1720
      %v1835 = vpop.f32.mrf.mxu0
      %v1836 = vadd.f32 %v1624, %v1835
      %1837 = vmatmul.f32.gmra.mxu0 %v1723
      %v1838 = vpop.f32.mrf.mxu0
      %v1839 = vadd.f32 %v1627, %v1838
      %1840 = vmatmul.f32.gmra.mxu0 %v1726
      %v1841 = vpop.f32.mrf.mxu0
      %v1842 = vadd.f32 %v1630, %v1841
      %1843 = vmatmul.f32.gmra.mxu0 %v1729
      %v1844 = vpop.f32.mrf.mxu0
      %v1845 = vadd.f32 %v1633, %v1844
      %1846 = vmatmul.f32.gmra.mxu0 %v1732
      %v1847 = vpop.f32.mrf.mxu0
      %v1848 = vadd.f32 %v1636, %v1847
      %1849 = vmatmul.f32.gmra.mxu0 %v1735
      %v1850 = vpop.f32.mrf.mxu0
      %v1851 = vadd.f32 %v1639, %v1850
      %1852 = vmatmul.f32.gmra.mxu0 %v1738
      %v1853 = vpop.f32.mrf.mxu0
      %v1854 = vadd.f32 %v1642, %v1853
      %1855 = vmatmul.f32.gmra.mxu0 %v1741
      %v1856 = vpop.f32.mrf.mxu0
      %v1857 = vadd.f32 %v1645, %v1856
      %1858 = vmatmul.f32.gmra.mxu0 %v1744
      %v1859 = vpop.f32.mrf.mxu0
      %v1860 = vadd.f32 %v1648, %v1859
      %1861 = vmatmul.f32.gmra.mxu0 %v1747
      %v1862 = vpop.f32.mrf.mxu0
      %v1863 = vadd.f32 %v1651, %v1862
      %1864 = vmatmul.f32.gmra.mxu0 %v1750
      %v1865 = vpop.f32.mrf.mxu0
      %v1866 = vadd.f32 %v1654, %v1865
      %1867 = vmatmul.f32.gmra.mxu0 %v1753
      %v1868 = vpop.f32.mrf.mxu0
      %v1869 = vadd.f32 %v1657, %v1868
      %1870 = vmatmul.f32.gmra.mxu0 %v1756
      %v1871 = vpop.f32.mrf.mxu0
      %v1872 = vadd.f32 %v1660, %v1871
      %1873 = vdwg.mxu0
      %s1874 = scalar_lea.vmem [#allocation2], 32
      %v1875 = vld [vmem:[%s1874] sm:$0xff]
      %v1876 = vld [vmem:[%s1874 + $0x8] sm:$0xff]
      %v1877 = vld [vmem:[%s1874 + $0x10] sm:$0xff]
      %v1878 = vld [vmem:[%s1874 + $0x18] sm:$0xff]
      %v1879 = vld [vmem:[%s1874 + $0x20] sm:$0xff]
      %v1880 = vld [vmem:[%s1874 + $0x28] sm:$0xff]
      %v1881 = vld [vmem:[%s1874 + $0x30] sm:$0xff]
      %v1882 = vld [vmem:[%s1874 + $0x38] sm:$0xff]
      %v1883 = vld [vmem:[%s1874 + $0x40] sm:$0xff]
      %v1884 = vld [vmem:[%s1874 + $0x48] sm:$0xff]
      %v1885 = vld [vmem:[%s1874 + $0x50] sm:$0xff]
      %v1886 = vld [vmem:[%s1874 + $0x58] sm:$0xff]
      %v1887 = vld [vmem:[%s1874 + $0x60] sm:$0xff]
      %v1888 = vld [vmem:[%s1874 + $0x68] sm:$0xff]
      %v1889 = vld [vmem:[%s1874 + $0x70] sm:$0xff]
      %v1890 = vld [vmem:[%s1874 + $0x78] sm:$0xff]
      %v1891 = vld [vmem:[%s1874 + $0x80] sm:$0xff]
      %v1892 = vld [vmem:[%s1874 + $0x88] sm:$0xff]
      %v1893 = vld [vmem:[%s1874 + $0x90] sm:$0xff]
      %v1894 = vld [vmem:[%s1874 + $0x98] sm:$0xff]
      %v1895 = vld [vmem:[%s1874 + $0xa0] sm:$0xff]
      %v1896 = vld [vmem:[%s1874 + $0xa8] sm:$0xff]
      %v1897 = vld [vmem:[%s1874 + $0xb0] sm:$0xff]
      %v1898 = vld [vmem:[%s1874 + $0xb8] sm:$0xff]
      %v1899 = vld [vmem:[%s1874 + $0xc0] sm:$0xff]
      %v1900 = vld [vmem:[%s1874 + $0xc8] sm:$0xff]
      %v1901 = vld [vmem:[%s1874 + $0xd0] sm:$0xff]
      %v1902 = vld [vmem:[%s1874 + $0xd8] sm:$0xff]
      %v1903 = vld [vmem:[%s1874 + $0xe0] sm:$0xff]
      %v1904 = vld [vmem:[%s1874 + $0xe8] sm:$0xff]
      %v1905 = vld [vmem:[%s1874 + $0xf0] sm:$0xff]
      %v1906 = vld [vmem:[%s1874 + $0xf8] sm:$0xff]
      %s1907 = scalar_lea.vmem %s4, 16
      %v1908 = vld [vmem:[%s1907] sm:$0x3f]
      %v1910 = vsel %vm1280, %v1875, 0
      %v1913 = vsel %vm1280, %v1876, 0
      %v1916 = vsel %vm1280, %v1877, 0
      %v1919 = vsel %vm1280, %v1878, 0
      %v1922 = vsel %vm1280, %v1879, 0
      %v1925 = vsel %vm1280, %v1880, 0
      %v1928 = vsel %vm1280, %v1881, 0
      %v1931 = vsel %vm1280, %v1882, 0
      %v1934 = vsel %vm1280, %v1883, 0
      %v1937 = vsel %vm1280, %v1884, 0
      %v1940 = vsel %vm1280, %v1885, 0
      %v1943 = vsel %vm1280, %v1886, 0
      %v1946 = vsel %vm1280, %v1887, 0
      %v1949 = vsel %vm1280, %v1888, 0
      %v1952 = vsel %vm1280, %v1889, 0
      %v1955 = vsel %vm1280, %v1890, 0
      %v1958 = vsel %vm1280, %v1891, 0
      %v1961 = vsel %vm1280, %v1892, 0
      %v1964 = vsel %vm1280, %v1893, 0
      %v1967 = vsel %vm1280, %v1894, 0
      %v1970 = vsel %vm1280, %v1895, 0
      %v1973 = vsel %vm1280, %v1896, 0
      %v1976 = vsel %vm1280, %v1897, 0
      %v1979 = vsel %vm1280, %v1898, 0
      %v1982 = vsel %vm1280, %v1899, 0
      %v1985 = vsel %vm1280, %v1900, 0
      %v1988 = vsel %vm1280, %v1901, 0
      %v1991 = vsel %vm1280, %v1902, 0
      %v1994 = vsel %vm1280, %v1903, 0
      %v1997 = vsel %vm1280, %v1904, 0
      %v2000 = vsel %vm1280, %v1905, 0
      %v2003 = vsel %vm1280, %v1906, 0
      %v2006 = vsel %vm1545, %v1908, 0
      %2008 = vmatpush.msra.mxu0 0.0
      %2009 = vmatpush.msra.mxu0 0.0
      %2010 = vmatpush.msra.mxu0 0.0
      %2011 = vmatpush.msra.mxu0 0.0
      %2012 = vmatpush.msra.mxu0 0.0
      %2013 = vmatpush.msra.mxu0 0.0
      %2014 = vmatpush.msra.mxu0 0.0
      %2015 = vmatpush.msra.mxu0 0.0
      %2016 = vmatpush.msra.mxu0 0.0
      %2017 = vmatpush.msra.mxu0 0.0
      %2018 = vmatpush.msra.mxu0 0.0
      %2019 = vmatpush.msra.mxu0 0.0
      %2020 = vmatpush.msra.mxu0 0.0
      %2021 = vmatpush.msra.mxu0 0.0
      %2022 = vmatpush.msra.mxu0 0.0
      %2023 = vmatpush.msra.mxu0 %v2006
      %2024 = vmatmul.f32.gmra.mxu0 %v1910
      %v2025 = vpop.f32.mrf.mxu0
      %v2026 = vadd.f32 0.0, %v2025
      %2027 = vmatmul.f32.gmra.mxu0 %v1913
      %v2028 = vpop.f32.mrf.mxu0
      %v2029 = vadd.f32 0.0, %v2028
      %2030 = vmatmul.f32.gmra.mxu0 %v1916
      %v2031 = vpop.f32.mrf.mxu0
      %v2032 = vadd.f32 0.0, %v2031
      %2033 = vmatmul.f32.gmra.mxu0 %v1919
      %v2034 = vpop.f32.mrf.mxu0
      %v2035 = vadd.f32 0.0, %v2034
      %2036 = vmatmul.f32.gmra.mxu0 %v1922
      %v2037 = vpop.f32.mrf.mxu0
      %v2038 = vadd.f32 0.0, %v2037
      %2039 = vmatmul.f32.gmra.mxu0 %v1925
      %v2040 = vpop.f32.mrf.mxu0
      %v2041 = vadd.f32 0.0, %v2040
      %2042 = vmatmul.f32.gmra.mxu0 %v1928
      %v2043 = vpop.f32.mrf.mxu0
      %v2044 = vadd.f32 0.0, %v2043
      %2045 = vmatmul.f32.gmra.mxu0 %v1931
      %v2046 = vpop.f32.mrf.mxu0
      %v2047 = vadd.f32 0.0, %v2046
      %2048 = vmatmul.f32.gmra.mxu0 %v1934
      %v2049 = vpop.f32.mrf.mxu0
      %v2050 = vadd.f32 0.0, %v2049
      %2051 = vmatmul.f32.gmra.mxu0 %v1937
      %v2052 = vpop.f32.mrf.mxu0
      %v2053 = vadd.f32 0.0, %v2052
      %2054 = vmatmul.f32.gmra.mxu0 %v1940
      %v2055 = vpop.f32.mrf.mxu0
      %v2056 = vadd.f32 0.0, %v2055
      %2057 = vmatmul.f32.gmra.mxu0 %v1943
      %v2058 = vpop.f32.mrf.mxu0
      %v2059 = vadd.f32 0.0, %v2058
      %2060 = vmatmul.f32.gmra.mxu0 %v1946
      %v2061 = vpop.f32.mrf.mxu0
      %v2062 = vadd.f32 0.0, %v2061
      %2063 = vmatmul.f32.gmra.mxu0 %v1949
      %v2064 = vpop.f32.mrf.mxu0
      %v2065 = vadd.f32 0.0, %v2064
      %2066 = vmatmul.f32.gmra.mxu0 %v1952
      %v2067 = vpop.f32.mrf.mxu0
      %v2068 = vadd.f32 0.0, %v2067
      %2069 = vmatmul.f32.gmra.mxu0 %v1955
      %v2070 = vpop.f32.mrf.mxu0
      %v2071 = vadd.f32 0.0, %v2070
      %2072 = vmatmul.f32.gmra.mxu0 %v1958
      %v2073 = vpop.f32.mrf.mxu0
      %v2074 = vadd.f32 0.0, %v2073
      %2075 = vmatmul.f32.gmra.mxu0 %v1961
      %v2076 = vpop.f32.mrf.mxu0
      %v2077 = vadd.f32 0.0, %v2076
      %2078 = vmatmul.f32.gmra.mxu0 %v1964
      %v2079 = vpop.f32.mrf.mxu0
      %v2080 = vadd.f32 0.0, %v2079
      %2081 = vmatmul.f32.gmra.mxu0 %v1967
      %v2082 = vpop.f32.mrf.mxu0
      %v2083 = vadd.f32 0.0, %v2082
      %2084 = vmatmul.f32.gmra.mxu0 %v1970
      %v2085 = vpop.f32.mrf.mxu0
      %v2086 = vadd.f32 0.0, %v2085
      %2087 = vmatmul.f32.gmra.mxu0 %v1973
      %v2088 = vpop.f32.mrf.mxu0
      %v2089 = vadd.f32 0.0, %v2088
      %2090 = vmatmul.f32.gmra.mxu0 %v1976
      %v2091 = vpop.f32.mrf.mxu0
      %v2092 = vadd.f32 0.0, %v2091
      %2093 = vmatmul.f32.gmra.mxu0 %v1979
      %v2094 = vpop.f32.mrf.mxu0
      %v2095 = vadd.f32 0.0, %v2094
      %2096 = vmatmul.f32.gmra.mxu0 %v1982
      %v2097 = vpop.f32.mrf.mxu0
      %v2098 = vadd.f32 0.0, %v2097
      %2099 = vmatmul.f32.gmra.mxu0 %v1985
      %v2100 = vpop.f32.mrf.mxu0
      %v2101 = vadd.f32 0.0, %v2100
      %2102 = vmatmul.f32.gmra.mxu0 %v1988
      %v2103 = vpop.f32.mrf.mxu0
      %v2104 = vadd.f32 0.0, %v2103
      %2105 = vmatmul.f32.gmra.mxu0 %v1991
      %v2106 = vpop.f32.mrf.mxu0
      %v2107 = vadd.f32 0.0, %v2106
      %2108 = vmatmul.f32.gmra.mxu0 %v1994
      %v2109 = vpop.f32.mrf.mxu0
      %v2110 = vadd.f32 0.0, %v2109
      %2111 = vmatmul.f32.gmra.mxu0 %v1997
      %v2112 = vpop.f32.mrf.mxu0
      %v2113 = vadd.f32 0.0, %v2112
      %2114 = vmatmul.f32.gmra.mxu0 %v2000
      %v2115 = vpop.f32.mrf.mxu0
      %v2116 = vadd.f32 0.0, %v2115
      %2117 = vmatmul.f32.gmra.mxu0 %v2003
      %v2118 = vpop.f32.mrf.mxu0
      %v2119 = vadd.f32 0.0, %v2118
      %2120 = vdwg.mxu0
      %v2121 = vadd.f32 %v1779, %v2026
      %v2122 = vadd.f32 %v1782, %v2029
      %v2123 = vadd.f32 %v1785, %v2032
      %v2124 = vadd.f32 %v1788, %v2035
      %v2125 = vadd.f32 %v1791, %v2038
      %v2126 = vadd.f32 %v1794, %v2041
      %v2127 = vadd.f32 %v1797, %v2044
      %v2128 = vadd.f32 %v1800, %v2047
      %v2129 = vadd.f32 %v1803, %v2050
      %v2130 = vadd.f32 %v1806, %v2053
      %v2131 = vadd.f32 %v1809, %v2056
      %v2132 = vadd.f32 %v1812, %v2059
      %v2133 = vadd.f32 %v1815, %v2062
      %v2134 = vadd.f32 %v1818, %v2065
      %v2135 = vadd.f32 %v1821, %v2068
      %v2136 = vadd.f32 %v1824, %v2071
      %v2137 = vadd.f32 %v1827, %v2074
      %v2138 = vadd.f32 %v1830, %v2077
      %v2139 = vadd.f32 %v1833, %v2080
      %v2140 = vadd.f32 %v1836, %v2083
      %v2141 = vadd.f32 %v1839, %v2086
      %v2142 = vadd.f32 %v1842, %v2089
      %v2143 = vadd.f32 %v1845, %v2092
      %v2144 = vadd.f32 %v1848, %v2095
      %v2145 = vadd.f32 %v1851, %v2098
      %v2146 = vadd.f32 %v1854, %v2101
      %v2147 = vadd.f32 %v1857, %v2104
      %v2148 = vadd.f32 %v1860, %v2107
      %v2149 = vadd.f32 %v1863, %v2110
      %v2150 = vadd.f32 %v1866, %v2113
      %v2151 = vadd.f32 %v1869, %v2116
      %v2152 = vadd.f32 %v1872, %v2119
      %v2153 = vld [vmem:[%s5] sm:$0x1]
      %v2155 = vperm.slane %v2153, 0
      %v2157 = vadd.f32 %v2121, %v2155
      %v2158 = vadd.f32 %v2122, %v2155
      %v2159 = vadd.f32 %v2123, %v2155
      %v2160 = vadd.f32 %v2124, %v2155
      %v2161 = vadd.f32 %v2125, %v2155
      %v2162 = vadd.f32 %v2126, %v2155
      %v2163 = vadd.f32 %v2127, %v2155
      %v2164 = vadd.f32 %v2128, %v2155
      %v2165 = vadd.f32 %v2129, %v2155
      %v2166 = vadd.f32 %v2130, %v2155
      %v2167 = vadd.f32 %v2131, %v2155
      %v2168 = vadd.f32 %v2132, %v2155
      %v2169 = vadd.f32 %v2133, %v2155
      %v2170 = vadd.f32 %v2134, %v2155
      %v2171 = vadd.f32 %v2135, %v2155
      %v2172 = vadd.f32 %v2136, %v2155
      %v2173 = vadd.f32 %v2137, %v2155
      %v2174 = vadd.f32 %v2138, %v2155
      %v2175 = vadd.f32 %v2139, %v2155
      %v2176 = vadd.f32 %v2140, %v2155
      %v2177 = vadd.f32 %v2141, %v2155
      %v2178 = vadd.f32 %v2142, %v2155
      %v2179 = vadd.f32 %v2143, %v2155
      %v2180 = vadd.f32 %v2144, %v2155
      %v2181 = vadd.f32 %v2145, %v2155
      %v2182 = vadd.f32 %v2146, %v2155
      %v2183 = vadd.f32 %v2147, %v2155
      %v2184 = vadd.f32 %v2148, %v2155
      %v2185 = vadd.f32 %v2149, %v2155
      %v2186 = vadd.f32 %v2150, %v2155
      %v2187 = vadd.f32 %v2151, %v2155
      %v2188 = vadd.f32 %v2152, %v2155
      %vm2189 = vcmp.gt.f32.partialorder %v2157, 0.0
      %vm2190 = vcmp.gt.f32.partialorder %v2158, 0.0
      %vm2191 = vcmp.gt.f32.partialorder %v2159, 0.0
      %vm2192 = vcmp.gt.f32.partialorder %v2160, 0.0
      %vm2193 = vcmp.gt.f32.partialorder %v2161, 0.0
      %vm2194 = vcmp.gt.f32.partialorder %v2162, 0.0
      %vm2195 = vcmp.gt.f32.partialorder %v2163, 0.0
      %vm2196 = vcmp.gt.f32.partialorder %v2164, 0.0
      %vm2197 = vcmp.gt.f32.partialorder %v2165, 0.0
      %vm2198 = vcmp.gt.f32.partialorder %v2166, 0.0
      %vm2199 = vcmp.gt.f32.partialorder %v2167, 0.0
      %vm2200 = vcmp.gt.f32.partialorder %v2168, 0.0
      %vm2201 = vcmp.gt.f32.partialorder %v2169, 0.0
      %vm2202 = vcmp.gt.f32.partialorder %v2170, 0.0
      %vm2203 = vcmp.gt.f32.partialorder %v2171, 0.0
      %vm2204 = vcmp.gt.f32.partialorder %v2172, 0.0
      %vm2205 = vcmp.gt.f32.partialorder %v2173, 0.0
      %vm2206 = vcmp.gt.f32.partialorder %v2174, 0.0
      %vm2207 = vcmp.gt.f32.partialorder %v2175, 0.0
      %vm2208 = vcmp.gt.f32.partialorder %v2176, 0.0
      %vm2209 = vcmp.gt.f32.partialorder %v2177, 0.0
      %vm2210 = vcmp.gt.f32.partialorder %v2178, 0.0
      %vm2211 = vcmp.gt.f32.partialorder %v2179, 0.0
      %vm2212 = vcmp.gt.f32.partialorder %v2180, 0.0
      %vm2213 = vcmp.gt.f32.partialorder %v2181, 0.0
      %vm2214 = vcmp.gt.f32.partialorder %v2182, 0.0
      %vm2215 = vcmp.gt.f32.partialorder %v2183, 0.0
      %vm2216 = vcmp.gt.f32.partialorder %v2184, 0.0
      %vm2217 = vcmp.gt.f32.partialorder %v2185, 0.0
      %vm2218 = vcmp.gt.f32.partialorder %v2186, 0.0
      %vm2219 = vcmp.gt.f32.partialorder %v2187, 0.0
      %vm2220 = vcmp.gt.f32.partialorder %v2188, 0.0
      %v2221 = vmul.f32 %v2157, 0.1
      %v2222 = vmul.f32 %v2158, 0.1
      %v2223 = vmul.f32 %v2159, 0.1
      %v2224 = vmul.f32 %v2160, 0.1
      %v2225 = vmul.f32 %v2161, 0.1
      %v2226 = vmul.f32 %v2162, 0.1
      %v2227 = vmul.f32 %v2163, 0.1
      %v2228 = vmul.f32 %v2164, 0.1
      %v2229 = vmul.f32 %v2165, 0.1
      %v2230 = vmul.f32 %v2166, 0.1
      %v2231 = vmul.f32 %v2167, 0.1
      %v2232 = vmul.f32 %v2168, 0.1
      %v2233 = vmul.f32 %v2169, 0.1
      %v2234 = vmul.f32 %v2170, 0.1
      %v2235 = vmul.f32 %v2171, 0.1
      %v2236 = vmul.f32 %v2172, 0.1
      %v2237 = vmul.f32 %v2173, 0.1
      %v2238 = vmul.f32 %v2174, 0.1
      %v2239 = vmul.f32 %v2175, 0.1
      %v2240 = vmul.f32 %v2176, 0.1
      %v2241 = vmul.f32 %v2177, 0.1
      %v2242 = vmul.f32 %v2178, 0.1
      %v2243 = vmul.f32 %v2179, 0.1
      %v2244 = vmul.f32 %v2180, 0.1
      %v2245 = vmul.f32 %v2181, 0.1
      %v2246 = vmul.f32 %v2182, 0.1
      %v2247 = vmul.f32 %v2183, 0.1
      %v2248 = vmul.f32 %v2184, 0.1
      %v2249 = vmul.f32 %v2185, 0.1
      %v2250 = vmul.f32 %v2186, 0.1
      %v2251 = vmul.f32 %v2187, 0.1
      %v2252 = vmul.f32 %v2188, 0.1
      %v2253 = vsel %vm2189, %v2157, %v2221
      %v2254 = vsel %vm2190, %v2158, %v2222
      %v2255 = vsel %vm2191, %v2159, %v2223
      %v2256 = vsel %vm2192, %v2160, %v2224
      %v2257 = vsel %vm2193, %v2161, %v2225
      %v2258 = vsel %vm2194, %v2162, %v2226
      %v2259 = vsel %vm2195, %v2163, %v2227
      %v2260 = vsel %vm2196, %v2164, %v2228
      %v2261 = vsel %vm2197, %v2165, %v2229
      %v2262 = vsel %vm2198, %v2166, %v2230
      %v2263 = vsel %vm2199, %v2167, %v2231
      %v2264 = vsel %vm2200, %v2168, %v2232
      %v2265 = vsel %vm2201, %v2169, %v2233
      %v2266 = vsel %vm2202, %v2170, %v2234
      %v2267 = vsel %vm2203, %v2171, %v2235
      %v2268 = vsel %vm2204, %v2172, %v2236
      %v2269 = vsel %vm2205, %v2173, %v2237
      %v2270 = vsel %vm2206, %v2174, %v2238
      %v2271 = vsel %vm2207, %v2175, %v2239
      %v2272 = vsel %vm2208, %v2176, %v2240
      %v2273 = vsel %vm2209, %v2177, %v2241
      %v2274 = vsel %vm2210, %v2178, %v2242
      %v2275 = vsel %vm2211, %v2179, %v2243
      %v2276 = vsel %vm2212, %v2180, %v2244
      %v2277 = vsel %vm2213, %v2181, %v2245
      %v2278 = vsel %vm2214, %v2182, %v2246
      %v2279 = vsel %vm2215, %v2183, %v2247
      %v2280 = vsel %vm2216, %v2184, %v2248
      %v2281 = vsel %vm2217, %v2185, %v2249
      %v2282 = vsel %vm2218, %v2186, %v2250
      %v2283 = vsel %vm2219, %v2187, %v2251
      %v2284 = vsel %vm2220, %v2188, %v2252
      %v2285 = vld [vmem:[%s311] sm:$0xff]
      %v2286 = vld [vmem:[%s311 + $0x8] sm:$0xff]
      %v2287 = vld [vmem:[%s311 + $0x10] sm:$0xff]
      %v2288 = vld [vmem:[%s311 + $0x18] sm:$0xff]
      %v2289 = vld [vmem:[%s311 + $0x20] sm:$0xff]
      %v2290 = vld [vmem:[%s311 + $0x28] sm:$0xff]
      %v2291 = vld [vmem:[%s311 + $0x30] sm:$0xff]
      %v2292 = vld [vmem:[%s311 + $0x38] sm:$0xff]
      %v2293 = vld [vmem:[%s311 + $0x40] sm:$0xff]
      %v2294 = vld [vmem:[%s311 + $0x48] sm:$0xff]
      %v2295 = vld [vmem:[%s311 + $0x50] sm:$0xff]
      %v2296 = vld [vmem:[%s311 + $0x58] sm:$0xff]
      %v2297 = vld [vmem:[%s311 + $0x60] sm:$0xff]
      %v2298 = vld [vmem:[%s311 + $0x68] sm:$0xff]
      %v2299 = vld [vmem:[%s311 + $0x70] sm:$0xff]
      %v2300 = vld [vmem:[%s311 + $0x78] sm:$0xff]
      %v2301 = vld [vmem:[%s311 + $0x80] sm:$0xff]
      %v2302 = vld [vmem:[%s311 + $0x88] sm:$0xff]
      %v2303 = vld [vmem:[%s311 + $0x90] sm:$0xff]
      %v2304 = vld [vmem:[%s311 + $0x98] sm:$0xff]
      %v2305 = vld [vmem:[%s311 + $0xa0] sm:$0xff]
      %v2306 = vld [vmem:[%s311 + $0xa8] sm:$0xff]
      %v2307 = vld [vmem:[%s311 + $0xb0] sm:$0xff]
      %v2308 = vld [vmem:[%s311 + $0xb8] sm:$0xff]
      %v2309 = vld [vmem:[%s311 + $0xc0] sm:$0xff]
      %v2310 = vld [vmem:[%s311 + $0xc8] sm:$0xff]
      %v2311 = vld [vmem:[%s311 + $0xd0] sm:$0xff]
      %v2312 = vld [vmem:[%s311 + $0xd8] sm:$0xff]
      %v2313 = vld [vmem:[%s311 + $0xe0] sm:$0xff]
      %v2314 = vld [vmem:[%s311 + $0xe8] sm:$0xff]
      %v2315 = vld [vmem:[%s311 + $0xf0] sm:$0xff]
      %v2316 = vld [vmem:[%s311 + $0xf8] sm:$0xff]
      %v2317 = vadd.f32 %v2253, %v2285
      %v2318 = vadd.f32 %v2254, %v2286
      %v2319 = vadd.f32 %v2255, %v2287
      %v2320 = vadd.f32 %v2256, %v2288
      %v2321 = vadd.f32 %v2257, %v2289
      %v2322 = vadd.f32 %v2258, %v2290
      %v2323 = vadd.f32 %v2259, %v2291
      %v2324 = vadd.f32 %v2260, %v2292
      %v2325 = vadd.f32 %v2261, %v2293
      %v2326 = vadd.f32 %v2262, %v2294
      %v2327 = vadd.f32 %v2263, %v2295
      %v2328 = vadd.f32 %v2264, %v2296
      %v2329 = vadd.f32 %v2265, %v2297
      %v2330 = vadd.f32 %v2266, %v2298
      %v2331 = vadd.f32 %v2267, %v2299
      %v2332 = vadd.f32 %v2268, %v2300
      %v2333 = vadd.f32 %v2269, %v2301
      %v2334 = vadd.f32 %v2270, %v2302
      %v2335 = vadd.f32 %v2271, %v2303
      %v2336 = vadd.f32 %v2272, %v2304
      %v2337 = vadd.f32 %v2273, %v2305
      %v2338 = vadd.f32 %v2274, %v2306
      %v2339 = vadd.f32 %v2275, %v2307
      %v2340 = vadd.f32 %v2276, %v2308
      %v2341 = vadd.f32 %v2277, %v2309
      %v2342 = vadd.f32 %v2278, %v2310
      %v2343 = vadd.f32 %v2279, %v2311
      %v2344 = vadd.f32 %v2280, %v2312
      %v2345 = vadd.f32 %v2281, %v2313
      %v2346 = vadd.f32 %v2282, %v2314
      %v2347 = vadd.f32 %v2283, %v2315
      %v2348 = vadd.f32 %v2284, %v2316
      %2349 = vst.msk [vmem:[%s333] sm:$0xff] %vm372, %v2317
      %2350 = vst.msk [vmem:[%s333 + $0x8] sm:$0xff] %vm372, %v2318
      %2351 = vst.msk [vmem:[%s333 + $0x10] sm:$0xff] %vm372, %v2319
      %2352 = vst.msk [vmem:[%s333 + $0x18] sm:$0xff] %vm372, %v2320
      %2353 = vst.msk [vmem:[%s333 + $0x20] sm:$0xff] %vm372, %v2321
      %2354 = vst.msk [vmem:[%s333 + $0x28] sm:$0xff] %vm372, %v2322
      %2355 = vst.msk [vmem:[%s333 + $0x30] sm:$0xff] %vm372, %v2323
      %2356 = vst.msk [vmem:[%s333 + $0x38] sm:$0xff] %vm372, %v2324
      %2357 = vst.msk [vmem:[%s333 + $0x40] sm:$0xff] %vm372, %v2325
      %2358 = vst.msk [vmem:[%s333 + $0x48] sm:$0xff] %vm372, %v2326
      %2359 = vst.msk [vmem:[%s333 + $0x50] sm:$0xff] %vm372, %v2327
      %2360 = vst.msk [vmem:[%s333 + $0x58] sm:$0xff] %vm372, %v2328
      %2361 = vst.msk [vmem:[%s333 + $0x60] sm:$0xff] %vm372, %v2329
      %2362 = vst.msk [vmem:[%s333 + $0x68] sm:$0xff] %vm372, %v2330
      %2363 = vst.msk [vmem:[%s333 + $0x70] sm:$0xff] %vm372, %v2331
      %2364 = vst.msk [vmem:[%s333 + $0x78] sm:$0xff] %vm372, %v2332
      %2365 = vst.msk [vmem:[%s333 + $0x80] sm:$0xff] %vm372, %v2333
      %2366 = vst.msk [vmem:[%s333 + $0x88] sm:$0xff] %vm372, %v2334
      %2367 = vst.msk [vmem:[%s333 + $0x90] sm:$0xff] %vm372, %v2335
      %2368 = vst.msk [vmem:[%s333 + $0x98] sm:$0xff] %vm372, %v2336
      %2369 = vst.msk [vmem:[%s333 + $0xa0] sm:$0xff] %vm372, %v2337
      %2370 = vst.msk [vmem:[%s333 + $0xa8] sm:$0xff] %vm372, %v2338
      %2371 = vst.msk [vmem:[%s333 + $0xb0] sm:$0xff] %vm372, %v2339
      %2372 = vst.msk [vmem:[%s333 + $0xb8] sm:$0xff] %vm372, %v2340
      %2373 = vst.msk [vmem:[%s333 + $0xc0] sm:$0xff] %vm372, %v2341
      %2374 = vst.msk [vmem:[%s333 + $0xc8] sm:$0xff] %vm372, %v2342
      %2375 = vst.msk [vmem:[%s333 + $0xd0] sm:$0xff] %vm372, %v2343
      %2376 = vst.msk [vmem:[%s333 + $0xd8] sm:$0xff] %vm372, %v2344
      %2377 = vst.msk [vmem:[%s333 + $0xe0] sm:$0xff] %vm372, %v2345
      %2378 = vst.msk [vmem:[%s333 + $0xe8] sm:$0xff] %vm372, %v2346
      %2379 = vst.msk [vmem:[%s333 + $0xf0] sm:$0xff] %vm372, %v2347
      %2380 = vst.msk [vmem:[%s333 + $0xf8] sm:$0xff] %vm372, %v2348
      %s2381 = smul.u32 16, %s22
      %p2382 = scmp.lt.s32.totalorder %s21, 1
      %s2383 = scalar_select %p2382, %s21, 1
      %p2384 = scmp.lt.s32.totalorder %s2381, 15
      %s2385 = scalar_select %p2384, %s2381, 15
      %s2386 = smul.addr %s2385, 2
      %s2387 = smul.addr %s2383, 32
      %s2388 = sadd.s32 %s2386, %s2387
      %s2389 = smul.addr %s2388, 8
      %s2390 = scalar_lea.vmem %s6, %s2389
      // Predicated region
      $region45: #{tpu_custom_call.1} parent=43 // pred_check
        %p2391 = pneg %p189
      $region46: #{tpu_custom_call.1} parent=43 // pred_check_branch
        %2393 = sbr.rel (%p2391) target = $region48
      $region47: #{tpu_custom_call.1} parent=43 // pred_region
        %s2394 = smul.u32 16, %s22
      $region48: #{tpu_custom_call.1} parent=43 // pred_fallthru
        _
    $region44: #{tpu_custom_call.1} parent=5 // pred_fallthru
      _
    %p2395 = scmp.le.s32.totalorder 2, %s12
    // Predicated region
    $region49: #{tpu_custom_call.1} parent=5 // pred_check
      %p2396 = pneg %p2395
    $region50: #{tpu_custom_call.1} parent=5 // pred_check_branch
      %2398 = sbr.rel (%p2396) target = $region52
    $region51: #{tpu_custom_call.1} parent=5 // pred_region
      %s2399 = ssub.s32 %s12, 2
      // Predicated region
      $region53: #{tpu_custom_call.1} parent=51 // pred_check
        %p2400 = pneg %p195
      $region54: #{tpu_custom_call.1} parent=51 // pred_check_branch
        %2402 = sbr.rel (%p2400) target = $region56
      $region55: #{tpu_custom_call.1} parent=51 // pred_region
        %s2403 = smul.u32 16, %s24
        %p2404 = scmp.lt.s32.totalorder %s23, 1
        %s2405 = scalar_select %p2404, %s23, 1
        %p2406 = scmp.lt.s32.totalorder %s2403, 15
        %s2407 = scalar_select %p2406, %s2403, 15
        %s2408 = smul.addr %s2407, 2
        %s2409 = smul.addr %s2405, 32
        %s2410 = sadd.s32 %s2408, %s2409
        %s2411 = smul.addr %s2410, 8
        %s2412 = scalar_lea.vmem %s6, %s2411
      $region56: #{tpu_custom_call.1} parent=51 // pred_fallthru
        _
    $region52: #{tpu_custom_call.1} parent=5 // pred_fallthru
      _
  $region6: #{tpu_custom_call.1} parent=0 // loop_footer
    %s16 = sadd.s32 1, %s12
  $region7: #{tpu_custom_call.1} parent=0 // loop_footer_branch
    %11 = sbr.rel target = $region3
  $region8: #{tpu_custom_call.1} parent=0 // loop_exit
    _

// kernel: tpu_custom_call.1
$region0: #{tpu_custom_call.1}
  #allocation0 [shape = 'u32[]', space=smem, size = 0x4, offset = 0x4, fixed_abs, tag = 'smem constant byte address 0x4 - core index']
  #allocation1 [shape = 'u32[72,128]{1,0:T(1,128)}', space=vmem, size = 0x9000, scoped, tag = 'internal scratch']
  #allocation2 [shape = 'f32[18,16,6]{2,1,0:T(8,128)}', space=vmem, size = 0x24000, scoped, tag = 'scratch operand']
  %s0 = inlined_call_operand.vmem [shape: f32[2,16,16,4], index: 0, kind: input, shape index: {}]
  %s1 = inlined_call_operand.vmem [shape: f32[2,2,16,4], index: 1, kind: input, shape index: {}]
  %s2 = inlined_call_operand.vmem [shape: f32[4,2], index: 2, kind: input, shape index: {}]
  %s3 = inlined_call_operand.vmem [shape: f32[1,1,2], index: 3, kind: input, shape index: {}]
  %s4 = inlined_call_operand.vmem [shape: f32[3,6,4], index: 4, kind: input, shape index: {}]
  %s5 = inlined_call_operand.vmem [shape: f32[1,1,4], index: 5, kind: input, shape index: {}]
  %s6 = inlined_call_operand.vmem [shape: f32[2,16,16,4], index: 6, kind: output, shape index: {}]
  %s7 = sld [smem:[#allocation0]]
  $region57: #{tpu_custom_call.1} parent=0
    _
  %s9 = ssub.s32 1, %s7
  %s10 = scalar_select 0, %s9, %s7
  loop: start=0, step=1, limit=4
  $region2: #{tpu_custom_call.1} parent=0 // loop_pre_header
    _
  $region3: #{tpu_custom_call.1} parent=0 // loop_header
    %s12 = sphi 0, %s16
    %p13 = scmp.ge.s32.totalorder %s12, 4
    %s19 = sphi 0, %s31
    %s20 = sphi 0, %s27
    %s21 = sphi 0, %s19
    %s22 = sphi 0, %s20
    %s23 = sphi 0, %s21
    %s24 = sphi 0, %s22
    %s36 = sphi 0, %s38
    %s39 = sphi 0, %s36
    %s40 = sphi 0, %s39
    %s56 = sphi 0, %s40
    %s64 = sphi 0, %s66
    %s67 = sphi 0, %s64
    %s68 = sphi 0, %s67
    %s84 = sphi 0, %s68
    %s88 = sphi 0, %s88
    %s90 = sphi 0, %s88
    %s91 = sphi 0, %s90
    %s105 = sphi 0, %s91
    %s109 = sphi 0, %s109
    %s111 = sphi 0, %s109
    %s112 = sphi 0, %s111
    %s126 = sphi 0, %s112
    %s130 = sphi 0, %s130
    %s132 = sphi 0, %s130
    %s133 = sphi 0, %s132
    %s147 = sphi 0, %s133
    %s151 = sphi 0, %s151
    %s153 = sphi 0, %s151
    %s154 = sphi 0, %s153
    %s168 = sphi 0, %s154
    %s176 = sphi 0, %s178
    %s179 = sphi 0, %s176
    %s180 = sphi 0, %s179
    %s196 = sphi 0, %s180
  $region4: #{tpu_custom_call.1} parent=0 // loop_header_branch
    %15 = sbr.rel (%p13) target = $region8
  $region5: #{tpu_custom_call.1} parent=0 // loop_body
    %s17 = ssub.s32 %s12, 1
    %s18 = ssub.s32 %s12, 2
    %s25 = sadd.s32 1, %s20
    %p26 = scmp.ge.s32.totalorder %s25, 1
    %s27 = scalar_select %p26, 0, %s25
    %s28 = sadd.s32 1, %s19
    %s29 = scalar_select %p26, %s28, %s19
    %p30 = scmp.ge.s32.totalorder %s29, 2
    %s31 = scalar_select %p30, 0, %s29
    %s32 = ssub.s32 %s19, %s31
    %s33 = ssub.s32 %s20, %s27
    %s34 = sor.u32 %s32, %s33
    %p35 = scmp.eq.s32.totalorder %s34, 0
    %s37 = sadd.s32 %s36, 1
    %s38 = scalar_select %p35, %s36, %s37
    %p41 = pneg %p35
    %p42 = scmp.eq.s32.totalorder %s12, 1
    %p43 = por %p41, %p42
    %p44 = scmp.ne.s32.totalorder %s36, %s39
    %p45 = scmp.eq.s32.totalorder %s12, 0
    %p46 = por %p44, %p45
    %p47 = scmp.ne.s32.totalorder %s36, %s39
    %p48 = scmp.eq.s32.totalorder %s17, 1
    %p49 = por %p47, %p48
    %p50 = scmp.ne.s32.totalorder %s39, %s40
    %p51 = scmp.eq.s32.totalorder %s17, 0
    %p52 = por %p50, %p51
    %p53 = scmp.ne.s32.totalorder %s39, %s40
    %p54 = scmp.eq.s32.totalorder %s18, 1
    %p55 = por %p53, %p54
    %p57 = scmp.ne.s32.totalorder %s40, %s56
    %p58 = scmp.eq.s32.totalorder %s18, 0
    %p59 = por %p57, %p58
    %s60 = ssub.s32 %s19, %s31
    %s61 = ssub.s32 %s20, %s27
    %s62 = sor.u32 %s60, %s61
    %p63 = scmp.eq.s32.totalorder %s62, 0
    %s65 = sadd.s32 %s64, 1
    %s66 = scalar_select %p63, %s64, %s65
    %p69 = pneg %p63
    %p70 = scmp.eq.s32.totalorder %s12, 1
    %p71 = por %p69, %p70
    %p72 = scmp.ne.s32.totalorder %s64, %s67
    %p73 = scmp.eq.s32.totalorder %s12, 0
    %p74 = por %p72, %p73
    %p75 = scmp.ne.s32.totalorder %s64, %s67
    %p76 = scmp.eq.s32.totalorder %s17, 1
    %p77 = por %p75, %p76
    %p78 = scmp.ne.s32.totalorder %s67, %s68
    %p79 = scmp.eq.s32.totalorder %s17, 0
    %p80 = por %p78, %p79
    %p81 = scmp.ne.s32.totalorder %s67, %s68
    %p82 = scmp.eq.s32.totalorder %s18, 1
    %p83 = por %p81, %p82
    %p85 = scmp.ne.s32.totalorder %s68, %s84
    %p86 = scmp.eq.s32.totalorder %s18, 0
    %p87 = por %p85, %p86
    %s89 = sadd.s32 %s88, 1
    %p92 = scmp.eq.s32.totalorder %s12, 1
    %p93 = scmp.ne.s32.totalorder %s88, %s90
    %p94 = scmp.eq.s32.totalorder %s12, 0
    %p95 = por %p93, %p94
    %p96 = scmp.ne.s32.totalorder %s88, %s90
    %p97 = scmp.eq.s32.totalorder %s17, 1
    %p98 = por %p96, %p97
    %p99 = scmp.ne.s32.totalorder %s90, %s91
    %p100 = scmp.eq.s32.totalorder %s17, 0
    %p101 = por %p99, %p100
    %p102 = scmp.ne.s32.totalorder %s90, %s91
    %p103 = scmp.eq.s32.totalorder %s18, 1
    %p104 = por %p102, %p103
    %p106 = scmp.ne.s32.totalorder %s91, %s105
    %p107 = scmp.eq.s32.totalorder %s18, 0
    %p108 = por %p106, %p107
    %s110 = sadd.s32 %s109, 1
    %p113 = scmp.eq.s32.totalorder %s12, 1
    %p114 = scmp.ne.s32.totalorder %s109, %s111
    %p115 = scmp.eq.s32.totalorder %s12, 0
    %p116 = por %p114, %p115
    %p117 = scmp.ne.s32.totalorder %s109, %s111
    %p118 = scmp.eq.s32.totalorder %s17, 1
    %p119 = por %p117, %p118
    %p120 = scmp.ne.s32.totalorder %s111, %s112
    %p121 = scmp.eq.s32.totalorder %s17, 0
    %p122 = por %p120, %p121
    %p123 = scmp.ne.s32.totalorder %s111, %s112
    %p124 = scmp.eq.s32.totalorder %s18, 1
    %p125 = por %p123, %p124
    %p127 = scmp.ne.s32.totalorder %s112, %s126
    %p128 = scmp.eq.s32.totalorder %s18, 0
    %p129 = por %p127, %p128
    %s131 = sadd.s32 %s130, 1
    %p134 = scmp.eq.s32.totalorder %s12, 1
    %p135 = scmp.ne.s32.totalorder %s130, %s132
    %p136 = scmp.eq.s32.totalorder %s12, 0
    %p137 = por %p135, %p136
    %p138 = scmp.ne.s32.totalorder %s130, %s132
    %p139 = scmp.eq.s32.totalorder %s17, 1
    %p140 = por %p138, %p139
    %p141 = scmp.ne.s32.totalorder %s132, %s133
    %p142 = scmp.eq.s32.totalorder %s17, 0
    %p143 = por %p141, %p142
    %p144 = scmp.ne.s32.totalorder %s132, %s133
    %p145 = scmp.eq.s32.totalorder %s18, 1
    %p146 = por %p144, %p145
    %p148 = scmp.ne.s32.totalorder %s133, %s147
    %p149 = scmp.eq.s32.totalorder %s18, 0
    %p150 = por %p148, %p149
    %s152 = sadd.s32 %s151, 1
    %p155 = scmp.eq.s32.totalorder %s12, 1
    %p156 = scmp.ne.s32.totalorder %s151, %s153
    %p157 = scmp.eq.s32.totalorder %s12, 0
    %p158 = por %p156, %p157
    %p159 = scmp.ne.s32.totalorder %s151, %s153
    %p160 = scmp.eq.s32.totalorder %s17, 1
    %p161 = por %p159, %p160
    %p162 = scmp.ne.s32.totalorder %s153, %s154
    %p163 = scmp.eq.s32.totalorder %s17, 0
    %p164 = por %p162, %p163
    %p165 = scmp.ne.s32.totalorder %s153, %s154
    %p166 = scmp.eq.s32.totalorder %s18, 1
    %p167 = por %p165, %p166
    %p169 = scmp.ne.s32.totalorder %s154, %s168
    %p170 = scmp.eq.s32.totalorder %s18, 0
    %p171 = por %p169, %p170
    %s172 = ssub.s32 %s19, %s31
    %s173 = ssub.s32 %s20, %s27
    %s174 = sor.u32 %s172, %s173
    %p175 = scmp.eq.s32.totalorder %s174, 0
    %s177 = sadd.s32 %s176, 1
    %s178 = scalar_select %p175, %s176, %s177
    %p181 = pneg %p175
    %p182 = scmp.eq.s32.totalorder %s12, 1
    %p183 = por %p181, %p182
    %p184 = scmp.ne.s32.totalorder %s176, %s179
    %p185 = scmp.eq.s32.totalorder %s12, 0
    %p186 = por %p184, %p185
    %p187 = scmp.ne.s32.totalorder %s176, %s179
    %p188 = scmp.eq.s32.totalorder %s17, 1
    %p189 = por %p187, %p188
    %p190 = scmp.ne.s32.totalorder %s179, %s180
    %p191 = scmp.eq.s32.totalorder %s17, 0
    %p192 = por %p190, %p191
    %p193 = scmp.ne.s32.totalorder %s179, %s180
    %p194 = scmp.eq.s32.totalorder %s18, 1
    %p195 = por %p193, %p194
    %p197 = scmp.ne.s32.totalorder %s180, %s196
    %p198 = scmp.eq.s32.totalorder %s18, 0
    %p199 = por %p197, %p198
    %p200 = scmp.le.s32.totalorder 1, %s12
    %p201 = scmp.lt.s32.totalorder %s12, 3
    %p202 = pnand %p200, %p201
    %p203 = pneg %p202
    // Predicated region
    $region9: #{tpu_custom_call.1} parent=5 // pred_check
      _
    $region10: #{tpu_custom_call.1} parent=5 // pred_check_branch
      %205 = sbr.rel (%p202) target = $region12
    $region11: #{tpu_custom_call.1} parent=5 // pred_region
      %s206 = ssub.s32 %s12, 1
      // Predicated region
      $region13: #{tpu_custom_call.1} parent=11 // pred_check
        %p207 = pneg %p101
      $region14: #{tpu_custom_call.1} parent=11 // pred_check_branch
        %209 = sbr.rel (%p207) target = $region16
      $region15: #{tpu_custom_call.1} parent=11 // pred_region
        _
      $region16: #{tpu_custom_call.1} parent=11 // pred_fallthru
        _
      // Predicated region
      $region17: #{tpu_custom_call.1} parent=11 // pred_check
        %p210 = pneg %p122
      $region18: #{tpu_custom_call.1} parent=11 // pred_check_branch
        %212 = sbr.rel (%p210) target = $region20
      $region19: #{tpu_custom_call.1} parent=11 // pred_region
        _
      $region20: #{tpu_custom_call.1} parent=11 // pred_fallthru
        _
      // Predicated region
      $region21: #{tpu_custom_call.1} parent=11 // pred_check
        %p213 = pneg %p143
      $region22: #{tpu_custom_call.1} parent=11 // pred_check_branch
        %215 = sbr.rel (%p213) target = $region24
      $region23: #{tpu_custom_call.1} parent=11 // pred_region
        _
      $region24: #{tpu_custom_call.1} parent=11 // pred_fallthru
        _
      // Predicated region
      $region25: #{tpu_custom_call.1} parent=11 // pred_check
        %p216 = pneg %p164
      $region26: #{tpu_custom_call.1} parent=11 // pred_check_branch
        %218 = sbr.rel (%p216) target = $region28
      $region27: #{tpu_custom_call.1} parent=11 // pred_region
        _
      $region28: #{tpu_custom_call.1} parent=11 // pred_fallthru
        _
    $region12: #{tpu_custom_call.1} parent=5 // pred_fallthru
      _
    %p219 = scmp.lt.s32.totalorder %s12, 2
    // Predicated region
    $region29: #{tpu_custom_call.1} parent=5 // pred_check
      %p220 = pneg %p219
    $region30: #{tpu_custom_call.1} parent=5 // pred_check_branch
      %222 = sbr.rel (%p220) target = $region32
    $region31: #{tpu_custom_call.1} parent=5 // pred_region
      // Predicated region
      $region33: #{tpu_custom_call.1} parent=31 // pred_check
        %p223 = pneg %p46
      $region34: #{tpu_custom_call.1} parent=31 // pred_check_branch
        %225 = sbr.rel (%p223) target = $region36
      $region35: #{tpu_custom_call.1} parent=31 // pred_region
        %s226 = smul.u32 16, %s20
        %p227 = scmp.lt.s32.totalorder %s19, 1
        %s228 = scalar_select %p227, %s19, 1
        %p229 = scmp.lt.s32.totalorder %s226, 15
        %s230 = scalar_select %p229, %s226, 15
        %s231 = smul.addr %s230, 2
        %s232 = smul.addr %s228, 32
        %s233 = sadd.s32 %s231, %s232
        %s234 = smul.addr %s233, 8
        %s235 = scalar_lea.vmem %s0, %s234
        %s236 = smul.u32 16, %s20
      $region36: #{tpu_custom_call.1} parent=31 // pred_fallthru
        _
      // Predicated region
      $region37: #{tpu_custom_call.1} parent=31 // pred_check
        %p237 = pneg %p74
      $region38: #{tpu_custom_call.1} parent=31 // pred_check_branch
        %239 = sbr.rel (%p237) target = $region40
      $region39: #{tpu_custom_call.1} parent=31 // pred_region
        %s240 = smul.u32 2, %s20
        %p241 = scmp.lt.s32.totalorder %s19, 1
        %s242 = scalar_select %p241, %s19, 1
        %p243 = scmp.lt.s32.totalorder %s240, 1
        %s244 = scalar_select %p243, %s240, 1
        %s245 = smul.addr %s244, 2
        %s246 = smul.addr %s242, 4
        %s247 = sadd.s32 %s245, %s246
        %s248 = smul.addr %s247, 8
        %s249 = scalar_lea.vmem %s1, %s248
        %s250 = smul.u32 2, %s20
      $region40: #{tpu_custom_call.1} parent=31 // pred_fallthru
        _
    $region32: #{tpu_custom_call.1} parent=5 // pred_fallthru
      _
    %p251 = scmp.le.s32.totalorder 1, %s12
    %p252 = scmp.lt.s32.totalorder %s12, 3
    %p253 = pnand %p251, %p252
    %p254 = pneg %p253
    // Predicated region
    $region41: #{tpu_custom_call.1} parent=5 // pred_check
      _
    $region42: #{tpu_custom_call.1} parent=5 // pred_check_branch
      %256 = sbr.rel (%p253) target = $region44
    $region43: #{tpu_custom_call.1} parent=5 // pred_region
      %s257 = ssub.s32 %s12, 1
      %s258 = smul.u32 16, %s22
      %p259 = scmp.lt.s32.totalorder %s21, 1
      %s260 = scalar_select %p259, %s21, 1
      %p261 = scmp.lt.s32.totalorder %s258, 15
      %s262 = scalar_select %p261, %s258, 15
      %s263 = smul.addr %s262, 2
      %s264 = smul.addr %s260, 32
      %s265 = sadd.s32 %s263, %s264
      %s266 = smul.addr %s265, 8
      %s267 = scalar_lea.vmem %s0, %s266
      %p268 = pneg %p52
      %p269 = pneg %p49
      %s270 = smul.u32 2, %s22
      %p271 = scmp.lt.s32.totalorder %s21, 1
      %s272 = scalar_select %p271, %s21, 1
      %p273 = scmp.lt.s32.totalorder %s270, 1
      %s274 = scalar_select %p273, %s270, 1
      %s275 = smul.addr %s274, 2
      %s276 = smul.addr %s272, 4
      %s277 = sadd.s32 %s275, %s276
      %s278 = smul.addr %s277, 8
      %s279 = scalar_lea.vmem %s1, %s278
      %p280 = pneg %p80
      %p281 = pneg %p77
      %p282 = pneg %p101
      %p283 = pneg %p98
      %p284 = pneg %p122
      %p285 = pneg %p119
      %p286 = pneg %p143
      %p287 = pneg %p140
      %p288 = pneg %p164
      %p289 = pneg %p161
      %p290 = pneg %p192
      %p291 = pneg %p189
      %s292 = smul.u32 16, %s22
      %p293 = scmp.lt.s32.totalorder %s21, 1
      %s294 = scalar_select %p293, %s21, 1
      %p295 = scmp.lt.s32.totalorder %s292, 15
      %s296 = scalar_select %p295, %s292, 15
      %s297 = smul.addr %s296, 2
      %s298 = smul.addr %s294, 32
      %s299 = sadd.s32 %s297, %s298
      %s300 = smul.addr %s299, 8
      %s301 = scalar_lea.vmem %s6, %s300
      %s302 = smul.u32 16, %s22
      %p303 = scmp.lt.s32.totalorder %s21, 1
      %s304 = scalar_select %p303, %s21, 1
      %p305 = scmp.lt.s32.totalorder %s302, 15
      %s306 = scalar_select %p305, %s302, 15
      %s307 = smul.addr %s306, 2
      %s308 = smul.addr %s304, 32
      %s309 = sadd.s32 %s307, %s308
      %s310 = smul.addr %s309, 8
      %s311 = scalar_lea.vmem %s0, %s310
      %s312 = smul.u32 16, %s22
      %s313 = smul.u32 2, %s22
      %p314 = scmp.lt.s32.totalorder %s21, 1
      %s315 = scalar_select %p314, %s21, 1
      %p316 = scmp.lt.s32.totalorder %s313, 1
      %s317 = scalar_select %p316, %s313, 1
      %s318 = smul.addr %s317, 2
      %s319 = smul.addr %s315, 4
      %s320 = sadd.s32 %s318, %s319
      %s321 = smul.addr %s320, 8
      %s322 = scalar_lea.vmem %s1, %s321
      %s323 = smul.u32 2, %s22
      %s324 = smul.u32 16, %s22
      %p325 = scmp.lt.s32.totalorder %s21, 1
      %s326 = scalar_select %p325, %s21, 1
      %p327 = scmp.lt.s32.totalorder %s324, 15
      %s328 = scalar_select %p327, %s324, 15
      %s329 = smul.addr %s328, 2
      %s330 = smul.addr %s326, 32
      %s331 = sadd.s32 %s329, %s330
      %s332 = smul.addr %s331, 8
      %s333 = scalar_lea.vmem %s6, %s332
      %s334 = smul.u32 16, %s22
      %v335 = vld [vmem:[%s311] sm:$0xff]
      %v336 = vld [vmem:[%s311 + $0x8] sm:$0xff]
      %v337 = vld [vmem:[%s311 + $0x10] sm:$0xff]
      %v338 = vld [vmem:[%s311 + $0x18] sm:$0xff]
      %v339 = vld [vmem:[%s311 + $0x20] sm:$0xff]
      %v340 = vld [vmem:[%s311 + $0x28] sm:$0xff]
      %v341 = vld [vmem:[%s311 + $0x30] sm:$0xff]
      %v342 = vld [vmem:[%s311 + $0x38] sm:$0xff]
      %v343 = vld [vmem:[%s311 + $0x40] sm:$0xff]
      %v344 = vld [vmem:[%s311 + $0x48] sm:$0xff]
      %v345 = vld [vmem:[%s311 + $0x50] sm:$0xff]
      %v346 = vld [vmem:[%s311 + $0x58] sm:$0xff]
      %v347 = vld [vmem:[%s311 + $0x60] sm:$0xff]
      %v348 = vld [vmem:[%s311 + $0x68] sm:$0xff]
      %v349 = vld [vmem:[%s311 + $0x70] sm:$0xff]
      %v350 = vld [vmem:[%s311 + $0x78] sm:$0xff]
      %v351 = vld [vmem:[%s311 + $0x80] sm:$0xff]
      %v352 = vld [vmem:[%s311 + $0x88] sm:$0xff]
      %v353 = vld [vmem:[%s311 + $0x90] sm:$0xff]
      %v354 = vld [vmem:[%s311 + $0x98] sm:$0xff]
      %v355 = vld [vmem:[%s311 + $0xa0] sm:$0xff]
      %v356 = vld [vmem:[%s311 + $0xa8] sm:$0xff]
      %v357 = vld [vmem:[%s311 + $0xb0] sm:$0xff]
      %v358 = vld [vmem:[%s311 + $0xb8] sm:$0xff]
      %v359 = vld [vmem:[%s311 + $0xc0] sm:$0xff]
      %v360 = vld [vmem:[%s311 + $0xc8] sm:$0xff]
      %v361 = vld [vmem:[%s311 + $0xd0] sm:$0xff]
      %v362 = vld [vmem:[%s311 + $0xd8] sm:$0xff]
      %v363 = vld [vmem:[%s311 + $0xe0] sm:$0xff]
      %v364 = vld [vmem:[%s311 + $0xe8] sm:$0xff]
      %v365 = vld [vmem:[%s311 + $0xf0] sm:$0xff]
      %v366 = vld [vmem:[%s311 + $0xf8] sm:$0xff]
      %v367 = vld [vmem:[%s2] sm:$0xf]
      %v368 = vld [vmem:[%s3] sm:$0x1]
      %v370 = vperm.slane %v368, 0
      %vm372 = vcmask 31744
      %v374 = vsel %vm372, %v335, 0
      %v377 = vsel %vm372, %v336, 0
      %v380 = vsel %vm372, %v337, 0
      %v383 = vsel %vm372, %v338, 0
      %v386 = vsel %vm372, %v339, 0
      %v389 = vsel %vm372, %v340, 0
      %v392 = vsel %vm372, %v341, 0
      %v395 = vsel %vm372, %v342, 0
      %v398 = vsel %vm372, %v343, 0
      %v401 = vsel %vm372, %v344, 0
      %v404 = vsel %vm372, %v345, 0
      %v407 = vsel %vm372, %v346, 0
      %v410 = vsel %vm372, %v347, 0
      %v413 = vsel %vm372, %v348, 0
      %v416 = vsel %vm372, %v349, 0
      %v419 = vsel %vm372, %v350, 0
      %v422 = vsel %vm372, %v351, 0
      %v425 = vsel %vm372, %v352, 0
      %v428 = vsel %vm372, %v353, 0
      %v431 = vsel %vm372, %v354, 0
      %v434 = vsel %vm372, %v355, 0
      %v437 = vsel %vm372, %v356, 0
      %v440 = vsel %vm372, %v357, 0
      %v443 = vsel %vm372, %v358, 0
      %v446 = vsel %vm372, %v359, 0
      %v449 = vsel %vm372, %v360, 0
      %v452 = vsel %vm372, %v361, 0
      %v455 = vsel %vm372, %v362, 0
      %v458 = vsel %vm372, %v363, 0
      %v461 = vsel %vm372, %v364, 0
      %v464 = vsel %vm372, %v365, 0
      %v467 = vsel %vm372, %v366, 0
      %vm469 = vcmask 1043456
      %v471 = vsel %vm469, %v367, 0
      %473 = vmatpush.msra.mxu0 0.0
      %474 = vmatpush.msra.mxu0 0.0
      %475 = vmatpush.msra.mxu0 0.0
      %476 = vmatpush.msra.mxu0 0.0
      %477 = vmatpush.msra.mxu0 0.0
      %478 = vmatpush.msra.mxu0 0.0
      %479 = vmatpush.msra.mxu0 0.0
      %480 = vmatpush.msra.mxu0 0.0
      %481 = vmatpush.msra.mxu0 0.0
      %482 = vmatpush.msra.mxu0 0.0
      %483 = vmatpush.msra.mxu0 0.0
      %484 = vmatpush.msra.mxu0 0.0
      %485 = vmatpush.msra.mxu0 0.0
      %486 = vmatpush.msra.mxu0 0.0
      %487 = vmatpush.msra.mxu0 0.0
      %488 = vmatpush.msra.mxu0 %v471
      %489 = vmatmul.f32.gmra.mxu0 %v374
      %v490 = vpop.f32.mrf.mxu0
      %v491 = vadd.f32 %v370, %v490
      %492 = vmatmul.f32.gmra.mxu0 %v377
      %v493 = vpop.f32.mrf.mxu0
      %v494 = vadd.f32 %v370, %v493
      %495 = vmatmul.f32.gmra.mxu0 %v380
      %v496 = vpop.f32.mrf.mxu0
      %v497 = vadd.f32 %v370, %v496
      %498 = vmatmul.f32.gmra.mxu0 %v383
      %v499 = vpop.f32.mrf.mxu0
      %v500 = vadd.f32 %v370, %v499
      %501 = vmatmul.f32.gmra.mxu0 %v386
      %v502 = vpop.f32.mrf.mxu0
      %v503 = vadd.f32 %v370, %v502
      %504 = vmatmul.f32.gmra.mxu0 %v389
      %v505 = vpop.f32.mrf.mxu0
      %v506 = vadd.f32 %v370, %v505
      %507 = vmatmul.f32.gmra.mxu0 %v392
      %v508 = vpop.f32.mrf.mxu0
      %v509 = vadd.f32 %v370, %v508
      %510 = vmatmul.f32.gmra.mxu0 %v395
      %v511 = vpop.f32.mrf.mxu0
      %v512 = vadd.f32 %v370, %v511
      %513 = vmatmul.f32.gmra.mxu0 %v398
      %v514 = vpop.f32.mrf.mxu0
      %v515 = vadd.f32 %v370, %v514
      %516 = vmatmul.f32.gmra.mxu0 %v401
      %v517 = vpop.f32.mrf.mxu0
      %v518 = vadd.f32 %v370, %v517
      %519 = vmatmul.f32.gmra.mxu0 %v404
      %v520 = vpop.f32.mrf.mxu0
      %v521 = vadd.f32 %v370, %v520
      %522 = vmatmul.f32.gmra.mxu0 %v407
      %v523 = vpop.f32.mrf.mxu0
      %v524 = vadd.f32 %v370, %v523
      %525 = vmatmul.f32.gmra.mxu0 %v410
      %v526 = vpop.f32.mrf.mxu0
      %v527 = vadd.f32 %v370, %v526
      %528 = vmatmul.f32.gmra.mxu0 %v413
      %v529 = vpop.f32.mrf.mxu0
      %v530 = vadd.f32 %v370, %v529
      %531 = vmatmul.f32.gmra.mxu0 %v416
      %v532 = vpop.f32.mrf.mxu0
      %v533 = vadd.f32 %v370, %v532
      %534 = vmatmul.f32.gmra.mxu0 %v419
      %v535 = vpop.f32.mrf.mxu0
      %v536 = vadd.f32 %v370, %v535
      %537 = vmatmul.f32.gmra.mxu0 %v422
      %v538 = vpop.f32.mrf.mxu0
      %v539 = vadd.f32 %v370, %v538
      %540 = vmatmul.f32.gmra.mxu0 %v425
      %v541 = vpop.f32.mrf.mxu0
      %v542 = vadd.f32 %v370, %v541
      %543 = vmatmul.f32.gmra.mxu0 %v428
      %v544 = vpop.f32.mrf.mxu0
      %v545 = vadd.f32 %v370, %v544
      %546 = vmatmul.f32.gmra.mxu0 %v431
      %v547 = vpop.f32.mrf.mxu0
      %v548 = vadd.f32 %v370, %v547
      %549 = vmatmul.f32.gmra.mxu0 %v434
      %v550 = vpop.f32.mrf.mxu0
      %v551 = vadd.f32 %v370, %v550
      %552 = vmatmul.f32.gmra.mxu0 %v437
      %v553 = vpop.f32.mrf.mxu0
      %v554 = vadd.f32 %v370, %v553
      %555 = vmatmul.f32.gmra.mxu0 %v440
      %v556 = vpop.f32.mrf.mxu0
      %v557 = vadd.f32 %v370, %v556
      %558 = vmatmul.f32.gmra.mxu0 %v443
      %v559 = vpop.f32.mrf.mxu0
      %v560 = vadd.f32 %v370, %v559
      %561 = vmatmul.f32.gmra.mxu0 %v446
      %v562 = vpop.f32.mrf.mxu0
      %v563 = vadd.f32 %v370, %v562
      %564 = vmatmul.f32.gmra.mxu0 %v449
      %v565 = vpop.f32.mrf.mxu0
      %v566 = vadd.f32 %v370, %v565
      %567 = vmatmul.f32.gmra.mxu0 %v452
      %v568 = vpop.f32.mrf.mxu0
      %v569 = vadd.f32 %v370, %v568
      %570 = vmatmul.f32.gmra.mxu0 %v455
      %v571 = vpop.f32.mrf.mxu0
      %v572 = vadd.f32 %v370, %v571
      %573 = vmatmul.f32.gmra.mxu0 %v458
      %v574 = vpop.f32.mrf.mxu0
      %v575 = vadd.f32 %v370, %v574
      %576 = vmatmul.f32.gmra.mxu0 %v461
      %v577 = vpop.f32.mrf.mxu0
      %v578 = vadd.f32 %v370, %v577
      %579 = vmatmul.f32.gmra.mxu0 %v464
      %v580 = vpop.f32.mrf.mxu0
      %v581 = vadd.f32 %v370, %v580
      %582 = vmatmul.f32.gmra.mxu0 %v467
      %v583 = vpop.f32.mrf.mxu0
      %v584 = vadd.f32 %v370, %v583
      %585 = vdwg.mxu0
      %vm586 = vcmp.gt.f32.partialorder %v491, 0.0
      %vm587 = vcmp.gt.f32.partialorder %v494, 0.0
      %vm588 = vcmp.gt.f32.partialorder %v497, 0.0
      %vm589 = vcmp.gt.f32.partialorder %v500, 0.0
      %vm590 = vcmp.gt.f32.partialorder %v503, 0.0
      %vm591 = vcmp.gt.f32.partialorder %v506, 0.0
      %vm592 = vcmp.gt.f32.partialorder %v509, 0.0
      %vm593 = vcmp.gt.f32.partialorder %v512, 0.0
      %vm594 = vcmp.gt.f32.partialorder %v515, 0.0
      %vm595 = vcmp.gt.f32.partialorder %v518, 0.0
      %vm596 = vcmp.gt.f32.partialorder %v521, 0.0
      %vm597 = vcmp.gt.f32.partialorder %v524, 0.0
      %vm598 = vcmp.gt.f32.partialorder %v527, 0.0
      %vm599 = vcmp.gt.f32.partialorder %v530, 0.0
      %vm600 = vcmp.gt.f32.partialorder %v533, 0.0
      %vm601 = vcmp.gt.f32.partialorder %v536, 0.0
      %vm602 = vcmp.gt.f32.partialorder %v539, 0.0
      %vm603 = vcmp.gt.f32.partialorder %v542, 0.0
      %vm604 = vcmp.gt.f32.partialorder %v545, 0.0
      %vm605 = vcmp.gt.f32.partialorder %v548, 0.0
      %vm606 = vcmp.gt.f32.partialorder %v551, 0.0
      %vm607 = vcmp.gt.f32.partialorder %v554, 0.0
      %vm608 = vcmp.gt.f32.partialorder %v557, 0.0
      %vm609 = vcmp.gt.f32.partialorder %v560, 0.0
      %vm610 = vcmp.gt.f32.partialorder %v563, 0.0
      %vm611 = vcmp.gt.f32.partialorder %v566, 0.0
      %vm612 = vcmp.gt.f32.partialorder %v569, 0.0
      %vm613 = vcmp.gt.f32.partialorder %v572, 0.0
      %vm614 = vcmp.gt.f32.partialorder %v575, 0.0
      %vm615 = vcmp.gt.f32.partialorder %v578, 0.0
      %vm616 = vcmp.gt.f32.partialorder %v581, 0.0
      %vm617 = vcmp.gt.f32.partialorder %v584, 0.0
      %v618 = vmul.f32 %v491, 0.1
      %v619 = vmul.f32 %v494, 0.1
      %v620 = vmul.f32 %v497, 0.1
      %v621 = vmul.f32 %v500, 0.1
      %v622 = vmul.f32 %v503, 0.1
      %v623 = vmul.f32 %v506, 0.1
      %v624 = vmul.f32 %v509, 0.1
      %v625 = vmul.f32 %v512, 0.1
      %v626 = vmul.f32 %v515, 0.1
      %v627 = vmul.f32 %v518, 0.1
      %v628 = vmul.f32 %v521, 0.1
      %v629 = vmul.f32 %v524, 0.1
      %v630 = vmul.f32 %v527, 0.1
      %v631 = vmul.f32 %v530, 0.1
      %v632 = vmul.f32 %v533, 0.1
      %v633 = vmul.f32 %v536, 0.1
      %v634 = vmul.f32 %v539, 0.1
      %v635 = vmul.f32 %v542, 0.1
      %v636 = vmul.f32 %v545, 0.1
      %v637 = vmul.f32 %v548, 0.1
      %v638 = vmul.f32 %v551, 0.1
      %v639 = vmul.f32 %v554, 0.1
      %v640 = vmul.f32 %v557, 0.1
      %v641 = vmul.f32 %v560, 0.1
      %v642 = vmul.f32 %v563, 0.1
      %v643 = vmul.f32 %v566, 0.1
      %v644 = vmul.f32 %v569, 0.1
      %v645 = vmul.f32 %v572, 0.1
      %v646 = vmul.f32 %v575, 0.1
      %v647 = vmul.f32 %v578, 0.1
      %v648 = vmul.f32 %v581, 0.1
      %v649 = vmul.f32 %v584, 0.1
      %v650 = vsel %vm586, %v491, %v618
      %v651 = vsel %vm587, %v494, %v619
      %v652 = vsel %vm588, %v497, %v620
      %v653 = vsel %vm589, %v500, %v621
      %v654 = vsel %vm590, %v503, %v622
      %v655 = vsel %vm591, %v506, %v623
      %v656 = vsel %vm592, %v509, %v624
      %v657 = vsel %vm593, %v512, %v625
      %v658 = vsel %vm594, %v515, %v626
      %v659 = vsel %vm595, %v518, %v627
      %v660 = vsel %vm596, %v521, %v628
      %v661 = vsel %vm597, %v524, %v629
      %v662 = vsel %vm598, %v527, %v630
      %v663 = vsel %vm599, %v530, %v631
      %v664 = vsel %vm600, %v533, %v632
      %v665 = vsel %vm601, %v536, %v633
      %v666 = vsel %vm602, %v539, %v634
      %v667 = vsel %vm603, %v542, %v635
      %v668 = vsel %vm604, %v545, %v636
      %v669 = vsel %vm605, %v548, %v637
      %v670 = vsel %vm606, %v551, %v638
      %v671 = vsel %vm607, %v554, %v639
      %v672 = vsel %vm608, %v557, %v640
      %v673 = vsel %vm609, %v560, %v641
      %v674 = vsel %vm610, %v563, %v642
      %v675 = vsel %vm611, %v566, %v643
      %v676 = vsel %vm612, %v569, %v644
      %v677 = vsel %vm613, %v572, %v645
      %v678 = vsel %vm614, %v575, %v646
      %v679 = vsel %vm615, %v578, %v647
      %v680 = vsel %vm616, %v581, %v648
      %v681 = vsel %vm617, %v584, %v649
      %v682 = vld [vmem:[%s322] sm:$0xff]
      %v683 = vld [vmem:[%s322 + $0x8] sm:$0xff]
      %v684 = vld [vmem:[%s322 + $0x10] sm:$0xff]
      %v685 = vld [vmem:[%s322 + $0x18] sm:$0xff]
      %v687 = vsel %vm372, %v682, 0
      %v690 = vsel %vm372, %v683, 0
      %v693 = vsel %vm372, %v684, 0
      %v696 = vsel %vm372, %v685, 0
      %698 = vmatpush.msra.mxu0 0.0
      %699 = vmatpush.msra.mxu0 0.0
      %700 = vmatpush.msra.mxu0 0.0
      %701 = vmatpush.msra.mxu0 0.0
      %702 = vmatpush.msra.mxu0 0.0
      %703 = vmatpush.msra.mxu0 0.0
      %704 = vmatpush.msra.mxu0 0.0
      %705 = vmatpush.msra.mxu0 0.0
      %706 = vmatpush.msra.mxu0 0.0
      %707 = vmatpush.msra.mxu0 0.0
      %708 = vmatpush.msra.mxu0 0.0
      %709 = vmatpush.msra.mxu0 0.0
      %710 = vmatpush.msra.mxu0 0.0
      %711 = vmatpush.msra.mxu0 0.0
      %712 = vmatpush.msra.mxu0 0.0
      %713 = vmatpush.msra.mxu0 %v471
      %714 = vmatmul.f32.gmra.mxu0 %v687
      %v715 = vpop.f32.mrf.mxu0
      %v716 = vadd.f32 %v370, %v715
      %717 = vmatmul.f32.gmra.mxu0 %v690
      %v718 = vpop.f32.mrf.mxu0
      %v719 = vadd.f32 %v370, %v718
      %720 = vmatmul.f32.gmra.mxu0 %v693
      %v721 = vpop.f32.mrf.mxu0
      %v722 = vadd.f32 %v370, %v721
      %723 = vmatmul.f32.gmra.mxu0 %v696
      %v724 = vpop.f32.mrf.mxu0
      %v725 = vadd.f32 %v370, %v724
      %726 = vdwg.mxu0
      %vm727 = vcmp.gt.f32.partialorder %v716, 0.0
      %vm728 = vcmp.gt.f32.partialorder %v719, 0.0
      %vm729 = vcmp.gt.f32.partialorder %v722, 0.0
      %vm730 = vcmp.gt.f32.partialorder %v725, 0.0
      %v731 = vmul.f32 %v716, 0.1
      %v732 = vmul.f32 %v719, 0.1
      %v733 = vmul.f32 %v722, 0.1
      %v734 = vmul.f32 %v725, 0.1
      %v735 = vsel %vm727, %v716, %v731
      %v736 = vsel %vm728, %v719, %v732
      %v737 = vsel %vm729, %v722, %v733
      %v738 = vsel %vm730, %v725, %v734
      %p739 = scmp.gt.s32.totalorder %s22, 0
      %s740 = scalar_select %p739, 1.0, 0.0
      %p741 = scmp.lt.s32.totalorder %s22, 0
      %s742 = scalar_select %p741, 1.0, 0.0
      %v743 = vstv %s740
      %v744 = vmul.f32 %v735, %v743
      %v745 = vmul.f32 %v736, %v743
      %v746 = vstv %s742
      %v747 = vmul.f32 %v737, %v746
      %v748 = vmul.f32 %v738, %v746
      %v749 = vlaneseq
      %v750 = vshrl.u32 %v749, 7
      %v751 = vadd.s32 %v750, 8
      %vm752 = vcmp.ne.s32.totalorder %v750, 0
      %vm753 = vcmp.ne.s32.totalorder %v751, 0
      %v754 = vsel %vm752, 1, 0
      %v755 = vsel %vm753, 1, 0
      %v756 = vcvt.s32.f32 %v754
      %v757 = vcvt.s32.f32 %v755
      %vm758 = vcmp.ne.s32.totalorder %v750, 15
      %vm759 = vcmp.ne.s32.totalorder %v751, 15
      %v760 = vsel %vm758, 1, 0
      %v761 = vsel %vm759, 1, 0
      %v762 = vcvt.s32.f32 %v760
      %v763 = vcvt.s32.f32 %v761
      %v764 = vrot.slane %v650, 7
      %v765 = vrot.slane %v652, 7
      %v766 = vrot.slane %v654, 7
      %v767 = vrot.slane %v656, 7
      %v768 = vrot.slane %v658, 7
      %v769 = vrot.slane %v660, 7
      %v770 = vrot.slane %v662, 7
      %v771 = vrot.slane %v664, 7
      %v772 = vrot.slane %v666, 7
      %v773 = vrot.slane %v668, 7
      %v774 = vrot.slane %v670, 7
      %v775 = vrot.slane %v672, 7
      %v776 = vrot.slane %v674, 7
      %v777 = vrot.slane %v676, 7
      %v778 = vrot.slane %v678, 7
      %v779 = vrot.slane %v680, 7
      %v780 = vrot.slane %v651, 7
      %v781 = vrot.slane %v653, 7
      %v782 = vrot.slane %v655, 7
      %v783 = vrot.slane %v657, 7
      %v784 = vrot.slane %v659, 7
      %v785 = vrot.slane %v661, 7
      %v786 = vrot.slane %v663, 7
      %v787 = vrot.slane %v665, 7
      %v788 = vrot.slane %v667, 7
      %v789 = vrot.slane %v669, 7
      %v790 = vrot.slane %v671, 7
      %v791 = vrot.slane %v673, 7
      %v792 = vrot.slane %v675, 7
      %v793 = vrot.slane %v677, 7
      %v794 = vrot.slane %v679, 7
      %v795 = vrot.slane %v681, 7
      %vm796 = vcmp.lt.s32.totalorder %v750, 1
      %v797 = vsel %vm796, %v764, %v780
      %v798 = vsel %vm796, %v765, %v781
      %v799 = vsel %vm796, %v766, %v782
      %v800 = vsel %vm796, %v767, %v783
      %v801 = vsel %vm796, %v768, %v784
      %v802 = vsel %vm796, %v769, %v785
      %v803 = vsel %vm796, %v770, %v786
      %v804 = vsel %vm796, %v771, %v787
      %v805 = vsel %vm796, %v772, %v788
      %v806 = vsel %vm796, %v773, %v789
      %v807 = vsel %vm796, %v774, %v790
      %v808 = vsel %vm796, %v775, %v791
      %v809 = vsel %vm796, %v776, %v792
      %v810 = vsel %vm796, %v777, %v793
      %v811 = vsel %vm796, %v778, %v794
      %v812 = vsel %vm796, %v779, %v795
      %v813 = vsel %vm796, %v780, %v764
      %v814 = vsel %vm796, %v781, %v765
      %v815 = vsel %vm796, %v782, %v766
      %v816 = vsel %vm796, %v783, %v767
      %v817 = vsel %vm796, %v784, %v768
      %v818 = vsel %vm796, %v785, %v769
      %v819 = vsel %vm796, %v786, %v770
      %v820 = vsel %vm796, %v787, %v771
      %v821 = vsel %vm796, %v788, %v772
      %v822 = vsel %vm796, %v789, %v773
      %v823 = vsel %vm796, %v790, %v774
      %v824 = vsel %vm796, %v791, %v775
      %v825 = vsel %vm796, %v792, %v776
      %v826 = vsel %vm796, %v793, %v777
      %v827 = vsel %vm796, %v794, %v778
      %v828 = vsel %vm796, %v795, %v779
      %v829 = vrot.slane %v650, 1
      %v830 = vrot.slane %v652, 1
      %v831 = vrot.slane %v654, 1
      %v832 = vrot.slane %v656, 1
      %v833 = vrot.slane %v658, 1
      %v834 = vrot.slane %v660, 1
      %v835 = vrot.slane %v662, 1
      %v836 = vrot.slane %v664, 1
      %v837 = vrot.slane %v666, 1
      %v838 = vrot.slane %v668, 1
      %v839 = vrot.slane %v670, 1
      %v840 = vrot.slane %v672, 1
      %v841 = vrot.slane %v674, 1
      %v842 = vrot.slane %v676, 1
      %v843 = vrot.slane %v678, 1
      %v844 = vrot.slane %v680, 1
      %v845 = vrot.slane %v651, 1
      %v846 = vrot.slane %v653, 1
      %v847 = vrot.slane %v655, 1
      %v848 = vrot.slane %v657, 1
      %v849 = vrot.slane %v659, 1
      %v850 = vrot.slane %v661, 1
      %v851 = vrot.slane %v663, 1
      %v852 = vrot.slane %v665, 1
      %v853 = vrot.slane %v667, 1
      %v854 = vrot.slane %v669, 1
      %v855 = vrot.slane %v671, 1
      %v856 = vrot.slane %v673, 1
      %v857 = vrot.slane %v675, 1
      %v858 = vrot.slane %v677, 1
      %v859 = vrot.slane %v679, 1
      %v860 = vrot.slane %v681, 1
      %vm861 = vcmp.lt.s32.totalorder %v750, 7
      %v862 = vsel %vm861, %v829, %v845
      %v863 = vsel %vm861, %v830, %v846
      %v864 = vsel %vm861, %v831, %v847
      %v865 = vsel %vm861, %v832, %v848
      %v866 = vsel %vm861, %v833, %v849
      %v867 = vsel %vm861, %v834, %v850
      %v868 = vsel %vm861, %v835, %v851
      %v869 = vsel %vm861, %v836, %v852
      %v870 = vsel %vm861, %v837, %v853
      %v871 = vsel %vm861, %v838, %v854
      %v872 = vsel %vm861, %v839, %v855
      %v873 = vsel %vm861, %v840, %v856
      %v874 = vsel %vm861, %v841, %v857
      %v875 = vsel %vm861, %v842, %v858
      %v876 = vsel %vm861, %v843, %v859
      %v877 = vsel %vm861, %v844, %v860
      %v878 = vsel %vm861, %v845, %v829
      %v879 = vsel %vm861, %v846, %v830
      %v880 = vsel %vm861, %v847, %v831
      %v881 = vsel %vm861, %v848, %v832
      %v882 = vsel %vm861, %v849, %v833
      %v883 = vsel %vm861, %v850, %v834
      %v884 = vsel %vm861, %v851, %v835
      %v885 = vsel %vm861, %v852, %v836
      %v886 = vsel %vm861, %v853, %v837
      %v887 = vsel %vm861, %v854, %v838
      %v888 = vsel %vm861, %v855, %v839
      %v889 = vsel %vm861, %v856, %v840
      %v890 = vsel %vm861, %v857, %v841
      %v891 = vsel %vm861, %v858, %v842
      %v892 = vsel %vm861, %v859, %v843
      %v893 = vsel %vm861, %v860, %v844
      %v894 = vmul.f32 %v813, %v756
      %v895 = vmul.f32 %v797, %v757
      %v896 = vmul.f32 %v814, %v756
      %v897 = vmul.f32 %v798, %v757
      %v898 = vmul.f32 %v815, %v756
      %v899 = vmul.f32 %v799, %v757
      %v900 = vmul.f32 %v816, %v756
      %v901 = vmul.f32 %v800, %v757
      %v902 = vmul.f32 %v817, %v756
      %v903 = vmul.f32 %v801, %v757
      %v904 = vmul.f32 %v818, %v756
      %v905 = vmul.f32 %v802, %v757
      %v906 = vmul.f32 %v819, %v756
      %v907 = vmul.f32 %v803, %v757
      %v908 = vmul.f32 %v820, %v756
      %v909 = vmul.f32 %v804, %v757
      %v910 = vmul.f32 %v821, %v756
      %v911 = vmul.f32 %v805, %v757
      %v912 = vmul.f32 %v822, %v756
      %v913 = vmul.f32 %v806, %v757
      %v914 = vmul.f32 %v823, %v756
      %v915 = vmul.f32 %v807, %v757
      %v916 = vmul.f32 %v824, %v756
      %v917 = vmul.f32 %v808, %v757
      %v918 = vmul.f32 %v825, %v756
      %v919 = vmul.f32 %v809, %v757
      %v920 = vmul.f32 %v826, %v756
      %v921 = vmul.f32 %v810, %v757
      %v922 = vmul.f32 %v827, %v756
      %v923 = vmul.f32 %v811, %v757
      %v924 = vmul.f32 %v828, %v756
      %v925 = vmul.f32 %v812, %v757
      %v926 = vmul.f32 %v862, %v762
      %v927 = vmul.f32 %v878, %v763
      %v928 = vmul.f32 %v863, %v762
      %v929 = vmul.f32 %v879, %v763
      %v930 = vmul.f32 %v864, %v762
      %v931 = vmul.f32 %v880, %v763
      %v932 = vmul.f32 %v865, %v762
      %v933 = vmul.f32 %v881, %v763
      %v934 = vmul.f32 %v866, %v762
      %v935 = vmul.f32 %v882, %v763
      %v936 = vmul.f32 %v867, %v762
      %v937 = vmul.f32 %v883, %v763
      %v938 = vmul.f32 %v868, %v762
      %v939 = vmul.f32 %v884, %v763
      %v940 = vmul.f32 %v869, %v762
      %v941 = vmul.f32 %v885, %v763
      %v942 = vmul.f32 %v870, %v762
      %v943 = vmul.f32 %v886, %v763
      %v944 = vmul.f32 %v871, %v762
      %v945 = vmul.f32 %v887, %v763
      %v946 = vmul.f32 %v872, %v762
      %v947 = vmul.f32 %v888, %v763
      %v948 = vmul.f32 %v873, %v762
      %v949 = vmul.f32 %v889, %v763
      %v950 = vmul.f32 %v874, %v762
      %v951 = vmul.f32 %v890, %v763
      %v952 = vmul.f32 %v875, %v762
      %v953 = vmul.f32 %v891, %v763
      %v954 = vmul.f32 %v876, %v762
      %v955 = vmul.f32 %v892, %v763
      %v956 = vmul.f32 %v877, %v762
      %v957 = vmul.f32 %v893, %v763
      %990 = vrot.lane.b32.xlu0 %v650, 2
      %v991 = vpop.permute.xlu0 %990
      %992 = vrot.lane.b32.xlu0 %v651, 2
      %v993 = vpop.permute.xlu0 %992
      %994 = vrot.lane.b32.xlu0 %v652, 2
      %v995 = vpop.permute.xlu0 %994
      %996 = vrot.lane.b32.xlu0 %v653, 2
      %v997 = vpop.permute.xlu0 %996
      %998 = vrot.lane.b32.xlu0 %v654, 2
      %v999 = vpop.permute.xlu0 %998
      %1000 = vrot.lane.b32.xlu0 %v655, 2
      %v1001 = vpop.permute.xlu0 %1000
      %1002 = vrot.lane.b32.xlu0 %v656, 2
      %v1003 = vpop.permute.xlu0 %1002
      %1004 = vrot.lane.b32.xlu0 %v657, 2
      %v1005 = vpop.permute.xlu0 %1004
      %1006 = vrot.lane.b32.xlu0 %v658, 2
      %v1007 = vpop.permute.xlu0 %1006
      %1008 = vrot.lane.b32.xlu0 %v659, 2
      %v1009 = vpop.permute.xlu0 %1008
      %1010 = vrot.lane.b32.xlu0 %v660, 2
      %v1011 = vpop.permute.xlu0 %1010
      %1012 = vrot.lane.b32.xlu0 %v661, 2
      %v1013 = vpop.permute.xlu0 %1012
      %1014 = vrot.lane.b32.xlu0 %v662, 2
      %v1015 = vpop.permute.xlu0 %1014
      %1016 = vrot.lane.b32.xlu0 %v663, 2
      %v1017 = vpop.permute.xlu0 %1016
      %1018 = vrot.lane.b32.xlu0 %v664, 2
      %v1019 = vpop.permute.xlu0 %1018
      %1020 = vrot.lane.b32.xlu0 %v665, 2
      %v1021 = vpop.permute.xlu0 %1020
      %1022 = vrot.lane.b32.xlu0 %v666, 2
      %v1023 = vpop.permute.xlu0 %1022
      %1024 = vrot.lane.b32.xlu0 %v667, 2
      %v1025 = vpop.permute.xlu0 %1024
      %1026 = vrot.lane.b32.xlu0 %v668, 2
      %v1027 = vpop.permute.xlu0 %1026
      %1028 = vrot.lane.b32.xlu0 %v669, 2
      %v1029 = vpop.permute.xlu0 %1028
      %1030 = vrot.lane.b32.xlu0 %v670, 2
      %v1031 = vpop.permute.xlu0 %1030
      %1032 = vrot.lane.b32.xlu0 %v671, 2
      %v1033 = vpop.permute.xlu0 %1032
      %1034 = vrot.lane.b32.xlu0 %v672, 2
      %v1035 = vpop.permute.xlu0 %1034
      %1036 = vrot.lane.b32.xlu0 %v673, 2
      %v1037 = vpop.permute.xlu0 %1036
      %1038 = vrot.lane.b32.xlu0 %v674, 2
      %v1039 = vpop.permute.xlu0 %1038
      %1040 = vrot.lane.b32.xlu0 %v675, 2
      %v1041 = vpop.permute.xlu0 %1040
      %1042 = vrot.lane.b32.xlu0 %v676, 2
      %v1043 = vpop.permute.xlu0 %1042
      %1044 = vrot.lane.b32.xlu0 %v677, 2
      %v1045 = vpop.permute.xlu0 %1044
      %1046 = vrot.lane.b32.xlu0 %v678, 2
      %v1047 = vpop.permute.xlu0 %1046
      %1048 = vrot.lane.b32.xlu0 %v679, 2
      %v1049 = vpop.permute.xlu0 %1048
      %1050 = vrot.lane.b32.xlu0 %v680, 2
      %v1051 = vpop.permute.xlu0 %1050
      %1052 = vrot.lane.b32.xlu0 %v681, 2
      %v1053 = vpop.permute.xlu0 %1052
      %1118 = vrot.lane.b32.xlu0 %v926, 4
      %v1119 = vpop.permute.xlu0 %1118
      %1120 = vrot.lane.b32.xlu0 %v927, 4
      %v1121 = vpop.permute.xlu0 %1120
      %1122 = vrot.lane.b32.xlu0 %v928, 4
      %v1123 = vpop.permute.xlu0 %1122
      %1124 = vrot.lane.b32.xlu0 %v929, 4
      %v1125 = vpop.permute.xlu0 %1124
      %1126 = vrot.lane.b32.xlu0 %v930, 4
      %v1127 = vpop.permute.xlu0 %1126
      %1128 = vrot.lane.b32.xlu0 %v931, 4
      %v1129 = vpop.permute.xlu0 %1128
      %1130 = vrot.lane.b32.xlu0 %v932, 4
      %v1131 = vpop.permute.xlu0 %1130
      %1132 = vrot.lane.b32.xlu0 %v933, 4
      %v1133 = vpop.permute.xlu0 %1132
      %1134 = vrot.lane.b32.xlu0 %v934, 4
      %v1135 = vpop.permute.xlu0 %1134
      %1136 = vrot.lane.b32.xlu0 %v935, 4
      %v1137 = vpop.permute.xlu0 %1136
      %1138 = vrot.lane.b32.xlu0 %v936, 4
      %v1139 = vpop.permute.xlu0 %1138
      %1140 = vrot.lane.b32.xlu0 %v937, 4
      %v1141 = vpop.permute.xlu0 %1140
      %1142 = vrot.lane.b32.xlu0 %v938, 4
      %v1143 = vpop.permute.xlu0 %1142
      %1144 = vrot.lane.b32.xlu0 %v939, 4
      %v1145 = vpop.permute.xlu0 %1144
      %1146 = vrot.lane.b32.xlu0 %v940, 4
      %v1147 = vpop.permute.xlu0 %1146
      %1148 = vrot.lane.b32.xlu0 %v941, 4
      %v1149 = vpop.permute.xlu0 %1148
      %1150 = vrot.lane.b32.xlu0 %v942, 4
      %v1151 = vpop.permute.xlu0 %1150
      %1152 = vrot.lane.b32.xlu0 %v943, 4
      %v1153 = vpop.permute.xlu0 %1152
      %1154 = vrot.lane.b32.xlu0 %v944, 4
      %v1155 = vpop.permute.xlu0 %1154
      %1156 = vrot.lane.b32.xlu0 %v945, 4
      %v1157 = vpop.permute.xlu0 %1156
      %1158 = vrot.lane.b32.xlu0 %v946, 4
      %v1159 = vpop.permute.xlu0 %1158
      %1160 = vrot.lane.b32.xlu0 %v947, 4
      %v1161 = vpop.permute.xlu0 %1160
      %1162 = vrot.lane.b32.xlu0 %v948, 4
      %v1163 = vpop.permute.xlu0 %1162
      %1164 = vrot.lane.b32.xlu0 %v949, 4
      %v1165 = vpop.permute.xlu0 %1164
      %1166 = vrot.lane.b32.xlu0 %v950, 4
      %v1167 = vpop.permute.xlu0 %1166
      %1168 = vrot.lane.b32.xlu0 %v951, 4
      %v1169 = vpop.permute.xlu0 %1168
      %1170 = vrot.lane.b32.xlu0 %v952, 4
      %v1171 = vpop.permute.xlu0 %1170
      %1172 = vrot.lane.b32.xlu0 %v953, 4
      %v1173 = vpop.permute.xlu0 %1172
      %1174 = vrot.lane.b32.xlu0 %v954, 4
      %v1175 = vpop.permute.xlu0 %1174
      %1176 = vrot.lane.b32.xlu0 %v955, 4
      %v1177 = vpop.permute.xlu0 %1176
      %1178 = vrot.lane.b32.xlu0 %v956, 4
      %v1179 = vpop.permute.xlu0 %1178
      %1180 = vrot.lane.b32.xlu0 %v957, 4
      %v1181 = vpop.permute.xlu0 %1180
      %vm1214 = vcmask 15360
      %v1215 = vsel %vm1214, %v894, %v991
      %v1216 = vsel %vm1214, %v895, %v993
      %v1217 = vsel %vm1214, %v896, %v995
      %v1218 = vsel %vm1214, %v897, %v997
      %v1219 = vsel %vm1214, %v898, %v999
      %v1220 = vsel %vm1214, %v899, %v1001
      %v1221 = vsel %vm1214, %v900, %v1003
      %v1222 = vsel %vm1214, %v901, %v1005
      %v1223 = vsel %vm1214, %v902, %v1007
      %v1224 = vsel %vm1214, %v903, %v1009
      %v1225 = vsel %vm1214, %v904, %v1011
      %v1226 = vsel %vm1214, %v905, %v1013
      %v1227 = vsel %vm1214, %v906, %v1015
      %v1228 = vsel %vm1214, %v907, %v1017
      %v1229 = vsel %vm1214, %v908, %v1019
      %v1230 = vsel %vm1214, %v909, %v1021
      %v1231 = vsel %vm1214, %v910, %v1023
      %v1232 = vsel %vm1214, %v911, %v1025
      %v1233 = vsel %vm1214, %v912, %v1027
      %v1234 = vsel %vm1214, %v913, %v1029
      %v1235 = vsel %vm1214, %v914, %v1031
      %v1236 = vsel %vm1214, %v915, %v1033
      %v1237 = vsel %vm1214, %v916, %v1035
      %v1238 = vsel %vm1214, %v917, %v1037
      %v1239 = vsel %vm1214, %v918, %v1039
      %v1240 = vsel %vm1214, %v919, %v1041
      %v1241 = vsel %vm1214, %v920, %v1043
      %v1242 = vsel %vm1214, %v921, %v1045
      %v1243 = vsel %vm1214, %v922, %v1047
      %v1244 = vsel %vm1214, %v923, %v1049
      %v1245 = vsel %vm1214, %v924, %v1051
      %v1246 = vsel %vm1214, %v925, %v1053
      %v1247 = vsel %vm372, %v1215, %v1119
      %v1248 = vsel %vm372, %v1216, %v1121
      %v1249 = vsel %vm372, %v1217, %v1123
      %v1250 = vsel %vm372, %v1218, %v1125
      %v1251 = vsel %vm372, %v1219, %v1127
      %v1252 = vsel %vm372, %v1220, %v1129
      %v1253 = vsel %vm372, %v1221, %v1131
      %v1254 = vsel %vm372, %v1222, %v1133
      %v1255 = vsel %vm372, %v1223, %v1135
      %v1256 = vsel %vm372, %v1224, %v1137
      %v1257 = vsel %vm372, %v1225, %v1139
      %v1258 = vsel %vm372, %v1226, %v1141
      %v1259 = vsel %vm372, %v1227, %v1143
      %v1260 = vsel %vm372, %v1228, %v1145
      %v1261 = vsel %vm372, %v1229, %v1147
      %v1262 = vsel %vm372, %v1230, %v1149
      %v1263 = vsel %vm372, %v1231, %v1151
      %v1264 = vsel %vm372, %v1232, %v1153
      %v1265 = vsel %vm372, %v1233, %v1155
      %v1266 = vsel %vm372, %v1234, %v1157
      %v1267 = vsel %vm372, %v1235, %v1159
      %v1268 = vsel %vm372, %v1236, %v1161
      %v1269 = vsel %vm372, %v1237, %v1163
      %v1270 = vsel %vm372, %v1238, %v1165
      %v1271 = vsel %vm372, %v1239, %v1167
      %v1272 = vsel %vm372, %v1240, %v1169
      %v1273 = vsel %vm372, %v1241, %v1171
      %v1274 = vsel %vm372, %v1242, %v1173
      %v1275 = vsel %vm372, %v1243, %v1175
      %v1276 = vsel %vm372, %v1244, %v1177
      %v1277 = vsel %vm372, %v1245, %v1179
      %v1278 = vsel %vm372, %v1246, %v1181
      %s1279 = scalar_lea.vmem [#allocation2], 16
      %vm1280 = vcmask 48128
      %1281 = vst.msk [vmem:[%s1279] sm:$0xff] %vm1280, %v1247
      %1282 = vst.msk [vmem:[%s1279 + $0x8] sm:$0xff] %vm1280, %v1248
      %1283 = vst.msk [vmem:[%s1279 + $0x10] sm:$0xff] %vm1280, %v1249
      %1284 = vst.msk [vmem:[%s1279 + $0x18] sm:$0xff] %vm1280, %v1250
      %1285 = vst.msk [vmem:[%s1279 + $0x20] sm:$0xff] %vm1280, %v1251
      %1286 = vst.msk [vmem:[%s1279 + $0x28] sm:$0xff] %vm1280, %v1252
      %1287 = vst.msk [vmem:[%s1279 + $0x30] sm:$0xff] %vm1280, %v1253
      %1288 = vst.msk [vmem:[%s1279 + $0x38] sm:$0xff] %vm1280, %v1254
      %1289 = vst.msk [vmem:[%s1279 + $0x40] sm:$0xff] %vm1280, %v1255
      %1290 = vst.msk [vmem:[%s1279 + $0x48] sm:$0xff] %vm1280, %v1256
      %1291 = vst.msk [vmem:[%s1279 + $0x50] sm:$0xff] %vm1280, %v1257
      %1292 = vst.msk [vmem:[%s1279 + $0x58] sm:$0xff] %vm1280, %v1258
      %1293 = vst.msk [vmem:[%s1279 + $0x60] sm:$0xff] %vm1280, %v1259
      %1294 = vst.msk [vmem:[%s1279 + $0x68] sm:$0xff] %vm1280, %v1260
      %1295 = vst.msk [vmem:[%s1279 + $0x70] sm:$0xff] %vm1280, %v1261
      %1296 = vst.msk [vmem:[%s1279 + $0x78] sm:$0xff] %vm1280, %v1262
      %1297 = vst.msk [vmem:[%s1279 + $0x80] sm:$0xff] %vm1280, %v1263
      %1298 = vst.msk [vmem:[%s1279 + $0x88] sm:$0xff] %vm1280, %v1264
      %1299 = vst.msk [vmem:[%s1279 + $0x90] sm:$0xff] %vm1280, %v1265
      %1300 = vst.msk [vmem:[%s1279 + $0x98] sm:$0xff] %vm1280, %v1266
      %1301 = vst.msk [vmem:[%s1279 + $0xa0] sm:$0xff] %vm1280, %v1267
      %1302 = vst.msk [vmem:[%s1279 + $0xa8] sm:$0xff] %vm1280, %v1268
      %1303 = vst.msk [vmem:[%s1279 + $0xb0] sm:$0xff] %vm1280, %v1269
      %1304 = vst.msk [vmem:[%s1279 + $0xb8] sm:$0xff] %vm1280, %v1270
      %1305 = vst.msk [vmem:[%s1279 + $0xc0] sm:$0xff] %vm1280, %v1271
      %1306 = vst.msk [vmem:[%s1279 + $0xc8] sm:$0xff] %vm1280, %v1272
      %1307 = vst.msk [vmem:[%s1279 + $0xd0] sm:$0xff] %vm1280, %v1273
      %1308 = vst.msk [vmem:[%s1279 + $0xd8] sm:$0xff] %vm1280, %v1274
      %1309 = vst.msk [vmem:[%s1279 + $0xe0] sm:$0xff] %vm1280, %v1275
      %1310 = vst.msk [vmem:[%s1279 + $0xe8] sm:$0xff] %vm1280, %v1276
      %1311 = vst.msk [vmem:[%s1279 + $0xf0] sm:$0xff] %vm1280, %v1277
      %1312 = vst.msk [vmem:[%s1279 + $0xf8] sm:$0xff] %vm1280, %v1278
      %v1313 = vrot.slane %v744, 7
      %v1314 = vrot.slane %v745, 7
      %v1315 = vsel %vm796, %v1313, %v1314
      %v1316 = vsel %vm796, %v1314, %v1313
      %v1317 = vrot.slane %v744, 1
      %v1318 = vrot.slane %v745, 1
      %v1319 = vsel %vm861, %v1317, %v1318
      %v1320 = vsel %vm861, %v1318, %v1317
      %v1321 = vmul.f32 %v1316, %v756
      %v1322 = vmul.f32 %v1315, %v757
      %v1323 = vmul.f32 %v1319, %v762
      %v1324 = vmul.f32 %v1320, %v763
      %1327 = vrot.lane.b32.xlu0 %v744, 2
      %v1328 = vpop.permute.xlu0 %1327
      %1329 = vrot.lane.b32.xlu0 %v745, 2
      %v1330 = vpop.permute.xlu0 %1329
      %1335 = vrot.lane.b32.xlu0 %v1323, 4
      %v1336 = vpop.permute.xlu0 %1335
      %1337 = vrot.lane.b32.xlu0 %v1324, 4
      %v1338 = vpop.permute.xlu0 %1337
      %v1341 = vsel %vm1214, %v1321, %v1328
      %v1342 = vsel %vm1214, %v1322, %v1330
      %v1343 = vsel %vm372, %v1341, %v1336
      %v1344 = vsel %vm372, %v1342, %v1338
      %1345 = vst.msk [vmem:[#allocation2] sm:$0xff] %vm1280, %v1343
      %1346 = vst.msk [vmem:[#allocation2 + $0x8] sm:$0xff] %vm1280, %v1344
      %v1347 = vrot.slane %v747, 7
      %v1348 = vrot.slane %v748, 7
      %v1349 = vsel %vm796, %v1347, %v1348
      %v1350 = vsel %vm796, %v1348, %v1347
      %v1351 = vrot.slane %v747, 1
      %v1352 = vrot.slane %v748, 1
      %v1353 = vsel %vm861, %v1351, %v1352
      %v1354 = vsel %vm861, %v1352, %v1351
      %v1355 = vmul.f32 %v1350, %v756
      %v1356 = vmul.f32 %v1349, %v757
      %v1357 = vmul.f32 %v1353, %v762
      %v1358 = vmul.f32 %v1354, %v763
      %1361 = vrot.lane.b32.xlu0 %v747, 2
      %v1362 = vpop.permute.xlu0 %1361
      %1363 = vrot.lane.b32.xlu0 %v748, 2
      %v1364 = vpop.permute.xlu0 %1363
      %1369 = vrot.lane.b32.xlu0 %v1357, 4
      %v1370 = vpop.permute.xlu0 %1369
      %1371 = vrot.lane.b32.xlu0 %v1358, 4
      %v1372 = vpop.permute.xlu0 %1371
      %v1375 = vsel %vm1214, %v1355, %v1362
      %v1376 = vsel %vm1214, %v1356, %v1364
      %v1377 = vsel %vm372, %v1375, %v1370
      %v1378 = vsel %vm372, %v1376, %v1372
      %s1379 = scalar_lea.vmem [#allocation2], 272
      %1380 = vst.msk [vmem:[%s1379] sm:$0xff] %vm1280, %v1377
      %1381 = vst.msk [vmem:[%s1379 + $0x8] sm:$0xff] %vm1280, %v1378
      %v1382 = vld [vmem:[#allocation2] sm:$0xff]
      %v1383 = vld [vmem:[#allocation2 + $0x8] sm:$0xff]
      %v1384 = vld [vmem:[#allocation2 + $0x10] sm:$0xff]
      %v1385 = vld [vmem:[#allocation2 + $0x18] sm:$0xff]
      %v1386 = vld [vmem:[#allocation2 + $0x20] sm:$0xff]
      %v1387 = vld [vmem:[#allocation2 + $0x28] sm:$0xff]
      %v1388 = vld [vmem:[#allocation2 + $0x30] sm:$0xff]
      %v1389 = vld [vmem:[#allocation2 + $0x38] sm:$0xff]
      %v1390 = vld [vmem:[#allocation2 + $0x40] sm:$0xff]
      %v1391 = vld [vmem:[#allocation2 + $0x48] sm:$0xff]
      %v1392 = vld [vmem:[#allocation2 + $0x50] sm:$0xff]
      %v1393 = vld [vmem:[#allocation2 + $0x58] sm:$0xff]
      %v1394 = vld [vmem:[#allocation2 + $0x60] sm:$0xff]
      %v1395 = vld [vmem:[#allocation2 + $0x68] sm:$0xff]
      %v1396 = vld [vmem:[#allocation2 + $0x70] sm:$0xff]
      %v1397 = vld [vmem:[#allocation2 + $0x78] sm:$0xff]
      %v1398 = vld [vmem:[#allocation2 + $0x80] sm:$0xff]
      %v1399 = vld [vmem:[#allocation2 + $0x88] sm:$0xff]
      %v1400 = vld [vmem:[#allocation2 + $0x90] sm:$0xff]
      %v1401 = vld [vmem:[#allocation2 + $0x98] sm:$0xff]
      %v1402 = vld [vmem:[#allocation2 + $0xa0] sm:$0xff]
      %v1403 = vld [vmem:[#allocation2 + $0xa8] sm:$0xff]
      %v1404 = vld [vmem:[#allocation2 + $0xb0] sm:$0xff]
      %v1405 = vld [vmem:[#allocation2 + $0xb8] sm:$0xff]
      %v1406 = vld [vmem:[#allocation2 + $0xc0] sm:$0xff]
      %v1407 = vld [vmem:[#allocation2 + $0xc8] sm:$0xff]
      %v1408 = vld [vmem:[#allocation2 + $0xd0] sm:$0xff]
      %v1409 = vld [vmem:[#allocation2 + $0xd8] sm:$0xff]
      %v1410 = vld [vmem:[#allocation2 + $0xe0] sm:$0xff]
      %v1411 = vld [vmem:[#allocation2 + $0xe8] sm:$0xff]
      %v1412 = vld [vmem:[#allocation2 + $0xf0] sm:$0xff]
      %v1413 = vld [vmem:[#allocation2 + $0xf8] sm:$0xff]
      %v1414 = vld [vmem:[%s4] sm:$0x3f]
      %v1415 = vld [vmem:[%s1279] sm:$0xff]
      %v1416 = vld [vmem:[%s1279 + $0x8] sm:$0xff]
      %v1417 = vld [vmem:[%s1279 + $0x10] sm:$0xff]
      %v1418 = vld [vmem:[%s1279 + $0x18] sm:$0xff]
      %v1419 = vld [vmem:[%s1279 + $0x20] sm:$0xff]
      %v1420 = vld [vmem:[%s1279 + $0x28] sm:$0xff]
      %v1421 = vld [vmem:[%s1279 + $0x30] sm:$0xff]
      %v1422 = vld [vmem:[%s1279 + $0x38] sm:$0xff]
      %v1423 = vld [vmem:[%s1279 + $0x40] sm:$0xff]
      %v1424 = vld [vmem:[%s1279 + $0x48] sm:$0xff]
      %v1425 = vld [vmem:[%s1279 + $0x50] sm:$0xff]
      %v1426 = vld [vmem:[%s1279 + $0x58] sm:$0xff]
      %v1427 = vld [vmem:[%s1279 + $0x60] sm:$0xff]
      %v1428 = vld [vmem:[%s1279 + $0x68] sm:$0xff]
      %v1429 = vld [vmem:[%s1279 + $0x70] sm:$0xff]
      %v1430 = vld [vmem:[%s1279 + $0x78] sm:$0xff]
      %v1431 = vld [vmem:[%s1279 + $0x80] sm:$0xff]
      %v1432 = vld [vmem:[%s1279 + $0x88] sm:$0xff]
      %v1433 = vld [vmem:[%s1279 + $0x90] sm:$0xff]
      %v1434 = vld [vmem:[%s1279 + $0x98] sm:$0xff]
      %v1435 = vld [vmem:[%s1279 + $0xa0] sm:$0xff]
      %v1436 = vld [vmem:[%s1279 + $0xa8] sm:$0xff]
      %v1437 = vld [vmem:[%s1279 + $0xb0] sm:$0xff]
      %v1438 = vld [vmem:[%s1279 + $0xb8] sm:$0xff]
      %v1439 = vld [vmem:[%s1279 + $0xc0] sm:$0xff]
      %v1440 = vld [vmem:[%s1279 + $0xc8] sm:$0xff]
      %v1441 = vld [vmem:[%s1279 + $0xd0] sm:$0xff]
      %v1442 = vld [vmem:[%s1279 + $0xd8] sm:$0xff]
      %v1443 = vld [vmem:[%s1279 + $0xe0] sm:$0xff]
      %v1444 = vld [vmem:[%s1279 + $0xe8] sm:$0xff]
      %v1445 = vld [vmem:[%s1279 + $0xf0] sm:$0xff]
      %v1446 = vld [vmem:[%s1279 + $0xf8] sm:$0xff]
      %s1447 = scalar_lea.vmem %s4, 8
      %v1448 = vld [vmem:[%s1447] sm:$0x3f]
      %v1450 = vsel %vm1280, %v1415, 0
      %v1453 = vsel %vm1280, %v1416, 0
      %v1456 = vsel %vm1280, %v1417, 0
      %v1459 = vsel %vm1280, %v1418, 0
      %v1462 = vsel %vm1280, %v1419, 0
      %v1465 = vsel %vm1280, %v1420, 0
      %v1468 = vsel %vm1280, %v1421, 0
      %v1471 = vsel %vm1280, %v1422, 0
      %v1474 = vsel %vm1280, %v1423, 0
      %v1477 = vsel %vm1280, %v1424, 0
      %v1480 = vsel %vm1280, %v1425, 0
      %v1483 = vsel %vm1280, %v1426, 0
      %v1486 = vsel %vm1280, %v1427, 0
      %v1489 = vsel %vm1280, %v1428, 0
      %v1492 = vsel %vm1280, %v1429, 0
      %v1495 = vsel %vm1280, %v1430, 0
      %v1498 = vsel %vm1280, %v1431, 0
      %v1501 = vsel %vm1280, %v1432, 0
      %v1504 = vsel %vm1280, %v1433, 0
      %v1507 = vsel %vm1280, %v1434, 0
      %v1510 = vsel %vm1280, %v1435, 0
      %v1513 = vsel %vm1280, %v1436, 0
      %v1516 = vsel %vm1280, %v1437, 0
      %v1519 = vsel %vm1280, %v1438, 0
      %v1522 = vsel %vm1280, %v1439, 0
      %v1525 = vsel %vm1280, %v1440, 0
      %v1528 = vsel %vm1280, %v1441, 0
      %v1531 = vsel %vm1280, %v1442, 0
      %v1534 = vsel %vm1280, %v1443, 0
      %v1537 = vsel %vm1280, %v1444, 0
      %v1540 = vsel %vm1280, %v1445, 0
      %v1543 = vsel %vm1280, %v1446, 0
      %vm1545 = vcmask 1045504
      %v1547 = vsel %vm1545, %v1448, 0
      %1549 = vmatpush.msra.mxu0 0.0
      %1550 = vmatpush.msra.mxu0 0.0
      %1551 = vmatpush.msra.mxu0 0.0
      %1552 = vmatpush.msra.mxu0 0.0
      %1553 = vmatpush.msra.mxu0 0.0
      %1554 = vmatpush.msra.mxu0 0.0
      %1555 = vmatpush.msra.mxu0 0.0
      %1556 = vmatpush.msra.mxu0 0.0
      %1557 = vmatpush.msra.mxu0 0.0
      %1558 = vmatpush.msra.mxu0 0.0
      %1559 = vmatpush.msra.mxu0 0.0
      %1560 = vmatpush.msra.mxu0 0.0
      %1561 = vmatpush.msra.mxu0 0.0
      %1562 = vmatpush.msra.mxu0 0.0
      %1563 = vmatpush.msra.mxu0 0.0
      %1564 = vmatpush.msra.mxu0 %v1547
      %1565 = vmatmul.f32.gmra.mxu0 %v1450
      %v1566 = vpop.f32.mrf.mxu0
      %v1567 = vadd.f32 0.0, %v1566
      %1568 = vmatmul.f32.gmra.mxu0 %v1453
      %v1569 = vpop.f32.mrf.mxu0
      %v1570 = vadd.f32 0.0, %v1569
      %1571 = vmatmul.f32.gmra.mxu0 %v1456
      %v1572 = vpop.f32.mrf.mxu0
      %v1573 = vadd.f32 0.0, %v1572
      %1574 = vmatmul.f32.gmra.mxu0 %v1459
      %v1575 = vpop.f32.mrf.mxu0
      %v1576 = vadd.f32 0.0, %v1575
      %1577 = vmatmul.f32.gmra.mxu0 %v1462
      %v1578 = vpop.f32.mrf.mxu0
      %v1579 = vadd.f32 0.0, %v1578
      %1580 = vmatmul.f32.gmra.mxu0 %v1465
      %v1581 = vpop.f32.mrf.mxu0
      %v1582 = vadd.f32 0.0, %v1581
      %1583 = vmatmul.f32.gmra.mxu0 %v1468
      %v1584 = vpop.f32.mrf.mxu0
      %v1585 = vadd.f32 0.0, %v1584
      %1586 = vmatmul.f32.gmra.mxu0 %v1471
      %v1587 = vpop.f32.mrf.mxu0
      %v1588 = vadd.f32 0.0, %v1587
      %1589 = vmatmul.f32.gmra.mxu0 %v1474
      %v1590 = vpop.f32.mrf.mxu0
      %v1591 = vadd.f32 0.0, %v1590
      %1592 = vmatmul.f32.gmra.mxu0 %v1477
      %v1593 = vpop.f32.mrf.mxu0
      %v1594 = vadd.f32 0.0, %v1593
      %1595 = vmatmul.f32.gmra.mxu0 %v1480
      %v1596 = vpop.f32.mrf.mxu0
      %v1597 = vadd.f32 0.0, %v1596
      %1598 = vmatmul.f32.gmra.mxu0 %v1483
      %v1599 = vpop.f32.mrf.mxu0
      %v1600 = vadd.f32 0.0, %v1599
      %1601 = vmatmul.f32.gmra.mxu0 %v1486
      %v1602 = vpop.f32.mrf.mxu0
      %v1603 = vadd.f32 0.0, %v1602
      %1604 = vmatmul.f32.gmra.mxu0 %v1489
      %v1605 = vpop.f32.mrf.mxu0
      %v1606 = vadd.f32 0.0, %v1605
      %1607 = vmatmul.f32.gmra.mxu0 %v1492
      %v1608 = vpop.f32.mrf.mxu0
      %v1609 = vadd.f32 0.0, %v1608
      %1610 = vmatmul.f32.gmra.mxu0 %v1495
      %v1611 = vpop.f32.mrf.mxu0
      %v1612 = vadd.f32 0.0, %v1611
      %1613 = vmatmul.f32.gmra.mxu0 %v1498
      %v1614 = vpop.f32.mrf.mxu0
      %v1615 = vadd.f32 0.0, %v1614
      %1616 = vmatmul.f32.gmra.mxu0 %v1501
      %v1617 = vpop.f32.mrf.mxu0
      %v1618 = vadd.f32 0.0, %v1617
      %1619 = vmatmul.f32.gmra.mxu0 %v1504
      %v1620 = vpop.f32.mrf.mxu0
      %v1621 = vadd.f32 0.0, %v1620
      %1622 = vmatmul.f32.gmra.mxu0 %v1507
      %v1623 = vpop.f32.mrf.mxu0
      %v1624 = vadd.f32 0.0, %v1623
      %1625 = vmatmul.f32.gmra.mxu0 %v1510
      %v1626 = vpop.f32.mrf.mxu0
      %v1627 = vadd.f32 0.0, %v1626
      %1628 = vmatmul.f32.gmra.mxu0 %v1513
      %v1629 = vpop.f32.mrf.mxu0
      %v1630 = vadd.f32 0.0, %v1629
      %1631 = vmatmul.f32.gmra.mxu0 %v1516
      %v1632 = vpop.f32.mrf.mxu0
      %v1633 = vadd.f32 0.0, %v1632
      %1634 = vmatmul.f32.gmra.mxu0 %v1519
      %v1635 = vpop.f32.mrf.mxu0
      %v1636 = vadd.f32 0.0, %v1635
      %1637 = vmatmul.f32.gmra.mxu0 %v1522
      %v1638 = vpop.f32.mrf.mxu0
      %v1639 = vadd.f32 0.0, %v1638
      %1640 = vmatmul.f32.gmra.mxu0 %v1525
      %v1641 = vpop.f32.mrf.mxu0
      %v1642 = vadd.f32 0.0, %v1641
      %1643 = vmatmul.f32.gmra.mxu0 %v1528
      %v1644 = vpop.f32.mrf.mxu0
      %v1645 = vadd.f32 0.0, %v1644
      %1646 = vmatmul.f32.gmra.mxu0 %v1531
      %v1647 = vpop.f32.mrf.mxu0
      %v1648 = vadd.f32 0.0, %v1647
      %1649 = vmatmul.f32.gmra.mxu0 %v1534
      %v1650 = vpop.f32.mrf.mxu0
      %v1651 = vadd.f32 0.0, %v1650
      %1652 = vmatmul.f32.gmra.mxu0 %v1537
      %v1653 = vpop.f32.mrf.mxu0
      %v1654 = vadd.f32 0.0, %v1653
      %1655 = vmatmul.f32.gmra.mxu0 %v1540
      %v1656 = vpop.f32.mrf.mxu0
      %v1657 = vadd.f32 0.0, %v1656
      %1658 = vmatmul.f32.gmra.mxu0 %v1543
      %v1659 = vpop.f32.mrf.mxu0
      %v1660 = vadd.f32 0.0, %v1659
      %1661 = vdwg.mxu0
      %v1663 = vsel %vm1280, %v1382, 0
      %v1666 = vsel %vm1280, %v1383, 0
      %v1669 = vsel %vm1280, %v1384, 0
      %v1672 = vsel %vm1280, %v1385, 0
      %v1675 = vsel %vm1280, %v1386, 0
      %v1678 = vsel %vm1280, %v1387, 0
      %v1681 = vsel %vm1280, %v1388, 0
      %v1684 = vsel %vm1280, %v1389, 0
      %v1687 = vsel %vm1280, %v1390, 0
      %v1690 = vsel %vm1280, %v1391, 0
      %v1693 = vsel %vm1280, %v1392, 0
      %v1696 = vsel %vm1280, %v1393, 0
      %v1699 = vsel %vm1280, %v1394, 0
      %v1702 = vsel %vm1280, %v1395, 0
      %v1705 = vsel %vm1280, %v1396, 0
      %v1708 = vsel %vm1280, %v1397, 0
      %v1711 = vsel %vm1280, %v1398, 0
      %v1714 = vsel %vm1280, %v1399, 0
      %v1717 = vsel %vm1280, %v1400, 0
      %v1720 = vsel %vm1280, %v1401, 0
      %v1723 = vsel %vm1280, %v1402, 0
      %v1726 = vsel %vm1280, %v1403, 0
      %v1729 = vsel %vm1280, %v1404, 0
      %v1732 = vsel %vm1280, %v1405, 0
      %v1735 = vsel %vm1280, %v1406, 0
      %v1738 = vsel %vm1280, %v1407, 0
      %v1741 = vsel %vm1280, %v1408, 0
      %v1744 = vsel %vm1280, %v1409, 0
      %v1747 = vsel %vm1280, %v1410, 0
      %v1750 = vsel %vm1280, %v1411, 0
      %v1753 = vsel %vm1280, %v1412, 0
      %v1756 = vsel %vm1280, %v1413, 0
      %v1759 = vsel %vm1545, %v1414, 0
      %1761 = vmatpush.msra.mxu0 0.0
      %1762 = vmatpush.msra.mxu0 0.0
      %1763 = vmatpush.msra.mxu0 0.0
      %1764 = vmatpush.msra.mxu0 0.0
      %1765 = vmatpush.msra.mxu0 0.0
      %1766 = vmatpush.msra.mxu0 0.0
      %1767 = vmatpush.msra.mxu0 0.0
      %1768 = vmatpush.msra.mxu0 0.0
      %1769 = vmatpush.msra.mxu0 0.0
      %1770 = vmatpush.msra.mxu0 0.0
      %1771 = vmatpush.msra.mxu0 0.0
      %1772 = vmatpush.msra.mxu0 0.0
      %1773 = vmatpush.msra.mxu0 0.0
      %1774 = vmatpush.msra.mxu0 0.0
      %1775 = vmatpush.msra.mxu0 0.0
      %1776 = vmatpush.msra.mxu0 %v1759
      %1777 = vmatmul.f32.gmra.mxu0 %v1663
      %v1778 = vpop.f32.mrf.mxu0
      %v1779 = vadd.f32 %v1567, %v1778
      %1780 = vmatmul.f32.gmra.mxu0 %v1666
      %v1781 = vpop.f32.mrf.mxu0
      %v1782 = vadd.f32 %v1570, %v1781
      %1783 = vmatmul.f32.gmra.mxu0 %v1669
      %v1784 = vpop.f32.mrf.mxu0
      %v1785 = vadd.f32 %v1573, %v1784
      %1786 = vmatmul.f32.gmra.mxu0 %v1672
      %v1787 = vpop.f32.mrf.mxu0
      %v1788 = vadd.f32 %v1576, %v1787
      %1789 = vmatmul.f32.gmra.mxu0 %v1675
      %v1790 = vpop.f32.mrf.mxu0
      %v1791 = vadd.f32 %v1579, %v1790
      %1792 = vmatmul.f32.gmra.mxu0 %v1678
      %v1793 = vpop.f32.mrf.mxu0
      %v1794 = vadd.f32 %v1582, %v1793
      %1795 = vmatmul.f32.gmra.mxu0 %v1681
      %v1796 = vpop.f32.mrf.mxu0
      %v1797 = vadd.f32 %v1585, %v1796
      %1798 = vmatmul.f32.gmra.mxu0 %v1684
      %v1799 = vpop.f32.mrf.mxu0
      %v1800 = vadd.f32 %v1588, %v1799
      %1801 = vmatmul.f32.gmra.mxu0 %v1687
      %v1802 = vpop.f32.mrf.mxu0
      %v1803 = vadd.f32 %v1591, %v1802
      %1804 = vmatmul.f32.gmra.mxu0 %v1690
      %v1805 = vpop.f32.mrf.mxu0
      %v1806 = vadd.f32 %v1594, %v1805
      %1807 = vmatmul.f32.gmra.mxu0 %v1693
      %v1808 = vpop.f32.mrf.mxu0
      %v1809 = vadd.f32 %v1597, %v1808
      %1810 = vmatmul.f32.gmra.mxu0 %v1696
      %v1811 = vpop.f32.mrf.mxu0
      %v1812 = vadd.f32 %v1600, %v1811
      %1813 = vmatmul.f32.gmra.mxu0 %v1699
      %v1814 = vpop.f32.mrf.mxu0
      %v1815 = vadd.f32 %v1603, %v1814
      %1816 = vmatmul.f32.gmra.mxu0 %v1702
      %v1817 = vpop.f32.mrf.mxu0
      %v1818 = vadd.f32 %v1606, %v1817
      %1819 = vmatmul.f32.gmra.mxu0 %v1705
      %v1820 = vpop.f32.mrf.mxu0
      %v1821 = vadd.f32 %v1609, %v1820
      %1822 = vmatmul.f32.gmra.mxu0 %v1708
      %v1823 = vpop.f32.mrf.mxu0
      %v1824 = vadd.f32 %v1612, %v1823
      %1825 = vmatmul.f32.gmra.mxu0 %v1711
      %v1826 = vpop.f32.mrf.mxu0
      %v1827 = vadd.f32 %v1615, %v1826
      %1828 = vmatmul.f32.gmra.mxu0 %v1714
      %v1829 = vpop.f32.mrf.mxu0
      %v1830 = vadd.f32 %v1618, %v1829
      %1831 = vmatmul.f32.gmra.mxu0 %v1717
      %v1832 = vpop.f32.mrf.mxu0
      %v1833 = vadd.f32 %v1621, %v1832
      %1834 = vmatmul.f32.gmra.mxu0 %v1720
      %v1835 = vpop.f32.mrf.mxu0
      %v1836 = vadd.f32 %v1624, %v1835
      %1837 = vmatmul.f32.gmra.mxu0 %v1723
      %v1838 = vpop.f32.mrf.mxu0
      %v1839 = vadd.f32 %v1627, %v1838
      %1840 = vmatmul.f32.gmra.mxu0 %v1726
      %v1841 = vpop.f32.mrf.mxu0
      %v1842 = vadd.f32 %v1630, %v1841
      %1843 = vmatmul.f32.gmra.mxu0 %v1729
      %v1844 = vpop.f32.mrf.mxu0
      %v1845 = vadd.f32 %v1633, %v1844
      %1846 = vmatmul.f32.gmra.mxu0 %v1732
      %v1847 = vpop.f32.mrf.mxu0
      %v1848 = vadd.f32 %v1636, %v1847
      %1849 = vmatmul.f32.gmra.mxu0 %v1735
      %v1850 = vpop.f32.mrf.mxu0
      %v1851 = vadd.f32 %v1639, %v1850
      %1852 = vmatmul.f32.gmra.mxu0 %v1738
      %v1853 = vpop.f32.mrf.mxu0
      %v1854 = vadd.f32 %v1642, %v1853
      %1855 = vmatmul.f32.gmra.mxu0 %v1741
      %v1856 = vpop.f32.mrf.mxu0
      %v1857 = vadd.f32 %v1645, %v1856
      %1858 = vmatmul.f32.gmra.mxu0 %v1744
      %v1859 = vpop.f32.mrf.mxu0
      %v1860 = vadd.f32 %v1648, %v1859
      %1861 = vmatmul.f32.gmra.mxu0 %v1747
      %v1862 = vpop.f32.mrf.mxu0
      %v1863 = vadd.f32 %v1651, %v1862
      %1864 = vmatmul.f32.gmra.mxu0 %v1750
      %v1865 = vpop.f32.mrf.mxu0
      %v1866 = vadd.f32 %v1654, %v1865
      %1867 = vmatmul.f32.gmra.mxu0 %v1753
      %v1868 = vpop.f32.mrf.mxu0
      %v1869 = vadd.f32 %v1657, %v1868
      %1870 = vmatmul.f32.gmra.mxu0 %v1756
      %v1871 = vpop.f32.mrf.mxu0
      %v1872 = vadd.f32 %v1660, %v1871
      %1873 = vdwg.mxu0
      %s1874 = scalar_lea.vmem [#allocation2], 32
      %v1875 = vld [vmem:[%s1874] sm:$0xff]
      %v1876 = vld [vmem:[%s1874 + $0x8] sm:$0xff]
      %v1877 = vld [vmem:[%s1874 + $0x10] sm:$0xff]
      %v1878 = vld [vmem:[%s1874 + $0x18] sm:$0xff]
      %v1879 = vld [vmem:[%s1874 + $0x20] sm:$0xff]
      %v1880 = vld [vmem:[%s1874 + $0x28] sm:$0xff]
      %v1881 = vld [vmem:[%s1874 + $0x30] sm:$0xff]
      %v1882 = vld [vmem:[%s1874 + $0x38] sm:$0xff]
      %v1883 = vld [vmem:[%s1874 + $0x40] sm:$0xff]
      %v1884 = vld [vmem:[%s1874 + $0x48] sm:$0xff]
      %v1885 = vld [vmem:[%s1874 + $0x50] sm:$0xff]
      %v1886 = vld [vmem:[%s1874 + $0x58] sm:$0xff]
      %v1887 = vld [vmem:[%s1874 + $0x60] sm:$0xff]
      %v1888 = vld [vmem:[%s1874 + $0x68] sm:$0xff]
      %v1889 = vld [vmem:[%s1874 + $0x70] sm:$0xff]
      %v1890 = vld [vmem:[%s1874 + $0x78] sm:$0xff]
      %v1891 = vld [vmem:[%s1874 + $0x80] sm:$0xff]
      %v1892 = vld [vmem:[%s1874 + $0x88] sm:$0xff]
      %v1893 = vld [vmem:[%s1874 + $0x90] sm:$0xff]
      %v1894 = vld [vmem:[%s1874 + $0x98] sm:$0xff]
      %v1895 = vld [vmem:[%s1874 + $0xa0] sm:$0xff]
      %v1896 = vld [vmem:[%s1874 + $0xa8] sm:$0xff]
      %v1897 = vld [vmem:[%s1874 + $0xb0] sm:$0xff]
      %v1898 = vld [vmem:[%s1874 + $0xb8] sm:$0xff]
      %v1899 = vld [vmem:[%s1874 + $0xc0] sm:$0xff]
      %v1900 = vld [vmem:[%s1874 + $0xc8] sm:$0xff]
      %v1901 = vld [vmem:[%s1874 + $0xd0] sm:$0xff]
      %v1902 = vld [vmem:[%s1874 + $0xd8] sm:$0xff]
      %v1903 = vld [vmem:[%s1874 + $0xe0] sm:$0xff]
      %v1904 = vld [vmem:[%s1874 + $0xe8] sm:$0xff]
      %v1905 = vld [vmem:[%s1874 + $0xf0] sm:$0xff]
      %v1906 = vld [vmem:[%s1874 + $0xf8] sm:$0xff]
      %s1907 = scalar_lea.vmem %s4, 16
      %v1908 = vld [vmem:[%s1907] sm:$0x3f]
      %v1910 = vsel %vm1280, %v1875, 0
      %v1913 = vsel %vm1280, %v1876, 0
      %v1916 = vsel %vm1280, %v1877, 0
      %v1919 = vsel %vm1280, %v1878, 0
      %v1922 = vsel %vm1280, %v1879, 0
      %v1925 = vsel %vm1280, %v1880, 0
      %v1928 = vsel %vm1280, %v1881, 0
      %v1931 = vsel %vm1280, %v1882, 0
      %v1934 = vsel %vm1280, %v1883, 0
      %v1937 = vsel %vm1280, %v1884, 0
      %v1940 = vsel %vm1280, %v1885, 0
      %v1943 = vsel %vm1280, %v1886, 0
      %v1946 = vsel %vm1280, %v1887, 0
      %v1949 = vsel %vm1280, %v1888, 0
      %v1952 = vsel %vm1280, %v1889, 0
      %v1955 = vsel %vm1280, %v1890, 0
      %v1958 = vsel %vm1280, %v1891, 0
      %v1961 = vsel %vm1280, %v1892, 0
      %v1964 = vsel %vm1280, %v1893, 0
      %v1967 = vsel %vm1280, %v1894, 0
      %v1970 = vsel %vm1280, %v1895, 0
      %v1973 = vsel %vm1280, %v1896, 0
      %v1976 = vsel %vm1280, %v1897, 0
      %v1979 = vsel %vm1280, %v1898, 0
      %v1982 = vsel %vm1280, %v1899, 0
      %v1985 = vsel %vm1280, %v1900, 0
      %v1988 = vsel %vm1280, %v1901, 0
      %v1991 = vsel %vm1280, %v1902, 0
      %v1994 = vsel %vm1280, %v1903, 0
      %v1997 = vsel %vm1280, %v1904, 0
      %v2000 = vsel %vm1280, %v1905, 0
      %v2003 = vsel %vm1280, %v1906, 0
      %v2006 = vsel %vm1545, %v1908, 0
      %2008 = vmatpush.msra.mxu0 0.0
      %2009 = vmatpush.msra.mxu0 0.0
      %2010 = vmatpush.msra.mxu0 0.0
      %2011 = vmatpush.msra.mxu0 0.0
      %2012 = vmatpush.msra.mxu0 0.0
      %2013 = vmatpush.msra.mxu0 0.0
      %2014 = vmatpush.msra.mxu0 0.0
      %2015 = vmatpush.msra.mxu0 0.0
      %2016 = vmatpush.msra.mxu0 0.0
      %2017 = vmatpush.msra.mxu0 0.0
      %2018 = vmatpush.msra.mxu0 0.0
      %2019 = vmatpush.msra.mxu0 0.0
      %2020 = vmatpush.msra.mxu0 0.0
      %2021 = vmatpush.msra.mxu0 0.0
      %2022 = vmatpush.msra.mxu0 0.0
      %2023 = vmatpush.msra.mxu0 %v2006
      %2024 = vmatmul.f32.gmra.mxu0 %v1910
      %v2025 = vpop.f32.mrf.mxu0
      %v2026 = vadd.f32 0.0, %v2025
      %2027 = vmatmul.f32.gmra.mxu0 %v1913
      %v2028 = vpop.f32.mrf.mxu0
      %v2029 = vadd.f32 0.0, %v2028
      %2030 = vmatmul.f32.gmra.mxu0 %v1916
      %v2031 = vpop.f32.mrf.mxu0
      %v2032 = vadd.f32 0.0, %v2031
      %2033 = vmatmul.f32.gmra.mxu0 %v1919
      %v2034 = vpop.f32.mrf.mxu0
      %v2035 = vadd.f32 0.0, %v2034
      %2036 = vmatmul.f32.gmra.mxu0 %v1922
      %v2037 = vpop.f32.mrf.mxu0
      %v2038 = vadd.f32 0.0, %v2037
      %2039 = vmatmul.f32.gmra.mxu0 %v1925
      %v2040 = vpop.f32.mrf.mxu0
      %v2041 = vadd.f32 0.0, %v2040
      %2042 = vmatmul.f32.gmra.mxu0 %v1928
      %v2043 = vpop.f32.mrf.mxu0
      %v2044 = vadd.f32 0.0, %v2043
      %2045 = vmatmul.f32.gmra.mxu0 %v1931
      %v2046 = vpop.f32.mrf.mxu0
      %v2047 = vadd.f32 0.0, %v2046
      %2048 = vmatmul.f32.gmra.mxu0 %v1934
      %v2049 = vpop.f32.mrf.mxu0
      %v2050 = vadd.f32 0.0, %v2049
      %2051 = vmatmul.f32.gmra.mxu0 %v1937
      %v2052 = vpop.f32.mrf.mxu0
      %v2053 = vadd.f32 0.0, %v2052
      %2054 = vmatmul.f32.gmra.mxu0 %v1940
      %v2055 = vpop.f32.mrf.mxu0
      %v2056 = vadd.f32 0.0, %v2055
      %2057 = vmatmul.f32.gmra.mxu0 %v1943
      %v2058 = vpop.f32.mrf.mxu0
      %v2059 = vadd.f32 0.0, %v2058
      %2060 = vmatmul.f32.gmra.mxu0 %v1946
      %v2061 = vpop.f32.mrf.mxu0
      %v2062 = vadd.f32 0.0, %v2061
      %2063 = vmatmul.f32.gmra.mxu0 %v1949
      %v2064 = vpop.f32.mrf.mxu0
      %v2065 = vadd.f32 0.0, %v2064
      %2066 = vmatmul.f32.gmra.mxu0 %v1952
      %v2067 = vpop.f32.mrf.mxu0
      %v2068 = vadd.f32 0.0, %v2067
      %2069 = vmatmul.f32.gmra.mxu0 %v1955
      %v2070 = vpop.f32.mrf.mxu0
      %v2071 = vadd.f32 0.0, %v2070
      %2072 = vmatmul.f32.gmra.mxu0 %v1958
      %v2073 = vpop.f32.mrf.mxu0
      %v2074 = vadd.f32 0.0, %v2073
      %2075 = vmatmul.f32.gmra.mxu0 %v1961
      %v2076 = vpop.f32.mrf.mxu0
      %v2077 = vadd.f32 0.0, %v2076
      %2078 = vmatmul.f32.gmra.mxu0 %v1964
      %v2079 = vpop.f32.mrf.mxu0
      %v2080 = vadd.f32 0.0, %v2079
      %2081 = vmatmul.f32.gmra.mxu0 %v1967
      %v2082 = vpop.f32.mrf.mxu0
      %v2083 = vadd.f32 0.0, %v2082
      %2084 = vmatmul.f32.gmra.mxu0 %v1970
      %v2085 = vpop.f32.mrf.mxu0
      %v2086 = vadd.f32 0.0, %v2085
      %2087 = vmatmul.f32.gmra.mxu0 %v1973
      %v2088 = vpop.f32.mrf.mxu0
      %v2089 = vadd.f32 0.0, %v2088
      %2090 = vmatmul.f32.gmra.mxu0 %v1976
      %v2091 = vpop.f32.mrf.mxu0
      %v2092 = vadd.f32 0.0, %v2091
      %2093 = vmatmul.f32.gmra.mxu0 %v1979
      %v2094 = vpop.f32.mrf.mxu0
      %v2095 = vadd.f32 0.0, %v2094
      %2096 = vmatmul.f32.gmra.mxu0 %v1982
      %v2097 = vpop.f32.mrf.mxu0
      %v2098 = vadd.f32 0.0, %v2097
      %2099 = vmatmul.f32.gmra.mxu0 %v1985
      %v2100 = vpop.f32.mrf.mxu0
      %v2101 = vadd.f32 0.0, %v2100
      %2102 = vmatmul.f32.gmra.mxu0 %v1988
      %v2103 = vpop.f32.mrf.mxu0
      %v2104 = vadd.f32 0.0, %v2103
      %2105 = vmatmul.f32.gmra.mxu0 %v1991
      %v2106 = vpop.f32.mrf.mxu0
      %v2107 = vadd.f32 0.0, %v2106
      %2108 = vmatmul.f32.gmra.mxu0 %v1994
      %v2109 = vpop.f32.mrf.mxu0
      %v2110 = vadd.f32 0.0, %v2109
      %2111 = vmatmul.f32.gmra.mxu0 %v1997
      %v2112 = vpop.f32.mrf.mxu0
      %v2113 = vadd.f32 0.0, %v2112
      %2114 = vmatmul.f32.gmra.mxu0 %v2000
      %v2115 = vpop.f32.mrf.mxu0
      %v2116 = vadd.f32 0.0, %v2115
      %2117 = vmatmul.f32.gmra.mxu0 %v2003
      %v2118 = vpop.f32.mrf.mxu0
      %v2119 = vadd.f32 0.0, %v2118
      %2120 = vdwg.mxu0
      %v2121 = vadd.f32 %v1779, %v2026
      %v2122 = vadd.f32 %v1782, %v2029
      %v2123 = vadd.f32 %v1785, %v2032
      %v2124 = vadd.f32 %v1788, %v2035
      %v2125 = vadd.f32 %v1791, %v2038
      %v2126 = vadd.f32 %v1794, %v2041
      %v2127 = vadd.f32 %v1797, %v2044
      %v2128 = vadd.f32 %v1800, %v2047
      %v2129 = vadd.f32 %v1803, %v2050
      %v2130 = vadd.f32 %v1806, %v2053
      %v2131 = vadd.f32 %v1809, %v2056
      %v2132 = vadd.f32 %v1812, %v2059
      %v2133 = vadd.f32 %v1815, %v2062
      %v2134 = vadd.f32 %v1818, %v2065
      %v2135 = vadd.f32 %v1821, %v2068
      %v2136 = vadd.f32 %v1824, %v2071
      %v2137 = vadd.f32 %v1827, %v2074
      %v2138 = vadd.f32 %v1830, %v2077
      %v2139 = vadd.f32 %v1833, %v2080
      %v2140 = vadd.f32 %v1836, %v2083
      %v2141 = vadd.f32 %v1839, %v2086
      %v2142 = vadd.f32 %v1842, %v2089
      %v2143 = vadd.f32 %v1845, %v2092
      %v2144 = vadd.f32 %v1848, %v2095
      %v2145 = vadd.f32 %v1851, %v2098
      %v2146 = vadd.f32 %v1854, %v2101
      %v2147 = vadd.f32 %v1857, %v2104
      %v2148 = vadd.f32 %v1860, %v2107
      %v2149 = vadd.f32 %v1863, %v2110
      %v2150 = vadd.f32 %v1866, %v2113
      %v2151 = vadd.f32 %v1869, %v2116
      %v2152 = vadd.f32 %v1872, %v2119
      %v2153 = vld [vmem:[%s5] sm:$0x1]
      %v2155 = vperm.slane %v2153, 0
      %v2157 = vadd.f32 %v2121, %v2155
      %v2158 = vadd.f32 %v2122, %v2155
      %v2159 = vadd.f32 %v2123, %v2155
      %v2160 = vadd.f32 %v2124, %v2155
      %v2161 = vadd.f32 %v2125, %v2155
      %v2162 = vadd.f32 %v2126, %v2155
      %v2163 = vadd.f32 %v2127, %v2155
      %v2164 = vadd.f32 %v2128, %v2155
      %v2165 = vadd.f32 %v2129, %v2155
      %v2166 = vadd.f32 %v2130, %v2155
      %v2167 = vadd.f32 %v2131, %v2155
      %v2168 = vadd.f32 %v2132, %v2155
      %v2169 = vadd.f32 %v2133, %v2155
      %v2170 = vadd.f32 %v2134, %v2155
      %v2171 = vadd.f32 %v2135, %v2155
      %v2172 = vadd.f32 %v2136, %v2155
      %v2173 = vadd.f32 %v2137, %v2155
      %v2174 = vadd.f32 %v2138, %v2155
      %v2175 = vadd.f32 %v2139, %v2155
      %v2176 = vadd.f32 %v2140, %v2155
      %v2177 = vadd.f32 %v2141, %v2155
      %v2178 = vadd.f32 %v2142, %v2155
      %v2179 = vadd.f32 %v2143, %v2155
      %v2180 = vadd.f32 %v2144, %v2155
      %v2181 = vadd.f32 %v2145, %v2155
      %v2182 = vadd.f32 %v2146, %v2155
      %v2183 = vadd.f32 %v2147, %v2155
      %v2184 = vadd.f32 %v2148, %v2155
      %v2185 = vadd.f32 %v2149, %v2155
      %v2186 = vadd.f32 %v2150, %v2155
      %v2187 = vadd.f32 %v2151, %v2155
      %v2188 = vadd.f32 %v2152, %v2155
      %vm2189 = vcmp.gt.f32.partialorder %v2157, 0.0
      %vm2190 = vcmp.gt.f32.partialorder %v2158, 0.0
      %vm2191 = vcmp.gt.f32.partialorder %v2159, 0.0
      %vm2192 = vcmp.gt.f32.partialorder %v2160, 0.0
      %vm2193 = vcmp.gt.f32.partialorder %v2161, 0.0
      %vm2194 = vcmp.gt.f32.partialorder %v2162, 0.0
      %vm2195 = vcmp.gt.f32.partialorder %v2163, 0.0
      %vm2196 = vcmp.gt.f32.partialorder %v2164, 0.0
      %vm2197 = vcmp.gt.f32.partialorder %v2165, 0.0
      %vm2198 = vcmp.gt.f32.partialorder %v2166, 0.0
      %vm2199 = vcmp.gt.f32.partialorder %v2167, 0.0
      %vm2200 = vcmp.gt.f32.partialorder %v2168, 0.0
      %vm2201 = vcmp.gt.f32.partialorder %v2169, 0.0
      %vm2202 = vcmp.gt.f32.partialorder %v2170, 0.0
      %vm2203 = vcmp.gt.f32.partialorder %v2171, 0.0
      %vm2204 = vcmp.gt.f32.partialorder %v2172, 0.0
      %vm2205 = vcmp.gt.f32.partialorder %v2173, 0.0
      %vm2206 = vcmp.gt.f32.partialorder %v2174, 0.0
      %vm2207 = vcmp.gt.f32.partialorder %v2175, 0.0
      %vm2208 = vcmp.gt.f32.partialorder %v2176, 0.0
      %vm2209 = vcmp.gt.f32.partialorder %v2177, 0.0
      %vm2210 = vcmp.gt.f32.partialorder %v2178, 0.0
      %vm2211 = vcmp.gt.f32.partialorder %v2179, 0.0
      %vm2212 = vcmp.gt.f32.partialorder %v2180, 0.0
      %vm2213 = vcmp.gt.f32.partialorder %v2181, 0.0
      %vm2214 = vcmp.gt.f32.partialorder %v2182, 0.0
      %vm2215 = vcmp.gt.f32.partialorder %v2183, 0.0
      %vm2216 = vcmp.gt.f32.partialorder %v2184, 0.0
      %vm2217 = vcmp.gt.f32.partialorder %v2185, 0.0
      %vm2218 = vcmp.gt.f32.partialorder %v2186, 0.0
      %vm2219 = vcmp.gt.f32.partialorder %v2187, 0.0
      %vm2220 = vcmp.gt.f32.partialorder %v2188, 0.0
      %v2221 = vmul.f32 %v2157, 0.1
      %v2222 = vmul.f32 %v2158, 0.1
      %v2223 = vmul.f32 %v2159, 0.1
      %v2224 = vmul.f32 %v2160, 0.1
      %v2225 = vmul.f32 %v2161, 0.1
      %v2226 = vmul.f32 %v2162, 0.1
      %v2227 = vmul.f32 %v2163, 0.1
      %v2228 = vmul.f32 %v2164, 0.1
      %v2229 = vmul.f32 %v2165, 0.1
      %v2230 = vmul.f32 %v2166, 0.1
      %v2231 = vmul.f32 %v2167, 0.1
      %v2232 = vmul.f32 %v2168, 0.1
      %v2233 = vmul.f32 %v2169, 0.1
      %v2234 = vmul.f32 %v2170, 0.1
      %v2235 = vmul.f32 %v2171, 0.1
      %v2236 = vmul.f32 %v2172, 0.1
      %v2237 = vmul.f32 %v2173, 0.1
      %v2238 = vmul.f32 %v2174, 0.1
      %v2239 = vmul.f32 %v2175, 0.1
      %v2240 = vmul.f32 %v2176, 0.1
      %v2241 = vmul.f32 %v2177, 0.1
      %v2242 = vmul.f32 %v2178, 0.1
      %v2243 = vmul.f32 %v2179, 0.1
      %v2244 = vmul.f32 %v2180, 0.1
      %v2245 = vmul.f32 %v2181, 0.1
      %v2246 = vmul.f32 %v2182, 0.1
      %v2247 = vmul.f32 %v2183, 0.1
      %v2248 = vmul.f32 %v2184, 0.1
      %v2249 = vmul.f32 %v2185, 0.1
      %v2250 = vmul.f32 %v2186, 0.1
      %v2251 = vmul.f32 %v2187, 0.1
      %v2252 = vmul.f32 %v2188, 0.1
      %v2253 = vsel %vm2189, %v2157, %v2221
      %v2254 = vsel %vm2190, %v2158, %v2222
      %v2255 = vsel %vm2191, %v2159, %v2223
      %v2256 = vsel %vm2192, %v2160, %v2224
      %v2257 = vsel %vm2193, %v2161, %v2225
      %v2258 = vsel %vm2194, %v2162, %v2226
      %v2259 = vsel %vm2195, %v2163, %v2227
      %v2260 = vsel %vm2196, %v2164, %v2228
      %v2261 = vsel %vm2197, %v2165, %v2229
      %v2262 = vsel %vm2198, %v2166, %v2230
      %v2263 = vsel %vm2199, %v2167, %v2231
      %v2264 = vsel %vm2200, %v2168, %v2232
      %v2265 = vsel %vm2201, %v2169, %v2233
      %v2266 = vsel %vm2202, %v2170, %v2234
      %v2267 = vsel %vm2203, %v2171, %v2235
      %v2268 = vsel %vm2204, %v2172, %v2236
      %v2269 = vsel %vm2205, %v2173, %v2237
      %v2270 = vsel %vm2206, %v2174, %v2238
      %v2271 = vsel %vm2207, %v2175, %v2239
      %v2272 = vsel %vm2208, %v2176, %v2240
      %v2273 = vsel %vm2209, %v2177, %v2241
      %v2274 = vsel %vm2210, %v2178, %v2242
      %v2275 = vsel %vm2211, %v2179, %v2243
      %v2276 = vsel %vm2212, %v2180, %v2244
      %v2277 = vsel %vm2213, %v2181, %v2245
      %v2278 = vsel %vm2214, %v2182, %v2246
      %v2279 = vsel %vm2215, %v2183, %v2247
      %v2280 = vsel %vm2216, %v2184, %v2248
      %v2281 = vsel %vm2217, %v2185, %v2249
      %v2282 = vsel %vm2218, %v2186, %v2250
      %v2283 = vsel %vm2219, %v2187, %v2251
      %v2284 = vsel %vm2220, %v2188, %v2252
      %v2285 = vld [vmem:[%s311] sm:$0xff]
      %v2286 = vld [vmem:[%s311 + $0x8] sm:$0xff]
      %v2287 = vld [vmem:[%s311 + $0x10] sm:$0xff]
      %v2288 = vld [vmem:[%s311 + $0x18] sm:$0xff]
      %v2289 = vld [vmem:[%s311 + $0x20] sm:$0xff]
      %v2290 = vld [vmem:[%s311 + $0x28] sm:$0xff]
      %v2291 = vld [vmem:[%s311 + $0x30] sm:$0xff]
      %v2292 = vld [vmem:[%s311 + $0x38] sm:$0xff]
      %v2293 = vld [vmem:[%s311 + $0x40] sm:$0xff]
      %v2294 = vld [vmem:[%s311 + $0x48] sm:$0xff]
      %v2295 = vld [vmem:[%s311 + $0x50] sm:$0xff]
      %v2296 = vld [vmem:[%s311 + $0x58] sm:$0xff]
      %v2297 = vld [vmem:[%s311 + $0x60] sm:$0xff]
      %v2298 = vld [vmem:[%s311 + $0x68] sm:$0xff]
      %v2299 = vld [vmem:[%s311 + $0x70] sm:$0xff]
      %v2300 = vld [vmem:[%s311 + $0x78] sm:$0xff]
      %v2301 = vld [vmem:[%s311 + $0x80] sm:$0xff]
      %v2302 = vld [vmem:[%s311 + $0x88] sm:$0xff]
      %v2303 = vld [vmem:[%s311 + $0x90] sm:$0xff]
      %v2304 = vld [vmem:[%s311 + $0x98] sm:$0xff]
      %v2305 = vld [vmem:[%s311 + $0xa0] sm:$0xff]
      %v2306 = vld [vmem:[%s311 + $0xa8] sm:$0xff]
      %v2307 = vld [vmem:[%s311 + $0xb0] sm:$0xff]
      %v2308 = vld [vmem:[%s311 + $0xb8] sm:$0xff]
      %v2309 = vld [vmem:[%s311 + $0xc0] sm:$0xff]
      %v2310 = vld [vmem:[%s311 + $0xc8] sm:$0xff]
      %v2311 = vld [vmem:[%s311 + $0xd0] sm:$0xff]
      %v2312 = vld [vmem:[%s311 + $0xd8] sm:$0xff]
      %v2313 = vld [vmem:[%s311 + $0xe0] sm:$0xff]
      %v2314 = vld [vmem:[%s311 + $0xe8] sm:$0xff]
      %v2315 = vld [vmem:[%s311 + $0xf0] sm:$0xff]
      %v2316 = vld [vmem:[%s311 + $0xf8] sm:$0xff]
      %v2317 = vadd.f32 %v2253, %v2285
      %v2318 = vadd.f32 %v2254, %v2286
      %v2319 = vadd.f32 %v2255, %v2287
      %v2320 = vadd.f32 %v2256, %v2288
      %v2321 = vadd.f32 %v2257, %v2289
      %v2322 = vadd.f32 %v2258, %v2290
      %v2323 = vadd.f32 %v2259, %v2291
      %v2324 = vadd.f32 %v2260, %v2292
      %v2325 = vadd.f32 %v2261, %v2293
      %v2326 = vadd.f32 %v2262, %v2294
      %v2327 = vadd.f32 %v2263, %v2295
      %v2328 = vadd.f32 %v2264, %v2296
      %v2329 = vadd.f32 %v2265, %v2297
      %v2330 = vadd.f32 %v2266, %v2298
      %v2331 = vadd.f32 %v2267, %v2299
      %v2332 = vadd.f32 %v2268, %v2300
      %v2333 = vadd.f32 %v2269, %v2301
      %v2334 = vadd.f32 %v2270, %v2302
      %v2335 = vadd.f32 %v2271, %v2303
      %v2336 = vadd.f32 %v2272, %v2304
      %v2337 = vadd.f32 %v2273, %v2305
      %v2338 = vadd.f32 %v2274, %v2306
      %v2339 = vadd.f32 %v2275, %v2307
      %v2340 = vadd.f32 %v2276, %v2308
      %v2341 = vadd.f32 %v2277, %v2309
      %v2342 = vadd.f32 %v2278, %v2310
      %v2343 = vadd.f32 %v2279, %v2311
      %v2344 = vadd.f32 %v2280, %v2312
      %v2345 = vadd.f32 %v2281, %v2313
      %v2346 = vadd.f32 %v2282, %v2314
      %v2347 = vadd.f32 %v2283, %v2315
      %v2348 = vadd.f32 %v2284, %v2316
      %2349 = vst.msk [vmem:[%s333] sm:$0xff] %vm372, %v2317
      %2350 = vst.msk [vmem:[%s333 + $0x8] sm:$0xff] %vm372, %v2318
      %2351 = vst.msk [vmem:[%s333 + $0x10] sm:$0xff] %vm372, %v2319
      %2352 = vst.msk [vmem:[%s333 + $0x18] sm:$0xff] %vm372, %v2320
      %2353 = vst.msk [vmem:[%s333 + $0x20] sm:$0xff] %vm372, %v2321
      %2354 = vst.msk [vmem:[%s333 + $0x28] sm:$0xff] %vm372, %v2322
      %2355 = vst.msk [vmem:[%s333 + $0x30] sm:$0xff] %vm372, %v2323
      %2356 = vst.msk [vmem:[%s333 + $0x38] sm:$0xff] %vm372, %v2324
      %2357 = vst.msk [vmem:[%s333 + $0x40] sm:$0xff] %vm372, %v2325
      %2358 = vst.msk [vmem:[%s333 + $0x48] sm:$0xff] %vm372, %v2326
      %2359 = vst.msk [vmem:[%s333 + $0x50] sm:$0xff] %vm372, %v2327
      %2360 = vst.msk [vmem:[%s333 + $0x58] sm:$0xff] %vm372, %v2328
      %2361 = vst.msk [vmem:[%s333 + $0x60] sm:$0xff] %vm372, %v2329
      %2362 = vst.msk [vmem:[%s333 + $0x68] sm:$0xff] %vm372, %v2330
      %2363 = vst.msk [vmem:[%s333 + $0x70] sm:$0xff] %vm372, %v2331
      %2364 = vst.msk [vmem:[%s333 + $0x78] sm:$0xff] %vm372, %v2332
      %2365 = vst.msk [vmem:[%s333 + $0x80] sm:$0xff] %vm372, %v2333
      %2366 = vst.msk [vmem:[%s333 + $0x88] sm:$0xff] %vm372, %v2334
      %2367 = vst.msk [vmem:[%s333 + $0x90] sm:$0xff] %vm372, %v2335
      %2368 = vst.msk [vmem:[%s333 + $0x98] sm:$0xff] %vm372, %v2336
      %2369 = vst.msk [vmem:[%s333 + $0xa0] sm:$0xff] %vm372, %v2337
      %2370 = vst.msk [vmem:[%s333 + $0xa8] sm:$0xff] %vm372, %v2338
      %2371 = vst.msk [vmem:[%s333 + $0xb0] sm:$0xff] %vm372, %v2339
      %2372 = vst.msk [vmem:[%s333 + $0xb8] sm:$0xff] %vm372, %v2340
      %2373 = vst.msk [vmem:[%s333 + $0xc0] sm:$0xff] %vm372, %v2341
      %2374 = vst.msk [vmem:[%s333 + $0xc8] sm:$0xff] %vm372, %v2342
      %2375 = vst.msk [vmem:[%s333 + $0xd0] sm:$0xff] %vm372, %v2343
      %2376 = vst.msk [vmem:[%s333 + $0xd8] sm:$0xff] %vm372, %v2344
      %2377 = vst.msk [vmem:[%s333 + $0xe0] sm:$0xff] %vm372, %v2345
      %2378 = vst.msk [vmem:[%s333 + $0xe8] sm:$0xff] %vm372, %v2346
      %2379 = vst.msk [vmem:[%s333 + $0xf0] sm:$0xff] %vm372, %v2347
      %2380 = vst.msk [vmem:[%s333 + $0xf8] sm:$0xff] %vm372, %v2348
      %s2381 = smul.u32 16, %s22
      %p2382 = scmp.lt.s32.totalorder %s21, 1
      %s2383 = scalar_select %p2382, %s21, 1
      %p2384 = scmp.lt.s32.totalorder %s2381, 15
      %s2385 = scalar_select %p2384, %s2381, 15
      %s2386 = smul.addr %s2385, 2
      %s2387 = smul.addr %s2383, 32
      %s2388 = sadd.s32 %s2386, %s2387
      %s2389 = smul.addr %s2388, 8
      %s2390 = scalar_lea.vmem %s6, %s2389
      // Predicated region
      $region45: #{tpu_custom_call.1} parent=43 // pred_check
        %p2391 = pneg %p189
      $region46: #{tpu_custom_call.1} parent=43 // pred_check_branch
        %2393 = sbr.rel (%p2391) target = $region48
      $region47: #{tpu_custom_call.1} parent=43 // pred_region
        %s2394 = smul.u32 16, %s22
      $region48: #{tpu_custom_call.1} parent=43 // pred_fallthru
        _
    $region44: #{tpu_custom_call.1} parent=5 // pred_fallthru
      _
    %p2395 = scmp.le.s32.totalorder 2, %s12
    // Predicated region
    $region49: #{tpu_custom_call.1} parent=5 // pred_check
      %p2396 = pneg %p2395
    $region50: #{tpu_custom_call.1} parent=5 // pred_check_branch
      %2398 = sbr.rel (%p2396) target = $region52
    $region51: #{tpu_custom_call.1} parent=5 // pred_region
      %s2399 = ssub.s32 %s12, 2
      // Predicated region
      $region53: #{tpu_custom_call.1} parent=51 // pred_check
        %p2400 = pneg %p195
      $region54: #{tpu_custom_call.1} parent=51 // pred_check_branch
        %2402 = sbr.rel (%p2400) target = $region56
      $region55: #{tpu_custom_call.1} parent=51 // pred_region
        %s2403 = smul.u32 16, %s24
        %p2404 = scmp.lt.s32.totalorder %s23, 1
        %s2405 = scalar_select %p2404, %s23, 1
        %p2406 = scmp.lt.s32.totalorder %s2403, 15
        %s2407 = scalar_select %p2406, %s2403, 15
        %s2408 = smul.addr %s2407, 2
        %s2409 = smul.addr %s2405, 32
        %s2410 = sadd.s32 %s2408, %s2409
        %s2411 = smul.addr %s2410, 8
        %s2412 = scalar_lea.vmem %s6, %s2411
      $region56: #{tpu_custom_call.1} parent=51 // pred_fallthru
        _
    $region52: #{tpu_custom_call.1} parent=5 // pred_fallthru
      _
  $region6: #{tpu_custom_call.1} parent=0 // loop_footer
    %s16 = sadd.s32 1, %s12
  $region7: #{tpu_custom_call.1} parent=0 // loop_footer_branch
    %11 = sbr.rel target = $region3
  $region8: #{tpu_custom_call.1} parent=0 // loop_exit
    _

</llo_original>
